<compile_context>
chip_gen: v7x
topology: tpu7x:2x2x1
jax: 0.10.0
libtpu: 0.0.40
codegen_flags: <defaults>
</compile_context>

<pallas_src>
import numpy as np
import jax
import jax.numpy as jnp
from jax.experimental import pallas as pl
from jax.experimental.pallas import tpu as pltpu

LAYER_CHANNELS = [(1, 8), (8, 16), (16, 32), (32, 32), (32, 64)]
NUM_LAYERS = len(LAYER_CHANNELS)


# ---------------------------------------------------------------------------
# Fused Pallas kernel (one grid step == one TB-row slice of the batch)
# ---------------------------------------------------------------------------
def _fused_kernel(x_ref, *refs):
    """refs = (w1, b1, w2, b2, ..., w5, b5, out_ref, act1, ..., act5)
       layer 1 : w (3, 8, 1),   b (1, 8, 1)     -- broadcast-FMA weights (lane-dense conv)
       layer l : w (3*cin, cout), b (1, cout)   -- im2col matrices
       out_ref : (TB, 64)
       act_l   : (TB*L_l, C_l) VMEM stash of pre-pool ReLU rows (stride-2 pool reads)
    """
    wb = refs[: 2 * NUM_LAYERS]
    out_ref = refs[2 * NUM_LAYERS]
    act_refs = refs[2 * NUM_LAYERS + 1:]

    x = x_ref[...]                                   # (TB, L), sequence on the lane axis
    tb, seq = x.shape

    # ---- layer 1: Conv1d(1->8, k=3, pad=1) + ReLU, lane-dense (VPU broadcast FMAs) ----
    w1 = wb[0][...]                                  # (3, 8, 1)
    b1 = wb[1][...]                                  # (1, 8, 1)
    zcol = jnp.zeros((tb, 1), jnp.float32)
    x_m1 = jnp.concatenate([zcol, x[:, : seq - 1]], axis=1)   # x[:, l-1] (zero pad left)
    x_p1 = jnp.concatenate([x[:, 1:], zcol], axis=1)          # x[:, l+1] (zero pad right)
    y = (x_m1[:, None, :] * w1[0:1]
         + x[:, None, :] * w1[1:2]
         + x_p1[:, None, :] * w1[2:3]
         + b1)                                       # (TB, 8, L)
    y = jnp.maximum(y, 0.0)
    # the network's single channels->lanes relayout (one minor-dim transpose)
    y = jnp.transpose(y, (0, 2, 1)).reshape(tb * seq, LAYER_CHANNELS[0][1])

    pooled = None
    for layer in range(NUM_LAYERS):
        cout = LAYER_CHANNELS[layer][1]

        # ---- MaxPool1d(2): stash pre-pool rows, read back even/odd rows (stride 2) ----
        act_refs[layer][...] = y                     # (TB*seq, cout)
        half = (tb * seq) // 2
        seq //= 2
        even = act_refs[layer][pl.ds(0, half, stride=2), :]
        odd = act_refs[layer][pl.ds(1, half, stride=2), :]
        pooled = jnp.maximum(even, odd).reshape(tb, seq, cout)   # (TB, seq, cout)

        if layer + 1 < NUM_LAYERS:
            # ---- next Conv1d(k=3, pad=1) + ReLU: in-register taps + one im2col matmul ----
            w = wb[2 * (layer + 1)][...]             # (3*cin, cnext)
            b = wb[2 * (layer + 1) + 1][...]         # (1, cnext)
            cin = cout
            zrow = jnp.zeros((tb, 1, cin), jnp.float32)
            t_m1 = jnp.concatenate([zrow, pooled[:, : seq - 1, :]], axis=1)   # x[l-1]
            t_p1 = jnp.concatenate([pooled[:, 1:, :], zrow], axis=1)          # x[l+1]
            patches = jnp.concatenate([t_m1, pooled, t_p1], axis=2)           # (TB, seq, 3*cin)
            y = jnp.dot(patches.reshape(tb * seq, 3 * cin), w,
                        preferred_element_type=jnp.float32) + b
            y = jnp.maximum(y, 0.0)                  # (TB*seq, cnext)

    # ---- AdaptiveAvgPool1d(1) fused epilogue ----
    out_ref[...] = jnp.mean(pooled, axis=1)          # (TB, 64)


# ---------------------------------------------------------------------------
# Host wrapper
# ---------------------------------------------------------------------------
def _pick_batch_tile(batch):
    """Multiple-of-8 batch tile (keeps the sublane block dim aligned).  Big enough to
    amortise the fixed per-grid-step cost and fill the vector units, small enough that the
    VMEM-resident activations (~300 KB/row incl. 128-lane padding) stay a few MB.  Keeps
    grid length >= 2 whenever the batch allows (both v7x TensorCores get work)."""
    if batch <= 8:
        return 8
    tile = (batch // 2) // 8 * 8
    return int(max(8, min(32, tile)))


def channel_conv_forward(x_ncl, packed_params, *, batch_tile=None):
    """x_ncl: (B, 1, L) float, PyTorch NCL layout.  Returns (B, 64, 1) like the nn.Module."""
    B, cin0, L = x_ncl.shape
    assert cin0 == 1, "first conv expects a single input channel"
    assert L % (2 ** NUM_LAYERS) == 0, "length must be divisible by 2**5 = 32"

    x2d = x_ncl.reshape(B, L).astype(jnp.float32)    # lane-dense input slab (free: C == 1)

    tb = int(batch_tile) if batch_tile is not None else _pick_batch_tile(B)
    num_tiles = -(-B // tb)
    Bp = num_tiles * tb
    if Bp != B:                                      # pad batch up to a whole number of tiles
        x2d = jnp.pad(x2d, ((0, Bp - B), (0, 0)))

    c_last = LAYER_CHANNELS[-1][1]

    in_specs = [pl.BlockSpec((tb, L), lambda i: (i, 0))]
    flat_inputs = [x2d]
    act_scratch = []
    lc = L
    for li, (w_arr, b_arr) in enumerate(packed_params):
        cout = LAYER_CHANNELS[li][1]
        if li == 0:   # (3, 8, 1) / (1, 8, 1) broadcast-FMA weights
            in_specs.append(pl.BlockSpec(w_arr.shape, lambda i: (0, 0, 0)))
            in_specs.append(pl.BlockSpec(b_arr.shape, lambda i: (0, 0, 0)))
        else:         # (3*cin, cout) im2col matrix / (1, cout) bias row
            in_specs.append(pl.BlockSpec(w_arr.shape, lambda i: (0, 0)))
            in_specs.append(pl.BlockSpec(b_arr.shape, lambda i: (0, 0)))
        flat_inputs += [w_arr, b_arr]
        act_scratch.append(pltpu.VMEM((tb * lc, cout), jnp.float32))   # pre-pool ReLU stash
        lc //= 2

    grid_spec = pltpu.PrefetchScalarGridSpec(
        num_scalar_prefetch=0,
        grid=(num_tiles,),
        in_specs=in_specs,
        out_specs=pl.BlockSpec((tb, c_last), lambda i: (i, 0)),
        scratch_shapes=act_scratch,
    )
    out = pl.pallas_call(
        _fused_kernel,
        out_shape=jax.ShapeDtypeStruct((Bp, c_last), jnp.float32),
        grid_spec=grid_spec,
        compiler_params=pltpu.CompilerParams(
            dimension_semantics=("parallel",),       # batch tiles shard across v7x's 2 TCs
            vmem_limit_bytes=32 * 1024 * 1024,       # headroom over v5e's 16 MiB default
        ),
    )(*flat_inputs)
    return out[:B].reshape(B, c_last, 1)             # (B, 64) -> (B, 64, 1)


# ---------------------------------------------------------------------------
# Deterministic parameter init (PyTorch layout) + packing into kernel layouts
# ---------------------------------------------------------------------------
def init_params(key):
    """Per layer: (w: (cout, cin, 3), b: (cout,)) -- PyTorch Conv1d layout."""
    raw = []
    for cin, cout in LAYER_CHANNELS:
        key, kw, kb = jax.random.split(key, 3)
        bound = 1.0 / np.sqrt(cin * 3)
        w = jax.random.uniform(kw, (cout, cin, 3), jnp.float32, -bound, bound)
        b = jax.random.uniform(kb, (cout,), jnp.float32, -bound, bound)
        raw.append((w, b))
    return raw


def pack_params(raw_params):
    packed = []
    for li, (w, b) in enumerate(raw_params):
        cout, cin, _ = w.shape
        if li == 0:
            # (3, cout, 1): broadcast-FMA weights for the lane-dense cin=1 layer.
            packed.append((jnp.transpose(w, (2, 0, 1)).astype(jnp.float32),
                           b.reshape(1, cout, 1).astype(jnp.float32)))
        else:
            # im2col matrix: W[k*cin + ci, co] = w[co, ci, k].
            packed.append((jnp.transpose(w, (2, 1, 0)).reshape(3 * cin, cout).astype(jnp.float32),
                           b.reshape(1, cout).astype(jnp.float32)))
    return packed


# ---------------------------------------------------------------------------
# Pure-JAX reference (no Pallas) for the correctness check
# ---------------------------------------------------------------------------
def ref_forward(x_ncl, raw_params):
    x = jnp.transpose(x_ncl, (0, 2, 1)).astype(jnp.float32)    # (B, L, C)
    for w, b in raw_params:                                    # w: (cout, cin, 3)
        B, L, C = x.shape
        xp = jnp.pad(x, ((0, 0), (1, 1), (0, 0)))
        patches = jnp.concatenate([xp[:, 0:L, :], xp[:, 1:L + 1, :], xp[:, 2:L + 2, :]], axis=-1)
        w_mat = jnp.transpose(w, (2, 1, 0)).reshape(3 * C, -1)
        y = jnp.maximum(patches.reshape(B * L, 3 * C) @ w_mat + b[None, :], 0.0)
        y = y.reshape(B, L, -1)
        x = jnp.maximum(y[:, 0::2, :], y[:, 1::2, :])
    g = jnp.mean(x, axis=1, keepdims=True)                     # (B, 1, 64)
    return jnp.transpose(g, (0, 2, 1))                         # (B, 64, 1)


if __name__ == "__main__":
    key = jax.random.PRNGKey(0)
    pkey, xkey = jax.random.split(key)
    raw_params = init_params(pkey)
    packed_params = pack_params(raw_params)

    # Small but representative: B=20 exercises batch tiling (TB=8, grid=3) and batch padding.
    B, L = 20, 128
    x = jax.random.normal(xkey, (B, 1, L), dtype=jnp.float32)  # NCL, Cin=1

    fwd = jax.jit(channel_conv_forward)
    out = jax.block_until_ready(fwd(x, packed_params))

    assert out.shape == (B, 64, 1), out.shape
    ref = ref_forward(x, raw_params)
    np.testing.assert_allclose(np.asarray(out), np.asarray(ref), rtol=1e-4, atol=1e-5)

    print("KERNEL_OK")
</pallas_src>

<mosaic_0001>
module attributes {stable_mosaic.version = 11 : i64} {
  func.func @_fused_kernel(%arg0: i32, %arg1: memref<8x128xf32, #tpu.memory_space<vmem>>, %arg2: memref<3x8x1xf32, #tpu.memory_space<vmem>>, %arg3: memref<1x8x1xf32, #tpu.memory_space<vmem>>, %arg4: memref<24x16xf32, #tpu.memory_space<vmem>>, %arg5: memref<1x16xf32, #tpu.memory_space<vmem>>, %arg6: memref<48x32xf32, #tpu.memory_space<vmem>>, %arg7: memref<1x32xf32, #tpu.memory_space<vmem>>, %arg8: memref<96x32xf32, #tpu.memory_space<vmem>>, %arg9: memref<1x32xf32, #tpu.memory_space<vmem>>, %arg10: memref<96x64xf32, #tpu.memory_space<vmem>>, %arg11: memref<1x64xf32, #tpu.memory_space<vmem>>, %arg12: memref<8x64xf32, #tpu.memory_space<vmem>>, %arg13: memref<1024x8xf32, #tpu.memory_space<vmem>>, %arg14: memref<512x16xf32, #tpu.memory_space<vmem>>, %arg15: memref<256x32xf32, #tpu.memory_space<vmem>>, %arg16: memref<128x32xf32, #tpu.memory_space<vmem>>, %arg17: memref<64x64xf32, #tpu.memory_space<vmem>>) attributes {dimension_semantics = [#tpu.dimension_semantics<parallel>], iteration_bounds = array<i64: 3>, scalar_prefetch = 0 : i64, scratch_operands = 5 : i64, tpu.core_type = #tpu.core_type<tc>, window_params = [{transform_indices = @transform_0, window_bounds = array<i64: 8, 128>}, {pipeline_mode = #tpu.pipeline_mode<synchronous>, transform_indices = @transform_1, window_bounds = array<i64: 3, 8, 1>}, {pipeline_mode = #tpu.pipeline_mode<synchronous>, transform_indices = @transform_2, window_bounds = array<i64: 1, 8, 1>}, {pipeline_mode = #tpu.pipeline_mode<synchronous>, transform_indices = @transform_3, window_bounds = array<i64: 24, 16>}, {pipeline_mode = #tpu.pipeline_mode<synchronous>, transform_indices = @transform_4, window_bounds = array<i64: 1, 16>}, {pipeline_mode = #tpu.pipeline_mode<synchronous>, transform_indices = @transform_5, window_bounds = array<i64: 48, 32>}, {pipeline_mode = #tpu.pipeline_mode<synchronous>, transform_indices = @transform_6, window_bounds = array<i64: 1, 32>}, {pipeline_mode = #tpu.pipeline_mode<synchronous>, transform_indices = @transform_7, window_bounds = array<i64: 96, 32>}, {pipeline_mode = #tpu.pipeline_mode<synchronous>, transform_indices = @transform_8, window_bounds = array<i64: 1, 32>}, {pipeline_mode = #tpu.pipeline_mode<synchronous>, transform_indices = @transform_9, window_bounds = array<i64: 96, 64>}, {pipeline_mode = #tpu.pipeline_mode<synchronous>, transform_indices = @transform_10, window_bounds = array<i64: 1, 64>}, {transform_indices = @transform_11, window_bounds = array<i64: 8, 64>}]} {
    %c0 = arith.constant 0 : index
    %c0_0 = arith.constant 0 : index
    %0 = vector.load %arg1[%c0, %c0_0] : memref<8x128xf32, #tpu.memory_space<vmem>>, vector<8x128xf32>
    %c0_1 = arith.constant 0 : index
    %c0_2 = arith.constant 0 : index
    %c0_3 = arith.constant 0 : index
    %1 = vector.load %arg2[%c0_1, %c0_2, %c0_3] : memref<3x8x1xf32, #tpu.memory_space<vmem>>, vector<3x8x1xf32>
    %c0_4 = arith.constant 0 : index
    %c0_5 = arith.constant 0 : index
    %c0_6 = arith.constant 0 : index
    %2 = vector.load %arg3[%c0_4, %c0_5, %c0_6] : memref<1x8x1xf32, #tpu.memory_space<vmem>>, vector<1x8x1xf32>
    %cst = arith.constant 0.000000e+00 : f32
    %3 = vector.broadcast %cst : f32 to vector<8x1xf32>
    %4 = vector.extract_strided_slice %0 {offsets = [0, 0], sizes = [8, 127], strides = [1, 1]} : vector<8x128xf32> to vector<8x127xf32>
    %5 = tpu.concatenate %3, %4 in 1 : vector<8x1xf32>, vector<8x127xf32> -> vector<8x128xf32>
    %6 = vector.extract_strided_slice %0 {offsets = [0, 1], sizes = [8, 127], strides = [1, 1]} : vector<8x128xf32> to vector<8x127xf32>
    %7 = tpu.concatenate %6, %3 in 1 : vector<8x127xf32>, vector<8x1xf32> -> vector<8x128xf32>
    %8 = vector.shape_cast %5 : vector<8x128xf32> to vector<8x1x128xf32>
    %9 = vector.extract_strided_slice %1 {offsets = [0, 0, 0], sizes = [1, 8, 1], strides = [1, 1, 1]} : vector<3x8x1xf32> to vector<1x8x1xf32>
    %10 = vector.broadcast %8 : vector<8x1x128xf32> to vector<8x8x128xf32>
    %11 = vector.broadcast %9 : vector<1x8x1xf32> to vector<8x8x128xf32>
    %12 = arith.mulf %10, %11 : vector<8x8x128xf32>
    %13 = vector.shape_cast %0 : vector<8x128xf32> to vector<8x1x128xf32>
    %14 = vector.extract_strided_slice %1 {offsets = [1, 0, 0], sizes = [1, 8, 1], strides = [1, 1, 1]} : vector<3x8x1xf32> to vector<1x8x1xf32>
    %15 = vector.broadcast %13 : vector<8x1x128xf32> to vector<8x8x128xf32>
    %16 = vector.broadcast %14 : vector<1x8x1xf32> to vector<8x8x128xf32>
    %17 = arith.mulf %15, %16 : vector<8x8x128xf32>
    %18 = arith.addf %12, %17 : vector<8x8x128xf32>
    %19 = vector.shape_cast %7 : vector<8x128xf32> to vector<8x1x128xf32>
    %20 = vector.extract_strided_slice %1 {offsets = [2, 0, 0], sizes = [1, 8, 1], strides = [1, 1, 1]} : vector<3x8x1xf32> to vector<1x8x1xf32>
    %21 = vector.broadcast %19 : vector<8x1x128xf32> to vector<8x8x128xf32>
    %22 = vector.broadcast %20 : vector<1x8x1xf32> to vector<8x8x128xf32>
    %23 = arith.mulf %21, %22 : vector<8x8x128xf32>
    %24 = arith.addf %18, %23 : vector<8x8x128xf32>
    %25 = vector.broadcast %2 : vector<1x8x1xf32> to vector<8x8x128xf32>
    %26 = arith.addf %24, %25 : vector<8x8x128xf32>
    %cst_7 = arith.constant 0.000000e+00 : f32
    %27 = vector.broadcast %cst_7 : f32 to vector<8x8x128xf32>
    %28 = arith.maximumf %26, %27 : vector<8x8x128xf32>
    %29 = tpu.transpose %28, [0, 2, 1] : vector<8x8x128xf32> -> vector<8x128x8xf32>
    %30 = vector.shape_cast %29 : vector<8x128x8xf32> to vector<1024x8xf32>
    %c0_8 = arith.constant 0 : index
    %c0_9 = arith.constant 0 : index
    %31 = vector.load %arg13[%c0_8, %c0_9] : memref<1024x8xf32, #tpu.memory_space<vmem>>, vector<1024x8xf32>
    tpu.vector_store %arg13[%c0_8, %c0_9], %30 {strides = array<i32>} : memref<1024x8xf32, #tpu.memory_space<vmem>>, vector<1024x8xf32>,
    %c0_10 = arith.constant 0 : index
    %c0_11 = arith.constant 0 : index
    %32 = tpu.strided_load %arg13[%c0_10, %c0_11] {strides = array<i32: 2, 1>} : memref<1024x8xf32, #tpu.memory_space<vmem>>, vector<512x8xf32>
    %c1 = arith.constant 1 : index
    %c0_12 = arith.constant 0 : index
    %33 = tpu.strided_load %arg13[%c1, %c0_12] {strides = array<i32: 2, 1>} : memref<1024x8xf32, #tpu.memory_space<vmem>>, vector<512x8xf32>
    %34 = arith.maximumf %32, %33 : vector<512x8xf32>
    %35 = vector.shape_cast %34 : vector<512x8xf32> to vector<8x64x8xf32>
    %c0_13 = arith.constant 0 : index
    %c0_14 = arith.constant 0 : index
    %36 = vector.load %arg4[%c0_13, %c0_14] : memref<24x16xf32, #tpu.memory_space<vmem>>, vector<24x16xf32>
    %c0_15 = arith.constant 0 : index
    %c0_16 = arith.constant 0 : index
    %37 = vector.load %arg5[%c0_15, %c0_16] : memref<1x16xf32, #tpu.memory_space<vmem>>, vector<1x16xf32>
    %cst_17 = arith.constant 0.000000e+00 : f32
    %38 = vector.broadcast %cst_17 : f32 to vector<8x1x8xf32>
    %39 = vector.extract_strided_slice %35 {offsets = [0, 0, 0], sizes = [8, 63, 8], strides = [1, 1, 1]} : vector<8x64x8xf32> to vector<8x63x8xf32>
    %40 = tpu.concatenate %38, %39 in 1 : vector<8x1x8xf32>, vector<8x63x8xf32> -> vector<8x64x8xf32>
    %41 = vector.extract_strided_slice %35 {offsets = [0, 1, 0], sizes = [8, 63, 8], strides = [1, 1, 1]} : vector<8x64x8xf32> to vector<8x63x8xf32>
    %42 = tpu.concatenate %41, %38 in 1 : vector<8x63x8xf32>, vector<8x1x8xf32> -> vector<8x64x8xf32>
    %43 = tpu.concatenate %40, %35, %42 in 2 : vector<8x64x8xf32>, vector<8x64x8xf32>, vector<8x64x8xf32> -> vector<8x64x24xf32>
    %44 = vector.shape_cast %43 : vector<8x64x24xf32> to vector<512x24xf32>
    %cst_18 = arith.constant dense<0.000000e+00> : vector<512x16xf32>
    %45 = tpu.matmul %44, %36, %cst_18 {dimension_numbers = #tpu.dot_dimension_numbers<[1], [0], [0], [1], [0, 0, 1, 1], [], []>} : vector<512x24xf32>, vector<24x16xf32>, vector<512x16xf32> -> vector<512x16xf32>
    %46 = vector.broadcast %37 : vector<1x16xf32> to vector<512x16xf32>
    %47 = arith.addf %45, %46 : vector<512x16xf32>
    %cst_19 = arith.constant 0.000000e+00 : f32
    %48 = vector.broadcast %cst_19 : f32 to vector<512x16xf32>
    %49 = arith.maximumf %47, %48 : vector<512x16xf32>
    %c0_20 = arith.constant 0 : index
    %c0_21 = arith.constant 0 : index
    %50 = vector.load %arg14[%c0_20, %c0_21] : memref<512x16xf32, #tpu.memory_space<vmem>>, vector<512x16xf32>
    tpu.vector_store %arg14[%c0_20, %c0_21], %49 {strides = array<i32>} : memref<512x16xf32, #tpu.memory_space<vmem>>, vector<512x16xf32>,
    %c0_22 = arith.constant 0 : index
    %c0_23 = arith.constant 0 : index
    %51 = tpu.strided_load %arg14[%c0_22, %c0_23] {strides = array<i32: 2, 1>} : memref<512x16xf32, #tpu.memory_space<vmem>>, vector<256x16xf32>
    %c1_24 = arith.constant 1 : index
    %c0_25 = arith.constant 0 : index
    %52 = tpu.strided_load %arg14[%c1_24, %c0_25] {strides = array<i32: 2, 1>} : memref<512x16xf32, #tpu.memory_space<vmem>>, vector<256x16xf32>
    %53 = arith.maximumf %51, %52 : vector<256x16xf32>
    %54 = vector.shape_cast %53 : vector<256x16xf32> to vector<8x32x16xf32>
    %c0_26 = arith.constant 0 : index
    %c0_27 = arith.constant 0 : index
    %55 = vector.load %arg6[%c0_26, %c0_27] : memref<48x32xf32, #tpu.memory_space<vmem>>, vector<48x32xf32>
    %c0_28 = arith.constant 0 : index
    %c0_29 = arith.constant 0 : index
    %56 = vector.load %arg7[%c0_28, %c0_29] : memref<1x32xf32, #tpu.memory_space<vmem>>, vector<1x32xf32>
    %cst_30 = arith.constant 0.000000e+00 : f32
    %57 = vector.broadcast %cst_30 : f32 to vector<8x1x16xf32>
    %58 = vector.extract_strided_slice %54 {offsets = [0, 0, 0], sizes = [8, 31, 16], strides = [1, 1, 1]} : vector<8x32x16xf32> to vector<8x31x16xf32>
    %59 = tpu.concatenate %57, %58 in 1 : vector<8x1x16xf32>, vector<8x31x16xf32> -> vector<8x32x16xf32>
    %60 = vector.extract_strided_slice %54 {offsets = [0, 1, 0], sizes = [8, 31, 16], strides = [1, 1, 1]} : vector<8x32x16xf32> to vector<8x31x16xf32>
    %61 = tpu.concatenate %60, %57 in 1 : vector<8x31x16xf32>, vector<8x1x16xf32> -> vector<8x32x16xf32>
    %62 = tpu.concatenate %59, %54, %61 in 2 : vector<8x32x16xf32>, vector<8x32x16xf32>, vector<8x32x16xf32> -> vector<8x32x48xf32>
    %63 = vector.shape_cast %62 : vector<8x32x48xf32> to vector<256x48xf32>
    %cst_31 = arith.constant dense<0.000000e+00> : vector<256x32xf32>
    %64 = tpu.matmul %63, %55, %cst_31 {dimension_numbers = #tpu.dot_dimension_numbers<[1], [0], [0], [1], [0, 0, 1, 1], [], []>} : vector<256x48xf32>, vector<48x32xf32>, vector<256x32xf32> -> vector<256x32xf32>
    %65 = vector.broadcast %56 : vector<1x32xf32> to vector<256x32xf32>
    %66 = arith.addf %64, %65 : vector<256x32xf32>
    %cst_32 = arith.constant 0.000000e+00 : f32
    %67 = vector.broadcast %cst_32 : f32 to vector<256x32xf32>
    %68 = arith.maximumf %66, %67 : vector<256x32xf32>
    %c0_33 = arith.constant 0 : index
    %c0_34 = arith.constant 0 : index
    %69 = vector.load %arg15[%c0_33, %c0_34] : memref<256x32xf32, #tpu.memory_space<vmem>>, vector<256x32xf32>
    tpu.vector_store %arg15[%c0_33, %c0_34], %68 {strides = array<i32>} : memref<256x32xf32, #tpu.memory_space<vmem>>, vector<256x32xf32>,
    %c0_35 = arith.constant 0 : index
    %c0_36 = arith.constant 0 : index
    %70 = tpu.strided_load %arg15[%c0_35, %c0_36] {strides = array<i32: 2, 1>} : memref<256x32xf32, #tpu.memory_space<vmem>>, vector<128x32xf32>
    %c1_37 = arith.constant 1 : index
    %c0_38 = arith.constant 0 : index
    %71 = tpu.strided_load %arg15[%c1_37, %c0_38] {strides = array<i32: 2, 1>} : memref<256x32xf32, #tpu.memory_space<vmem>>, vector<128x32xf32>
    %72 = arith.maximumf %70, %71 : vector<128x32xf32>
    %73 = vector.shape_cast %72 : vector<128x32xf32> to vector<8x16x32xf32>
    %c0_39 = arith.constant 0 : index
    %c0_40 = arith.constant 0 : index
    %74 = vector.load %arg8[%c0_39, %c0_40] : memref<96x32xf32, #tpu.memory_space<vmem>>, vector<96x32xf32>
    %c0_41 = arith.constant 0 : index
    %c0_42 = arith.constant 0 : index
    %75 = vector.load %arg9[%c0_41, %c0_42] : memref<1x32xf32, #tpu.memory_space<vmem>>, vector<1x32xf32>
    %cst_43 = arith.constant 0.000000e+00 : f32
    %76 = vector.broadcast %cst_43 : f32 to vector<8x1x32xf32>
    %77 = vector.extract_strided_slice %73 {offsets = [0, 0, 0], sizes = [8, 15, 32], strides = [1, 1, 1]} : vector<8x16x32xf32> to vector<8x15x32xf32>
    %78 = tpu.concatenate %76, %77 in 1 : vector<8x1x32xf32>, vector<8x15x32xf32> -> vector<8x16x32xf32>
    %79 = vector.extract_strided_slice %73 {offsets = [0, 1, 0], sizes = [8, 15, 32], strides = [1, 1, 1]} : vector<8x16x32xf32> to vector<8x15x32xf32>
    %80 = tpu.concatenate %79, %76 in 1 : vector<8x15x32xf32>, vector<8x1x32xf32> -> vector<8x16x32xf32>
    %81 = tpu.concatenate %78, %73, %80 in 2 : vector<8x16x32xf32>, vector<8x16x32xf32>, vector<8x16x32xf32> -> vector<8x16x96xf32>
    %82 = vector.shape_cast %81 : vector<8x16x96xf32> to vector<128x96xf32>
    %cst_44 = arith.constant dense<0.000000e+00> : vector<128x32xf32>
    %83 = tpu.matmul %82, %74, %cst_44 {dimension_numbers = #tpu.dot_dimension_numbers<[1], [0], [0], [1], [0, 0, 1, 1], [], []>} : vector<128x96xf32>, vector<96x32xf32>, vector<128x32xf32> -> vector<128x32xf32>
    %84 = vector.broadcast %75 : vector<1x32xf32> to vector<128x32xf32>
    %85 = arith.addf %83, %84 : vector<128x32xf32>
    %cst_45 = arith.constant 0.000000e+00 : f32
    %86 = vector.broadcast %cst_45 : f32 to vector<128x32xf32>
    %87 = arith.maximumf %85, %86 : vector<128x32xf32>
    %c0_46 = arith.constant 0 : index
    %c0_47 = arith.constant 0 : index
    %88 = vector.load %arg16[%c0_46, %c0_47] : memref<128x32xf32, #tpu.memory_space<vmem>>, vector<128x32xf32>
    tpu.vector_store %arg16[%c0_46, %c0_47], %87 {strides = array<i32>} : memref<128x32xf32, #tpu.memory_space<vmem>>, vector<128x32xf32>,
    %c0_48 = arith.constant 0 : index
    %c0_49 = arith.constant 0 : index
    %89 = tpu.strided_load %arg16[%c0_48, %c0_49] {strides = array<i32: 2, 1>} : memref<128x32xf32, #tpu.memory_space<vmem>>, vector<64x32xf32>
    %c1_50 = arith.constant 1 : index
    %c0_51 = arith.constant 0 : index
    %90 = tpu.strided_load %arg16[%c1_50, %c0_51] {strides = array<i32: 2, 1>} : memref<128x32xf32, #tpu.memory_space<vmem>>, vector<64x32xf32>
    %91 = arith.maximumf %89, %90 : vector<64x32xf32>
    %92 = vector.shape_cast %91 : vector<64x32xf32> to vector<8x8x32xf32>
    %c0_52 = arith.constant 0 : index
    %c0_53 = arith.constant 0 : index
    %93 = vector.load %arg10[%c0_52, %c0_53] : memref<96x64xf32, #tpu.memory_space<vmem>>, vector<96x64xf32>
    %c0_54 = arith.constant 0 : index
    %c0_55 = arith.constant 0 : index
    %94 = vector.load %arg11[%c0_54, %c0_55] : memref<1x64xf32, #tpu.memory_space<vmem>>, vector<1x64xf32>
    %cst_56 = arith.constant 0.000000e+00 : f32
    %95 = vector.broadcast %cst_56 : f32 to vector<8x1x32xf32>
    %96 = vector.extract_strided_slice %92 {offsets = [0, 0, 0], sizes = [8, 7, 32], strides = [1, 1, 1]} : vector<8x8x32xf32> to vector<8x7x32xf32>
    %97 = tpu.concatenate %95, %96 in 1 : vector<8x1x32xf32>, vector<8x7x32xf32> -> vector<8x8x32xf32>
    %98 = vector.extract_strided_slice %92 {offsets = [0, 1, 0], sizes = [8, 7, 32], strides = [1, 1, 1]} : vector<8x8x32xf32> to vector<8x7x32xf32>
    %99 = tpu.concatenate %98, %95 in 1 : vector<8x7x32xf32>, vector<8x1x32xf32> -> vector<8x8x32xf32>
    %100 = tpu.concatenate %97, %92, %99 in 2 : vector<8x8x32xf32>, vector<8x8x32xf32>, vector<8x8x32xf32> -> vector<8x8x96xf32>
    %101 = vector.shape_cast %100 : vector<8x8x96xf32> to vector<64x96xf32>
    %cst_57 = arith.constant dense<0.000000e+00> : vector<64x64xf32>
    %102 = tpu.matmul %101, %93, %cst_57 {dimension_numbers = #tpu.dot_dimension_numbers<[1], [0], [0], [1], [0, 0, 1, 1], [], []>} : vector<64x96xf32>, vector<96x64xf32>, vector<64x64xf32> -> vector<64x64xf32>
    %103 = vector.broadcast %94 : vector<1x64xf32> to vector<64x64xf32>
    %104 = arith.addf %102, %103 : vector<64x64xf32>
    %cst_58 = arith.constant 0.000000e+00 : f32
    %105 = vector.broadcast %cst_58 : f32 to vector<64x64xf32>
    %106 = arith.maximumf %104, %105 : vector<64x64xf32>
    %c0_59 = arith.constant 0 : index
    %c0_60 = arith.constant 0 : index
    %107 = vector.load %arg17[%c0_59, %c0_60] : memref<64x64xf32, #tpu.memory_space<vmem>>, vector<64x64xf32>
    tpu.vector_store %arg17[%c0_59, %c0_60], %106 {strides = array<i32>} : memref<64x64xf32, #tpu.memory_space<vmem>>, vector<64x64xf32>,
    %c0_61 = arith.constant 0 : index
    %c0_62 = arith.constant 0 : index
    %108 = tpu.strided_load %arg17[%c0_61, %c0_62] {strides = array<i32: 2, 1>} : memref<64x64xf32, #tpu.memory_space<vmem>>, vector<32x64xf32>
    %c1_63 = arith.constant 1 : index
    %c0_64 = arith.constant 0 : index
    %109 = tpu.strided_load %arg17[%c1_63, %c0_64] {strides = array<i32: 2, 1>} : memref<64x64xf32, #tpu.memory_space<vmem>>, vector<32x64xf32>
    %110 = arith.maximumf %108, %109 : vector<32x64xf32>
    %111 = vector.shape_cast %110 : vector<32x64xf32> to vector<8x4x64xf32>
    %cst_65 = arith.constant dense<0.000000e+00> : vector<8x64xf32>
    %112 = vector.multi_reduction <add>, %111, %cst_65 [1] : vector<8x4x64xf32> to vector<8x64xf32>
    %cst_66 = arith.constant 4.000000e+00 : f32
    %113 = vector.broadcast %cst_66 : f32 to vector<8x64xf32>
    %114 = arith.divf %112, %113 : vector<8x64xf32>
    %c0_67 = arith.constant 0 : index
    %c0_68 = arith.constant 0 : index
    %115 = vector.load %arg12[%c0_67, %c0_68] : memref<8x64xf32, #tpu.memory_space<vmem>>, vector<8x64xf32>
    tpu.vector_store %arg12[%c0_67, %c0_68], %114 {strides = array<i32>} : memref<8x64xf32, #tpu.memory_space<vmem>>, vector<8x64xf32>,
    return
  }
  func.func @transform_0(%arg0: i32) -> (i32, i32) {
    %c0_i32 = arith.constant 0 : i32
    %c0_i32_0 = arith.constant 0 : i32
    return %arg0, %c0_i32 : i32, i32
  }
  func.func @transform_1(%arg0: i32) -> (i32, i32, i32) {
    %c0_i32 = arith.constant 0 : i32
    %c0_i32_0 = arith.constant 0 : i32
    %c0_i32_1 = arith.constant 0 : i32
    %c0_i32_2 = arith.constant 0 : i32
    return %c0_i32, %c0_i32_0, %c0_i32_1 : i32, i32, i32
  }
  func.func @transform_2(%arg0: i32) -> (i32, i32, i32) {
    %c0_i32 = arith.constant 0 : i32
    %c0_i32_0 = arith.constant 0 : i32
    %c0_i32_1 = arith.constant 0 : i32
    %c0_i32_2 = arith.constant 0 : i32
    return %c0_i32, %c0_i32_0, %c0_i32_1 : i32, i32, i32
  }
  func.func @transform_3(%arg0: i32) -> (i32, i32) {
    %c0_i32 = arith.constant 0 : i32
    %c0_i32_0 = arith.constant 0 : i32
    %c0_i32_1 = arith.constant 0 : i32
    return %c0_i32, %c0_i32_0 : i32, i32
  }
  func.func @transform_4(%arg0: i32) -> (i32, i32) {
    %c0_i32 = arith.constant 0 : i32
    %c0_i32_0 = arith.constant 0 : i32
    %c0_i32_1 = arith.constant 0 : i32
    return %c0_i32, %c0_i32_0 : i32, i32
  }
  func.func @transform_5(%arg0: i32) -> (i32, i32) {
    %c0_i32 = arith.constant 0 : i32
    %c0_i32_0 = arith.constant 0 : i32
    %c0_i32_1 = arith.constant 0 : i32
    return %c0_i32, %c0_i32_0 : i32, i32
  }
  func.func @transform_6(%arg0: i32) -> (i32, i32) {
    %c0_i32 = arith.constant 0 : i32
    %c0_i32_0 = arith.constant 0 : i32
    %c0_i32_1 = arith.constant 0 : i32
    return %c0_i32, %c0_i32_0 : i32, i32
  }
  func.func @transform_7(%arg0: i32) -> (i32, i32) {
    %c0_i32 = arith.constant 0 : i32
    %c0_i32_0 = arith.constant 0 : i32
    %c0_i32_1 = arith.constant 0 : i32
    return %c0_i32, %c0_i32_0 : i32, i32
  }
  func.func @transform_8(%arg0: i32) -> (i32, i32) {
    %c0_i32 = arith.constant 0 : i32
    %c0_i32_0 = arith.constant 0 : i32
    %c0_i32_1 = arith.constant 0 : i32
    return %c0_i32, %c0_i32_0 : i32, i32
  }
  func.func @transform_9(%arg0: i32) -> (i32, i32) {
    %c0_i32 = arith.constant 0 : i32
    %c0_i32_0 = arith.constant 0 : i32
    %c0_i32_1 = arith.constant 0 : i32
    return %c0_i32, %c0_i32_0 : i32, i32
  }
  func.func @transform_10(%arg0: i32) -> (i32, i32) {
    %c0_i32 = arith.constant 0 : i32
    %c0_i32_0 = arith.constant 0 : i32
    %c0_i32_1 = arith.constant 0 : i32
    return %c0_i32, %c0_i32_0 : i32, i32
  }
  func.func @transform_11(%arg0: i32) -> (i32, i32) {
    %c0_i32 = arith.constant 0 : i32
    %c0_i32_0 = arith.constant 0 : i32
    return %arg0, %c0_i32 : i32, i32
  }
}

</mosaic_0001>

<llo_original>
// kernel: channel_conv_forward.1
$region0: #{channel_conv_forward.1}
  #allocation0 [shape = 'u32[]', space=smem, size = 0x4, offset = 0x4, fixed_abs, tag = 'smem constant byte address 0x4 - core index']
  #allocation1 [shape = 'u32[144,128]{1,0:T(1,128)}', space=vmem, size = 0x12000, scoped, tag = 'internal scratch']
  #allocation2 [shape = 'f32[1024,8]{1,0:T(8,128)}', space=vmem, size = 0x80000, scoped, tag = 'scratch operand']
  #allocation3 [shape = 'f32[512,16]{1,0:T(8,128)}', space=vmem, size = 0x40000, scoped, tag = 'scratch operand']
  #allocation4 [shape = 'f32[256,32]{1,0:T(8,128)}', space=vmem, size = 0x20000, scoped, tag = 'scratch operand']
  #allocation5 [shape = 'f32[128,32]{1,0:T(8,128)}', space=vmem, size = 0x10000, scoped, tag = 'scratch operand']
  #allocation6 [shape = 'f32[64,64]{1,0:T(8,128)}', space=vmem, size = 0x8000, scoped, tag = 'scratch operand']
  %s0 = inlined_call_operand.vmem [shape: f32[24,128], index: 0, kind: input, shape index: {}]
  %s1 = inlined_call_operand.vmem [shape: f32[3,8,1], index: 1, kind: input, shape index: {}]
  %s2 = inlined_call_operand.vmem [shape: f32[1,8,1], index: 2, kind: input, shape index: {}]
  %s3 = inlined_call_operand.vmem [shape: f32[24,16], index: 3, kind: input, shape index: {}]
  %s4 = inlined_call_operand.vmem [shape: f32[1,16], index: 4, kind: input, shape index: {}]
  %s5 = inlined_call_operand.vmem [shape: f32[48,32], index: 5, kind: input, shape index: {}]
  %s6 = inlined_call_operand.vmem [shape: f32[1,32], index: 6, kind: input, shape index: {}]
  %s7 = inlined_call_operand.vmem [shape: f32[96,32], index: 7, kind: input, shape index: {}]
  %s8 = inlined_call_operand.vmem [shape: f32[1,32], index: 8, kind: input, shape index: {}]
  %s9 = inlined_call_operand.vmem [shape: f32[96,64], index: 9, kind: input, shape index: {}]
  %s10 = inlined_call_operand.vmem [shape: f32[1,64], index: 10, kind: input, shape index: {}]
  %s11 = inlined_call_operand.vmem [shape: f32[24,64], index: 11, kind: output, shape index: {}]
  %s12 = sld [smem:[#allocation0]]
  $region77: #{channel_conv_forward.1} parent=0
    _
  %s14 = ssub.s32 1, %s12
  %s15 = scalar_select 0, %s14, %s12
  loop: start=0, step=1, limit=5
  $region2: #{channel_conv_forward.1} parent=0 // loop_pre_header
    _
  $region3: #{channel_conv_forward.1} parent=0 // loop_header
    %s17 = sphi 0, %s21
    %p18 = scmp.ge.s32.totalorder %s17, 5
    %s27 = sphi 0, %s29
    %s30 = sphi 0, %s27
    %s31 = sphi 0, %s30
    %s47 = sphi 0, %s31
    %s51 = sphi 0, %s51
    %s53 = sphi 0, %s51
    %s54 = sphi 0, %s53
    %s68 = sphi 0, %s54
    %s72 = sphi 0, %s72
    %s74 = sphi 0, %s72
    %s75 = sphi 0, %s74
    %s89 = sphi 0, %s75
    %s93 = sphi 0, %s93
    %s95 = sphi 0, %s93
    %s96 = sphi 0, %s95
    %s110 = sphi 0, %s96
    %s114 = sphi 0, %s114
    %s116 = sphi 0, %s114
    %s117 = sphi 0, %s116
    %s131 = sphi 0, %s117
    %s135 = sphi 0, %s135
    %s137 = sphi 0, %s135
    %s138 = sphi 0, %s137
    %s152 = sphi 0, %s138
    %s156 = sphi 0, %s156
    %s158 = sphi 0, %s156
    %s159 = sphi 0, %s158
    %s173 = sphi 0, %s159
    %s177 = sphi 0, %s177
    %s179 = sphi 0, %s177
    %s180 = sphi 0, %s179
    %s194 = sphi 0, %s180
    %s198 = sphi 0, %s198
    %s200 = sphi 0, %s198
    %s201 = sphi 0, %s200
    %s215 = sphi 0, %s201
    %s219 = sphi 0, %s219
    %s221 = sphi 0, %s219
    %s222 = sphi 0, %s221
    %s236 = sphi 0, %s222
    %s240 = sphi 0, %s240
    %s242 = sphi 0, %s240
    %s243 = sphi 0, %s242
    %s257 = sphi 0, %s243
    %s263 = sphi 0, %s265
    %s266 = sphi 0, %s263
    %s267 = sphi 0, %s266
    %s283 = sphi 0, %s267
  $region4: #{channel_conv_forward.1} parent=0 // loop_header_branch
    %20 = sbr.rel (%p18) target = $region8
  $region5: #{channel_conv_forward.1} parent=0 // loop_body
    %s22 = ssub.s32 %s17, 1
    %s23 = ssub.s32 %s17, 2
    %s24 = sadd.s32 %s17, 1
    %s25 = ssub.s32 %s17, %s24
    %p26 = scmp.eq.s32.totalorder %s25, 0
    %s28 = sadd.s32 %s27, 1
    %s29 = scalar_select %p26, %s27, %s28
    %p32 = pneg %p26
    %p33 = scmp.eq.s32.totalorder %s17, 2
    %p34 = por %p32, %p33
    %p35 = scmp.ne.s32.totalorder %s27, %s30
    %p36 = scmp.eq.s32.totalorder %s17, 0
    %p37 = por %p35, %p36
    %p38 = scmp.ne.s32.totalorder %s27, %s30
    %p39 = scmp.eq.s32.totalorder %s22, 2
    %p40 = por %p38, %p39
    %p41 = scmp.ne.s32.totalorder %s30, %s31
    %p42 = scmp.eq.s32.totalorder %s22, 0
    %p43 = por %p41, %p42
    %p44 = scmp.ne.s32.totalorder %s30, %s31
    %p45 = scmp.eq.s32.totalorder %s23, 2
    %p46 = por %p44, %p45
    %p48 = scmp.ne.s32.totalorder %s31, %s47
    %p49 = scmp.eq.s32.totalorder %s23, 0
    %p50 = por %p48, %p49
    %s52 = sadd.s32 %s51, 1
    %p55 = scmp.eq.s32.totalorder %s17, 2
    %p56 = scmp.ne.s32.totalorder %s51, %s53
    %p57 = scmp.eq.s32.totalorder %s17, 0
    %p58 = por %p56, %p57
    %p59 = scmp.ne.s32.totalorder %s51, %s53
    %p60 = scmp.eq.s32.totalorder %s22, 2
    %p61 = por %p59, %p60
    %p62 = scmp.ne.s32.totalorder %s53, %s54
    %p63 = scmp.eq.s32.totalorder %s22, 0
    %p64 = por %p62, %p63
    %p65 = scmp.ne.s32.totalorder %s53, %s54
    %p66 = scmp.eq.s32.totalorder %s23, 2
    %p67 = por %p65, %p66
    %p69 = scmp.ne.s32.totalorder %s54, %s68
    %p70 = scmp.eq.s32.totalorder %s23, 0
    %p71 = por %p69, %p70
    %s73 = sadd.s32 %s72, 1
    %p76 = scmp.eq.s32.totalorder %s17, 2
    %p77 = scmp.ne.s32.totalorder %s72, %s74
    %p78 = scmp.eq.s32.totalorder %s17, 0
    %p79 = por %p77, %p78
    %p80 = scmp.ne.s32.totalorder %s72, %s74
    %p81 = scmp.eq.s32.totalorder %s22, 2
    %p82 = por %p80, %p81
    %p83 = scmp.ne.s32.totalorder %s74, %s75
    %p84 = scmp.eq.s32.totalorder %s22, 0
    %p85 = por %p83, %p84
    %p86 = scmp.ne.s32.totalorder %s74, %s75
    %p87 = scmp.eq.s32.totalorder %s23, 2
    %p88 = por %p86, %p87
    %p90 = scmp.ne.s32.totalorder %s75, %s89
    %p91 = scmp.eq.s32.totalorder %s23, 0
    %p92 = por %p90, %p91
    %s94 = sadd.s32 %s93, 1
    %p97 = scmp.eq.s32.totalorder %s17, 2
    %p98 = scmp.ne.s32.totalorder %s93, %s95
    %p99 = scmp.eq.s32.totalorder %s17, 0
    %p100 = por %p98, %p99
    %p101 = scmp.ne.s32.totalorder %s93, %s95
    %p102 = scmp.eq.s32.totalorder %s22, 2
    %p103 = por %p101, %p102
    %p104 = scmp.ne.s32.totalorder %s95, %s96
    %p105 = scmp.eq.s32.totalorder %s22, 0
    %p106 = por %p104, %p105
    %p107 = scmp.ne.s32.totalorder %s95, %s96
    %p108 = scmp.eq.s32.totalorder %s23, 2
    %p109 = por %p107, %p108
    %p111 = scmp.ne.s32.totalorder %s96, %s110
    %p112 = scmp.eq.s32.totalorder %s23, 0
    %p113 = por %p111, %p112
    %s115 = sadd.s32 %s114, 1
    %p118 = scmp.eq.s32.totalorder %s17, 2
    %p119 = scmp.ne.s32.totalorder %s114, %s116
    %p120 = scmp.eq.s32.totalorder %s17, 0
    %p121 = por %p119, %p120
    %p122 = scmp.ne.s32.totalorder %s114, %s116
    %p123 = scmp.eq.s32.totalorder %s22, 2
    %p124 = por %p122, %p123
    %p125 = scmp.ne.s32.totalorder %s116, %s117
    %p126 = scmp.eq.s32.totalorder %s22, 0
    %p127 = por %p125, %p126
    %p128 = scmp.ne.s32.totalorder %s116, %s117
    %p129 = scmp.eq.s32.totalorder %s23, 2
    %p130 = por %p128, %p129
    %p132 = scmp.ne.s32.totalorder %s117, %s131
    %p133 = scmp.eq.s32.totalorder %s23, 0
    %p134 = por %p132, %p133
    %s136 = sadd.s32 %s135, 1
    %p139 = scmp.eq.s32.totalorder %s17, 2
    %p140 = scmp.ne.s32.totalorder %s135, %s137
    %p141 = scmp.eq.s32.totalorder %s17, 0
    %p142 = por %p140, %p141
    %p143 = scmp.ne.s32.totalorder %s135, %s137
    %p144 = scmp.eq.s32.totalorder %s22, 2
    %p145 = por %p143, %p144
    %p146 = scmp.ne.s32.totalorder %s137, %s138
    %p147 = scmp.eq.s32.totalorder %s22, 0
    %p148 = por %p146, %p147
    %p149 = scmp.ne.s32.totalorder %s137, %s138
    %p150 = scmp.eq.s32.totalorder %s23, 2
    %p151 = por %p149, %p150
    %p153 = scmp.ne.s32.totalorder %s138, %s152
    %p154 = scmp.eq.s32.totalorder %s23, 0
    %p155 = por %p153, %p154
    %s157 = sadd.s32 %s156, 1
    %p160 = scmp.eq.s32.totalorder %s17, 2
    %p161 = scmp.ne.s32.totalorder %s156, %s158
    %p162 = scmp.eq.s32.totalorder %s17, 0
    %p163 = por %p161, %p162
    %p164 = scmp.ne.s32.totalorder %s156, %s158
    %p165 = scmp.eq.s32.totalorder %s22, 2
    %p166 = por %p164, %p165
    %p167 = scmp.ne.s32.totalorder %s158, %s159
    %p168 = scmp.eq.s32.totalorder %s22, 0
    %p169 = por %p167, %p168
    %p170 = scmp.ne.s32.totalorder %s158, %s159
    %p171 = scmp.eq.s32.totalorder %s23, 2
    %p172 = por %p170, %p171
    %p174 = scmp.ne.s32.totalorder %s159, %s173
    %p175 = scmp.eq.s32.totalorder %s23, 0
    %p176 = por %p174, %p175
    %s178 = sadd.s32 %s177, 1
    %p181 = scmp.eq.s32.totalorder %s17, 2
    %p182 = scmp.ne.s32.totalorder %s177, %s179
    %p183 = scmp.eq.s32.totalorder %s17, 0
    %p184 = por %p182, %p183
    %p185 = scmp.ne.s32.totalorder %s177, %s179
    %p186 = scmp.eq.s32.totalorder %s22, 2
    %p187 = por %p185, %p186
    %p188 = scmp.ne.s32.totalorder %s179, %s180
    %p189 = scmp.eq.s32.totalorder %s22, 0
    %p190 = por %p188, %p189
    %p191 = scmp.ne.s32.totalorder %s179, %s180
    %p192 = scmp.eq.s32.totalorder %s23, 2
    %p193 = por %p191, %p192
    %p195 = scmp.ne.s32.totalorder %s180, %s194
    %p196 = scmp.eq.s32.totalorder %s23, 0
    %p197 = por %p195, %p196
    %s199 = sadd.s32 %s198, 1
    %p202 = scmp.eq.s32.totalorder %s17, 2
    %p203 = scmp.ne.s32.totalorder %s198, %s200
    %p204 = scmp.eq.s32.totalorder %s17, 0
    %p205 = por %p203, %p204
    %p206 = scmp.ne.s32.totalorder %s198, %s200
    %p207 = scmp.eq.s32.totalorder %s22, 2
    %p208 = por %p206, %p207
    %p209 = scmp.ne.s32.totalorder %s200, %s201
    %p210 = scmp.eq.s32.totalorder %s22, 0
    %p211 = por %p209, %p210
    %p212 = scmp.ne.s32.totalorder %s200, %s201
    %p213 = scmp.eq.s32.totalorder %s23, 2
    %p214 = por %p212, %p213
    %p216 = scmp.ne.s32.totalorder %s201, %s215
    %p217 = scmp.eq.s32.totalorder %s23, 0
    %p218 = por %p216, %p217
    %s220 = sadd.s32 %s219, 1
    %p223 = scmp.eq.s32.totalorder %s17, 2
    %p224 = scmp.ne.s32.totalorder %s219, %s221
    %p225 = scmp.eq.s32.totalorder %s17, 0
    %p226 = por %p224, %p225
    %p227 = scmp.ne.s32.totalorder %s219, %s221
    %p228 = scmp.eq.s32.totalorder %s22, 2
    %p229 = por %p227, %p228
    %p230 = scmp.ne.s32.totalorder %s221, %s222
    %p231 = scmp.eq.s32.totalorder %s22, 0
    %p232 = por %p230, %p231
    %p233 = scmp.ne.s32.totalorder %s221, %s222
    %p234 = scmp.eq.s32.totalorder %s23, 2
    %p235 = por %p233, %p234
    %p237 = scmp.ne.s32.totalorder %s222, %s236
    %p238 = scmp.eq.s32.totalorder %s23, 0
    %p239 = por %p237, %p238
    %s241 = sadd.s32 %s240, 1
    %p244 = scmp.eq.s32.totalorder %s17, 2
    %p245 = scmp.ne.s32.totalorder %s240, %s242
    %p246 = scmp.eq.s32.totalorder %s17, 0
    %p247 = por %p245, %p246
    %p248 = scmp.ne.s32.totalorder %s240, %s242
    %p249 = scmp.eq.s32.totalorder %s22, 2
    %p250 = por %p248, %p249
    %p251 = scmp.ne.s32.totalorder %s242, %s243
    %p252 = scmp.eq.s32.totalorder %s22, 0
    %p253 = por %p251, %p252
    %p254 = scmp.ne.s32.totalorder %s242, %s243
    %p255 = scmp.eq.s32.totalorder %s23, 2
    %p256 = por %p254, %p255
    %p258 = scmp.ne.s32.totalorder %s243, %s257
    %p259 = scmp.eq.s32.totalorder %s23, 0
    %p260 = por %p258, %p259
    %s261 = ssub.s32 %s17, %s24
    %p262 = scmp.eq.s32.totalorder %s261, 0
    %s264 = sadd.s32 %s263, 1
    %s265 = scalar_select %p262, %s263, %s264
    %p268 = pneg %p262
    %p269 = scmp.eq.s32.totalorder %s17, 2
    %p270 = por %p268, %p269
    %p271 = scmp.ne.s32.totalorder %s263, %s266
    %p272 = scmp.eq.s32.totalorder %s17, 0
    %p273 = por %p271, %p272
    %p274 = scmp.ne.s32.totalorder %s263, %s266
    %p275 = scmp.eq.s32.totalorder %s22, 2
    %p276 = por %p274, %p275
    %p277 = scmp.ne.s32.totalorder %s266, %s267
    %p278 = scmp.eq.s32.totalorder %s22, 0
    %p279 = por %p277, %p278
    %p280 = scmp.ne.s32.totalorder %s266, %s267
    %p281 = scmp.eq.s32.totalorder %s23, 2
    %p282 = por %p280, %p281
    %p284 = scmp.ne.s32.totalorder %s267, %s283
    %p285 = scmp.eq.s32.totalorder %s23, 0
    %p286 = por %p284, %p285
    %p287 = scmp.le.s32.totalorder 1, %s17
    %p288 = scmp.lt.s32.totalorder %s17, 4
    %p289 = pnand %p287, %p288
    %p290 = pneg %p289
    // Predicated region
    $region9: #{channel_conv_forward.1} parent=5 // pred_check
      _
    $region10: #{channel_conv_forward.1} parent=5 // pred_check_branch
      %292 = sbr.rel (%p289) target = $region12
    $region11: #{channel_conv_forward.1} parent=5 // pred_region
      %s293 = ssub.s32 %s17, 1
      // Predicated region
      $region13: #{channel_conv_forward.1} parent=11 // pred_check
        %p294 = pneg %p64
      $region14: #{channel_conv_forward.1} parent=11 // pred_check_branch
        %296 = sbr.rel (%p294) target = $region16
      $region15: #{channel_conv_forward.1} parent=11 // pred_region
        _
      $region16: #{channel_conv_forward.1} parent=11 // pred_fallthru
        _
      // Predicated region
      $region17: #{channel_conv_forward.1} parent=11 // pred_check
        %p297 = pneg %p85
      $region18: #{channel_conv_forward.1} parent=11 // pred_check_branch
        %299 = sbr.rel (%p297) target = $region20
      $region19: #{channel_conv_forward.1} parent=11 // pred_region
        _
      $region20: #{channel_conv_forward.1} parent=11 // pred_fallthru
        _
      // Predicated region
      $region21: #{channel_conv_forward.1} parent=11 // pred_check
        %p300 = pneg %p106
      $region22: #{channel_conv_forward.1} parent=11 // pred_check_branch
        %302 = sbr.rel (%p300) target = $region24
      $region23: #{channel_conv_forward.1} parent=11 // pred_region
        _
      $region24: #{channel_conv_forward.1} parent=11 // pred_fallthru
        _
      // Predicated region
      $region25: #{channel_conv_forward.1} parent=11 // pred_check
        %p303 = pneg %p127
      $region26: #{channel_conv_forward.1} parent=11 // pred_check_branch
        %305 = sbr.rel (%p303) target = $region28
      $region27: #{channel_conv_forward.1} parent=11 // pred_region
        _
      $region28: #{channel_conv_forward.1} parent=11 // pred_fallthru
        _
      // Predicated region
      $region29: #{channel_conv_forward.1} parent=11 // pred_check
        %p306 = pneg %p148
      $region30: #{channel_conv_forward.1} parent=11 // pred_check_branch
        %308 = sbr.rel (%p306) target = $region32
      $region31: #{channel_conv_forward.1} parent=11 // pred_region
        _
      $region32: #{channel_conv_forward.1} parent=11 // pred_fallthru
        _
      // Predicated region
      $region33: #{channel_conv_forward.1} parent=11 // pred_check
        %p309 = pneg %p169
      $region34: #{channel_conv_forward.1} parent=11 // pred_check_branch
        %311 = sbr.rel (%p309) target = $region36
      $region35: #{channel_conv_forward.1} parent=11 // pred_region
        _
      $region36: #{channel_conv_forward.1} parent=11 // pred_fallthru
        _
      // Predicated region
      $region37: #{channel_conv_forward.1} parent=11 // pred_check
        %p312 = pneg %p190
      $region38: #{channel_conv_forward.1} parent=11 // pred_check_branch
        %314 = sbr.rel (%p312) target = $region40
      $region39: #{channel_conv_forward.1} parent=11 // pred_region
        _
      $region40: #{channel_conv_forward.1} parent=11 // pred_fallthru
        _
      // Predicated region
      $region41: #{channel_conv_forward.1} parent=11 // pred_check
        %p315 = pneg %p211
      $region42: #{channel_conv_forward.1} parent=11 // pred_check_branch
        %317 = sbr.rel (%p315) target = $region44
      $region43: #{channel_conv_forward.1} parent=11 // pred_region
        _
      $region44: #{channel_conv_forward.1} parent=11 // pred_fallthru
        _
      // Predicated region
      $region45: #{channel_conv_forward.1} parent=11 // pred_check
        %p318 = pneg %p232
      $region46: #{channel_conv_forward.1} parent=11 // pred_check_branch
        %320 = sbr.rel (%p318) target = $region48
      $region47: #{channel_conv_forward.1} parent=11 // pred_region
        _
      $region48: #{channel_conv_forward.1} parent=11 // pred_fallthru
        _
      // Predicated region
      $region49: #{channel_conv_forward.1} parent=11 // pred_check
        %p321 = pneg %p253
      $region50: #{channel_conv_forward.1} parent=11 // pred_check_branch
        %323 = sbr.rel (%p321) target = $region52
      $region51: #{channel_conv_forward.1} parent=11 // pred_region
        _
      $region52: #{channel_conv_forward.1} parent=11 // pred_fallthru
        _
    $region12: #{channel_conv_forward.1} parent=5 // pred_fallthru
      _
    %p324 = scmp.lt.s32.totalorder %s17, 3
    // Predicated region
    $region53: #{channel_conv_forward.1} parent=5 // pred_check
      %p325 = pneg %p324
    $region54: #{channel_conv_forward.1} parent=5 // pred_check_branch
      %327 = sbr.rel (%p325) target = $region56
    $region55: #{channel_conv_forward.1} parent=5 // pred_region
      // Predicated region
      $region57: #{channel_conv_forward.1} parent=55 // pred_check
        %p328 = pneg %p37
      $region58: #{channel_conv_forward.1} parent=55 // pred_check_branch
        %330 = sbr.rel (%p328) target = $region60
      $region59: #{channel_conv_forward.1} parent=55 // pred_region
        %p331 = scmp.lt.s32.totalorder %s17, 2
        %s332 = scalar_select %p331, %s17, 2
        %s333 = smul.addr %s332, 8
        %s334 = scalar_lea.vmem %s0, %s333
      $region60: #{channel_conv_forward.1} parent=55 // pred_fallthru
        _
    $region56: #{channel_conv_forward.1} parent=5 // pred_fallthru
      _
    %p335 = scmp.le.s32.totalorder 1, %s17
    %p336 = scmp.lt.s32.totalorder %s17, 4
    %p337 = pnand %p335, %p336
    %p338 = pneg %p337
    // Predicated region
    $region61: #{channel_conv_forward.1} parent=5 // pred_check
      _
    $region62: #{channel_conv_forward.1} parent=5 // pred_check_branch
      %340 = sbr.rel (%p337) target = $region64
    $region63: #{channel_conv_forward.1} parent=5 // pred_region
      %s341 = ssub.s32 %s17, 1
      %p342 = scmp.lt.s32.totalorder %s22, 2
      %s343 = scalar_select %p342, %s22, 2
      %s344 = smul.addr %s343, 8
      %s345 = scalar_lea.vmem %s0, %s344
      %p346 = pneg %p43
      %p347 = pneg %p40
      %p348 = pneg %p64
      %p349 = pneg %p61
      %p350 = pneg %p85
      %p351 = pneg %p82
      %p352 = pneg %p106
      %p353 = pneg %p103
      %p354 = pneg %p127
      %p355 = pneg %p124
      %p356 = pneg %p148
      %p357 = pneg %p145
      %p358 = pneg %p169
      %p359 = pneg %p166
      %p360 = pneg %p190
      %p361 = pneg %p187
      %p362 = pneg %p211
      %p363 = pneg %p208
      %p364 = pneg %p232
      %p365 = pneg %p229
      %p366 = pneg %p253
      %p367 = pneg %p250
      %p368 = pneg %p279
      %p369 = pneg %p276
      %p370 = scmp.lt.s32.totalorder %s22, 2
      %s371 = scalar_select %p370, %s22, 2
      %s372 = smul.addr %s371, 8
      %s373 = scalar_lea.vmem %s11, %s372
      %p374 = scmp.lt.s32.totalorder %s22, 2
      %s375 = scalar_select %p374, %s22, 2
      %s376 = smul.addr %s375, 8
      %s377 = scalar_lea.vmem %s0, %s376
      %p378 = scmp.lt.s32.totalorder %s22, 2
      %s379 = scalar_select %p378, %s22, 2
      %s380 = smul.addr %s379, 8
      %s381 = scalar_lea.vmem %s11, %s380
      %v382 = vld [vmem:[%s377] sm:$0xff]
      %v383 = vld [vmem:[%s1] sm:$0xff]
      %v384 = vld [vmem:[%s1 + $0x8] sm:$0xff]
      %v385 = vld [vmem:[%s1 + $0x10] sm:$0xff]
      %v386 = vld [vmem:[%s2] sm:$0xff]
      %388 = vrot.lane.b32.xlu0 %v382, 1
      %v389 = vpop.permute.xlu0 %388
      %vm391 = vcmask 7168
      %v392 = vsel %vm391, 0.0, %v389
      %393 = vrot.lane.b32.xlu0 %v382, 127
      %v394 = vpop.permute.xlu0 %393
      %vm396 = vcmask 1039360
      %v397 = vsel %vm396, %v394, 0.0
      %v399 = vcombine.high %v392, %v392
      %v401 = vunpack.c.l.s4 1966171168
      %v402 = vunpack.c.0.s8 %v401
      %v403 = vlaneseq
      %v404 = vshrl.u32 %v403, 7
      %v405 = vsub.s32 %v402, %v404
      %v406 = vrot.slane %v392, %v405
      %v408 = vunpack.c.l.s4 1966171168
      %v409 = vunpack.c.0.s8 %v408
      %v410 = vlaneseq
      %v411 = vshrl.u32 %v410, 7
      %v412 = vsub.s32 %v409, %v411
      %v413 = vrot.slane %v399, %v412
      %v414 = vcombine.high %v406, %v406
      %v415 = vcombine.high %v413, %v413
      %v417 = vunpack.c.l.s4 1966171168
      %v418 = vunpack.c.0.s8 %v417
      %v419 = vlaneseq
      %v420 = vshrl.u32 %v419, 7
      %v421 = vsub.s32 %v418, %v420
      %v422 = vrot.slane %v406, %v421
      %v424 = vunpack.c.l.s4 1966171168
      %v425 = vunpack.c.0.s8 %v424
      %v426 = vlaneseq
      %v427 = vshrl.u32 %v426, 7
      %v428 = vsub.s32 %v425, %v427
      %v429 = vrot.slane %v413, %v428
      %v431 = vunpack.c.l.s4 1966171168
      %v432 = vunpack.c.0.s8 %v431
      %v433 = vlaneseq
      %v434 = vshrl.u32 %v433, 7
      %v435 = vsub.s32 %v432, %v434
      %v436 = vrot.slane %v414, %v435
      %v438 = vunpack.c.l.s4 1966171168
      %v439 = vunpack.c.0.s8 %v438
      %v440 = vlaneseq
      %v441 = vshrl.u32 %v440, 7
      %v442 = vsub.s32 %v439, %v441
      %v443 = vrot.slane %v415, %v442
      %v444 = vcombine.high %v422, %v422
      %v445 = vcombine.high %v429, %v429
      %v446 = vcombine.high %v436, %v436
      %v447 = vcombine.high %v443, %v443
      %v448 = vlaneseq
      %v449 = vshrl.u32 %v448, 7
      %v450 = vsub.s32 0, %v449
      %v451 = vrot.slane %v422, %v450
      %v452 = vlaneseq
      %v453 = vshrl.u32 %v452, 7
      %v454 = vsub.s32 0, %v453
      %v455 = vrot.slane %v436, %v454
      %v456 = vlaneseq
      %v457 = vshrl.u32 %v456, 7
      %v458 = vsub.s32 0, %v457
      %v459 = vrot.slane %v444, %v458
      %v460 = vlaneseq
      %v461 = vshrl.u32 %v460, 7
      %v462 = vsub.s32 0, %v461
      %v463 = vrot.slane %v446, %v462
      %v464 = vlaneseq
      %v465 = vshrl.u32 %v464, 7
      %v466 = vsub.s32 0, %v465
      %v467 = vrot.slane %v429, %v466
      %v468 = vlaneseq
      %v469 = vshrl.u32 %v468, 7
      %v470 = vsub.s32 0, %v469
      %v471 = vrot.slane %v443, %v470
      %v472 = vlaneseq
      %v473 = vshrl.u32 %v472, 7
      %v474 = vsub.s32 0, %v473
      %v475 = vrot.slane %v445, %v474
      %v476 = vlaneseq
      %v477 = vshrl.u32 %v476, 7
      %v478 = vsub.s32 0, %v477
      %v479 = vrot.slane %v447, %v478
      %489 = vset.pattern.permute.xlu0 0
      %490 = vperm.xlu0 %489, %v383
      %v491 = vpop.permute.xlu0 %490
      %v493 = vmul.f32 %v451, %v491
      %v494 = vmul.f32 %v455, %v491
      %v495 = vmul.f32 %v459, %v491
      %v496 = vmul.f32 %v463, %v491
      %v497 = vmul.f32 %v467, %v491
      %v498 = vmul.f32 %v471, %v491
      %v499 = vmul.f32 %v475, %v491
      %v500 = vmul.f32 %v479, %v491
      %v501 = vcombine.high %v382, %v382
      %v503 = vunpack.c.l.s4 1966171168
      %v504 = vunpack.c.0.s8 %v503
      %v505 = vlaneseq
      %v506 = vshrl.u32 %v505, 7
      %v507 = vsub.s32 %v504, %v506
      %v508 = vrot.slane %v382, %v507
      %v510 = vunpack.c.l.s4 1966171168
      %v511 = vunpack.c.0.s8 %v510
      %v512 = vlaneseq
      %v513 = vshrl.u32 %v512, 7
      %v514 = vsub.s32 %v511, %v513
      %v515 = vrot.slane %v501, %v514
      %v516 = vcombine.high %v508, %v508
      %v517 = vcombine.high %v515, %v515
      %v519 = vunpack.c.l.s4 1966171168
      %v520 = vunpack.c.0.s8 %v519
      %v521 = vlaneseq
      %v522 = vshrl.u32 %v521, 7
      %v523 = vsub.s32 %v520, %v522
      %v524 = vrot.slane %v508, %v523
      %v526 = vunpack.c.l.s4 1966171168
      %v527 = vunpack.c.0.s8 %v526
      %v528 = vlaneseq
      %v529 = vshrl.u32 %v528, 7
      %v530 = vsub.s32 %v527, %v529
      %v531 = vrot.slane %v515, %v530
      %v533 = vunpack.c.l.s4 1966171168
      %v534 = vunpack.c.0.s8 %v533
      %v535 = vlaneseq
      %v536 = vshrl.u32 %v535, 7
      %v537 = vsub.s32 %v534, %v536
      %v538 = vrot.slane %v516, %v537
      %v540 = vunpack.c.l.s4 1966171168
      %v541 = vunpack.c.0.s8 %v540
      %v542 = vlaneseq
      %v543 = vshrl.u32 %v542, 7
      %v544 = vsub.s32 %v541, %v543
      %v545 = vrot.slane %v517, %v544
      %v546 = vcombine.high %v524, %v524
      %v547 = vcombine.high %v531, %v531
      %v548 = vcombine.high %v538, %v538
      %v549 = vcombine.high %v545, %v545
      %v550 = vlaneseq
      %v551 = vshrl.u32 %v550, 7
      %v552 = vsub.s32 0, %v551
      %v553 = vrot.slane %v524, %v552
      %v554 = vlaneseq
      %v555 = vshrl.u32 %v554, 7
      %v556 = vsub.s32 0, %v555
      %v557 = vrot.slane %v538, %v556
      %v558 = vlaneseq
      %v559 = vshrl.u32 %v558, 7
      %v560 = vsub.s32 0, %v559
      %v561 = vrot.slane %v546, %v560
      %v562 = vlaneseq
      %v563 = vshrl.u32 %v562, 7
      %v564 = vsub.s32 0, %v563
      %v565 = vrot.slane %v548, %v564
      %v566 = vlaneseq
      %v567 = vshrl.u32 %v566, 7
      %v568 = vsub.s32 0, %v567
      %v569 = vrot.slane %v531, %v568
      %v570 = vlaneseq
      %v571 = vshrl.u32 %v570, 7
      %v572 = vsub.s32 0, %v571
      %v573 = vrot.slane %v545, %v572
      %v574 = vlaneseq
      %v575 = vshrl.u32 %v574, 7
      %v576 = vsub.s32 0, %v575
      %v577 = vrot.slane %v547, %v576
      %v578 = vlaneseq
      %v579 = vshrl.u32 %v578, 7
      %v580 = vsub.s32 0, %v579
      %v581 = vrot.slane %v549, %v580
      %591 = vset.pattern.permute.xlu0 0
      %592 = vperm.xlu0 %591, %v384
      %v593 = vpop.permute.xlu0 %592
      %v595 = vmul.f32 %v553, %v593
      %v596 = vmul.f32 %v557, %v593
      %v597 = vmul.f32 %v561, %v593
      %v598 = vmul.f32 %v565, %v593
      %v599 = vmul.f32 %v569, %v593
      %v600 = vmul.f32 %v573, %v593
      %v601 = vmul.f32 %v577, %v593
      %v602 = vmul.f32 %v581, %v593
      %v603 = vadd.f32 %v493, %v595
      %v604 = vadd.f32 %v494, %v596
      %v605 = vadd.f32 %v495, %v597
      %v606 = vadd.f32 %v496, %v598
      %v607 = vadd.f32 %v497, %v599
      %v608 = vadd.f32 %v498, %v600
      %v609 = vadd.f32 %v499, %v601
      %v610 = vadd.f32 %v500, %v602
      %v612 = vcombine.high %v397, %v397
      %v614 = vunpack.c.l.s4 1966171168
      %v615 = vunpack.c.0.s8 %v614
      %v616 = vlaneseq
      %v617 = vshrl.u32 %v616, 7
      %v618 = vsub.s32 %v615, %v617
      %v619 = vrot.slane %v397, %v618
      %v621 = vunpack.c.l.s4 1966171168
      %v622 = vunpack.c.0.s8 %v621
      %v623 = vlaneseq
      %v624 = vshrl.u32 %v623, 7
      %v625 = vsub.s32 %v622, %v624
      %v626 = vrot.slane %v612, %v625
      %v627 = vcombine.high %v619, %v619
      %v628 = vcombine.high %v626, %v626
      %v630 = vunpack.c.l.s4 1966171168
      %v631 = vunpack.c.0.s8 %v630
      %v632 = vlaneseq
      %v633 = vshrl.u32 %v632, 7
      %v634 = vsub.s32 %v631, %v633
      %v635 = vrot.slane %v619, %v634
      %v637 = vunpack.c.l.s4 1966171168
      %v638 = vunpack.c.0.s8 %v637
      %v639 = vlaneseq
      %v640 = vshrl.u32 %v639, 7
      %v641 = vsub.s32 %v638, %v640
      %v642 = vrot.slane %v626, %v641
      %v644 = vunpack.c.l.s4 1966171168
      %v645 = vunpack.c.0.s8 %v644
      %v646 = vlaneseq
      %v647 = vshrl.u32 %v646, 7
      %v648 = vsub.s32 %v645, %v647
      %v649 = vrot.slane %v627, %v648
      %v651 = vunpack.c.l.s4 1966171168
      %v652 = vunpack.c.0.s8 %v651
      %v653 = vlaneseq
      %v654 = vshrl.u32 %v653, 7
      %v655 = vsub.s32 %v652, %v654
      %v656 = vrot.slane %v628, %v655
      %v657 = vcombine.high %v635, %v635
      %v658 = vcombine.high %v642, %v642
      %v659 = vcombine.high %v649, %v649
      %v660 = vcombine.high %v656, %v656
      %v661 = vlaneseq
      %v662 = vshrl.u32 %v661, 7
      %v663 = vsub.s32 0, %v662
      %v664 = vrot.slane %v635, %v663
      %v665 = vlaneseq
      %v666 = vshrl.u32 %v665, 7
      %v667 = vsub.s32 0, %v666
      %v668 = vrot.slane %v649, %v667
      %v669 = vlaneseq
      %v670 = vshrl.u32 %v669, 7
      %v671 = vsub.s32 0, %v670
      %v672 = vrot.slane %v657, %v671
      %v673 = vlaneseq
      %v674 = vshrl.u32 %v673, 7
      %v675 = vsub.s32 0, %v674
      %v676 = vrot.slane %v659, %v675
      %v677 = vlaneseq
      %v678 = vshrl.u32 %v677, 7
      %v679 = vsub.s32 0, %v678
      %v680 = vrot.slane %v642, %v679
      %v681 = vlaneseq
      %v682 = vshrl.u32 %v681, 7
      %v683 = vsub.s32 0, %v682
      %v684 = vrot.slane %v656, %v683
      %v685 = vlaneseq
      %v686 = vshrl.u32 %v685, 7
      %v687 = vsub.s32 0, %v686
      %v688 = vrot.slane %v658, %v687
      %v689 = vlaneseq
      %v690 = vshrl.u32 %v689, 7
      %v691 = vsub.s32 0, %v690
      %v692 = vrot.slane %v660, %v691
      %702 = vset.pattern.permute.xlu0 0
      %703 = vperm.xlu0 %702, %v385
      %v704 = vpop.permute.xlu0 %703
      %v706 = vmul.f32 %v664, %v704
      %v707 = vmul.f32 %v668, %v704
      %v708 = vmul.f32 %v672, %v704
      %v709 = vmul.f32 %v676, %v704
      %v710 = vmul.f32 %v680, %v704
      %v711 = vmul.f32 %v684, %v704
      %v712 = vmul.f32 %v688, %v704
      %v713 = vmul.f32 %v692, %v704
      %v714 = vadd.f32 %v603, %v706
      %v715 = vadd.f32 %v604, %v707
      %v716 = vadd.f32 %v605, %v708
      %v717 = vadd.f32 %v606, %v709
      %v718 = vadd.f32 %v607, %v710
      %v719 = vadd.f32 %v608, %v711
      %v720 = vadd.f32 %v609, %v712
      %v721 = vadd.f32 %v610, %v713
      %723 = vset.pattern.permute.xlu0 0
      %724 = vperm.xlu0 %723, %v386
      %v725 = vpop.permute.xlu0 %724
      %v727 = vadd.f32 %v714, %v725
      %v728 = vadd.f32 %v715, %v725
      %v729 = vadd.f32 %v716, %v725
      %v730 = vadd.f32 %v717, %v725
      %v731 = vadd.f32 %v718, %v725
      %v732 = vadd.f32 %v719, %v725
      %v733 = vadd.f32 %v720, %v725
      %v734 = vadd.f32 %v721, %v725
      %v735 = vmax.f32 %v727, 0.0
      %v736 = vmax.f32 %v728, 0.0
      %v737 = vmax.f32 %v729, 0.0
      %v738 = vmax.f32 %v730, 0.0
      %v739 = vmax.f32 %v731, 0.0
      %v740 = vmax.f32 %v732, 0.0
      %v741 = vmax.f32 %v733, 0.0
      %v742 = vmax.f32 %v734, 0.0
      %743 = vxpose.xlu0.b32.start [1/16] %v735, 128
      %744 = vxpose.xlu0.b32.cont [2/16] 0.0, 128
      %745 = vxpose.xlu0.b32.cont [3/16] 0.0, 128
      %746 = vxpose.xlu0.b32.cont [4/16] 0.0, 128
      %747 = vxpose.xlu0.b32.cont [5/16] 0.0, 128
      %748 = vxpose.xlu0.b32.cont [6/16] 0.0, 128
      %749 = vxpose.xlu0.b32.cont [7/16] 0.0, 128
      %750 = vxpose.xlu0.b32.cont [8/16] 0.0, 128
      %751 = vxpose.xlu0.b32.cont [9/16] 0.0, 128
      %752 = vxpose.xlu0.b32.cont [10/16] 0.0, 128
      %753 = vxpose.xlu0.b32.cont [11/16] 0.0, 128
      %754 = vxpose.xlu0.b32.cont [12/16] 0.0, 128
      %755 = vxpose.xlu0.b32.cont [13/16] 0.0, 128
      %756 = vxpose.xlu0.b32.cont [14/16] 0.0, 128
      %757 = vxpose.xlu0.b32.cont [15/16] 0.0, 128
      %758 = vxpose.xlu0.b32.end [16/16] 0.0, 128
      %v759 = vpop.trf.xlu0
      %v760 = vpop.trf.xlu0
      %v761 = vpop.trf.xlu0
      %v762 = vpop.trf.xlu0
      %v763 = vpop.trf.xlu0
      %v764 = vpop.trf.xlu0
      %v765 = vpop.trf.xlu0
      %v766 = vpop.trf.xlu0
      %v767 = vpop.trf.xlu0
      %v768 = vpop.trf.xlu0
      %v769 = vpop.trf.xlu0
      %v770 = vpop.trf.xlu0
      %v771 = vpop.trf.xlu0
      %v772 = vpop.trf.xlu0
      %v773 = vpop.trf.xlu0
      %v774 = vpop.trf.xlu0
      %775 = vxpose.xlu0.b32.start [1/16] %v736, 128
      %776 = vxpose.xlu0.b32.cont [2/16] 0.0, 128
      %777 = vxpose.xlu0.b32.cont [3/16] 0.0, 128
      %778 = vxpose.xlu0.b32.cont [4/16] 0.0, 128
      %779 = vxpose.xlu0.b32.cont [5/16] 0.0, 128
      %780 = vxpose.xlu0.b32.cont [6/16] 0.0, 128
      %781 = vxpose.xlu0.b32.cont [7/16] 0.0, 128
      %782 = vxpose.xlu0.b32.cont [8/16] 0.0, 128
      %783 = vxpose.xlu0.b32.cont [9/16] 0.0, 128
      %784 = vxpose.xlu0.b32.cont [10/16] 0.0, 128
      %785 = vxpose.xlu0.b32.cont [11/16] 0.0, 128
      %786 = vxpose.xlu0.b32.cont [12/16] 0.0, 128
      %787 = vxpose.xlu0.b32.cont [13/16] 0.0, 128
      %788 = vxpose.xlu0.b32.cont [14/16] 0.0, 128
      %789 = vxpose.xlu0.b32.cont [15/16] 0.0, 128
      %790 = vxpose.xlu0.b32.end [16/16] 0.0, 128
      %v791 = vpop.trf.xlu0
      %v792 = vpop.trf.xlu0
      %v793 = vpop.trf.xlu0
      %v794 = vpop.trf.xlu0
      %v795 = vpop.trf.xlu0
      %v796 = vpop.trf.xlu0
      %v797 = vpop.trf.xlu0
      %v798 = vpop.trf.xlu0
      %v799 = vpop.trf.xlu0
      %v800 = vpop.trf.xlu0
      %v801 = vpop.trf.xlu0
      %v802 = vpop.trf.xlu0
      %v803 = vpop.trf.xlu0
      %v804 = vpop.trf.xlu0
      %v805 = vpop.trf.xlu0
      %v806 = vpop.trf.xlu0
      %807 = vxpose.xlu0.b32.start [1/16] %v737, 128
      %808 = vxpose.xlu0.b32.cont [2/16] 0.0, 128
      %809 = vxpose.xlu0.b32.cont [3/16] 0.0, 128
      %810 = vxpose.xlu0.b32.cont [4/16] 0.0, 128
      %811 = vxpose.xlu0.b32.cont [5/16] 0.0, 128
      %812 = vxpose.xlu0.b32.cont [6/16] 0.0, 128
      %813 = vxpose.xlu0.b32.cont [7/16] 0.0, 128
      %814 = vxpose.xlu0.b32.cont [8/16] 0.0, 128
      %815 = vxpose.xlu0.b32.cont [9/16] 0.0, 128
      %816 = vxpose.xlu0.b32.cont [10/16] 0.0, 128
      %817 = vxpose.xlu0.b32.cont [11/16] 0.0, 128
      %818 = vxpose.xlu0.b32.cont [12/16] 0.0, 128
      %819 = vxpose.xlu0.b32.cont [13/16] 0.0, 128
      %820 = vxpose.xlu0.b32.cont [14/16] 0.0, 128
      %821 = vxpose.xlu0.b32.cont [15/16] 0.0, 128
      %822 = vxpose.xlu0.b32.end [16/16] 0.0, 128
      %v823 = vpop.trf.xlu0
      %v824 = vpop.trf.xlu0
      %v825 = vpop.trf.xlu0
      %v826 = vpop.trf.xlu0
      %v827 = vpop.trf.xlu0
      %v828 = vpop.trf.xlu0
      %v829 = vpop.trf.xlu0
      %v830 = vpop.trf.xlu0
      %v831 = vpop.trf.xlu0
      %v832 = vpop.trf.xlu0
      %v833 = vpop.trf.xlu0
      %v834 = vpop.trf.xlu0
      %v835 = vpop.trf.xlu0
      %v836 = vpop.trf.xlu0
      %v837 = vpop.trf.xlu0
      %v838 = vpop.trf.xlu0
      %839 = vxpose.xlu0.b32.start [1/16] %v738, 128
      %840 = vxpose.xlu0.b32.cont [2/16] 0.0, 128
      %841 = vxpose.xlu0.b32.cont [3/16] 0.0, 128
      %842 = vxpose.xlu0.b32.cont [4/16] 0.0, 128
      %843 = vxpose.xlu0.b32.cont [5/16] 0.0, 128
      %844 = vxpose.xlu0.b32.cont [6/16] 0.0, 128
      %845 = vxpose.xlu0.b32.cont [7/16] 0.0, 128
      %846 = vxpose.xlu0.b32.cont [8/16] 0.0, 128
      %847 = vxpose.xlu0.b32.cont [9/16] 0.0, 128
      %848 = vxpose.xlu0.b32.cont [10/16] 0.0, 128
      %849 = vxpose.xlu0.b32.cont [11/16] 0.0, 128
      %850 = vxpose.xlu0.b32.cont [12/16] 0.0, 128
      %851 = vxpose.xlu0.b32.cont [13/16] 0.0, 128
      %852 = vxpose.xlu0.b32.cont [14/16] 0.0, 128
      %853 = vxpose.xlu0.b32.cont [15/16] 0.0, 128
      %854 = vxpose.xlu0.b32.end [16/16] 0.0, 128
      %v855 = vpop.trf.xlu0
      %v856 = vpop.trf.xlu0
      %v857 = vpop.trf.xlu0
      %v858 = vpop.trf.xlu0
      %v859 = vpop.trf.xlu0
      %v860 = vpop.trf.xlu0
      %v861 = vpop.trf.xlu0
      %v862 = vpop.trf.xlu0
      %v863 = vpop.trf.xlu0
      %v864 = vpop.trf.xlu0
      %v865 = vpop.trf.xlu0
      %v866 = vpop.trf.xlu0
      %v867 = vpop.trf.xlu0
      %v868 = vpop.trf.xlu0
      %v869 = vpop.trf.xlu0
      %v870 = vpop.trf.xlu0
      %871 = vxpose.xlu0.b32.start [1/16] %v739, 128
      %872 = vxpose.xlu0.b32.cont [2/16] 0.0, 128
      %873 = vxpose.xlu0.b32.cont [3/16] 0.0, 128
      %874 = vxpose.xlu0.b32.cont [4/16] 0.0, 128
      %875 = vxpose.xlu0.b32.cont [5/16] 0.0, 128
      %876 = vxpose.xlu0.b32.cont [6/16] 0.0, 128
      %877 = vxpose.xlu0.b32.cont [7/16] 0.0, 128
      %878 = vxpose.xlu0.b32.cont [8/16] 0.0, 128
      %879 = vxpose.xlu0.b32.cont [9/16] 0.0, 128
      %880 = vxpose.xlu0.b32.cont [10/16] 0.0, 128
      %881 = vxpose.xlu0.b32.cont [11/16] 0.0, 128
      %882 = vxpose.xlu0.b32.cont [12/16] 0.0, 128
      %883 = vxpose.xlu0.b32.cont [13/16] 0.0, 128
      %884 = vxpose.xlu0.b32.cont [14/16] 0.0, 128
      %885 = vxpose.xlu0.b32.cont [15/16] 0.0, 128
      %886 = vxpose.xlu0.b32.end [16/16] 0.0, 128
      %v887 = vpop.trf.xlu0
      %v888 = vpop.trf.xlu0
      %v889 = vpop.trf.xlu0
      %v890 = vpop.trf.xlu0
      %v891 = vpop.trf.xlu0
      %v892 = vpop.trf.xlu0
      %v893 = vpop.trf.xlu0
      %v894 = vpop.trf.xlu0
      %v895 = vpop.trf.xlu0
      %v896 = vpop.trf.xlu0
      %v897 = vpop.trf.xlu0
      %v898 = vpop.trf.xlu0
      %v899 = vpop.trf.xlu0
      %v900 = vpop.trf.xlu0
      %v901 = vpop.trf.xlu0
      %v902 = vpop.trf.xlu0
      %903 = vxpose.xlu0.b32.start [1/16] %v740, 128
      %904 = vxpose.xlu0.b32.cont [2/16] 0.0, 128
      %905 = vxpose.xlu0.b32.cont [3/16] 0.0, 128
      %906 = vxpose.xlu0.b32.cont [4/16] 0.0, 128
      %907 = vxpose.xlu0.b32.cont [5/16] 0.0, 128
      %908 = vxpose.xlu0.b32.cont [6/16] 0.0, 128
      %909 = vxpose.xlu0.b32.cont [7/16] 0.0, 128
      %910 = vxpose.xlu0.b32.cont [8/16] 0.0, 128
      %911 = vxpose.xlu0.b32.cont [9/16] 0.0, 128
      %912 = vxpose.xlu0.b32.cont [10/16] 0.0, 128
      %913 = vxpose.xlu0.b32.cont [11/16] 0.0, 128
      %914 = vxpose.xlu0.b32.cont [12/16] 0.0, 128
      %915 = vxpose.xlu0.b32.cont [13/16] 0.0, 128
      %916 = vxpose.xlu0.b32.cont [14/16] 0.0, 128
      %917 = vxpose.xlu0.b32.cont [15/16] 0.0, 128
      %918 = vxpose.xlu0.b32.end [16/16] 0.0, 128
      %v919 = vpop.trf.xlu0
      %v920 = vpop.trf.xlu0
      %v921 = vpop.trf.xlu0
      %v922 = vpop.trf.xlu0
      %v923 = vpop.trf.xlu0
      %v924 = vpop.trf.xlu0
      %v925 = vpop.trf.xlu0
      %v926 = vpop.trf.xlu0
      %v927 = vpop.trf.xlu0
      %v928 = vpop.trf.xlu0
      %v929 = vpop.trf.xlu0
      %v930 = vpop.trf.xlu0
      %v931 = vpop.trf.xlu0
      %v932 = vpop.trf.xlu0
      %v933 = vpop.trf.xlu0
      %v934 = vpop.trf.xlu0
      %935 = vxpose.xlu0.b32.start [1/16] %v741, 128
      %936 = vxpose.xlu0.b32.cont [2/16] 0.0, 128
      %937 = vxpose.xlu0.b32.cont [3/16] 0.0, 128
      %938 = vxpose.xlu0.b32.cont [4/16] 0.0, 128
      %939 = vxpose.xlu0.b32.cont [5/16] 0.0, 128
      %940 = vxpose.xlu0.b32.cont [6/16] 0.0, 128
      %941 = vxpose.xlu0.b32.cont [7/16] 0.0, 128
      %942 = vxpose.xlu0.b32.cont [8/16] 0.0, 128
      %943 = vxpose.xlu0.b32.cont [9/16] 0.0, 128
      %944 = vxpose.xlu0.b32.cont [10/16] 0.0, 128
      %945 = vxpose.xlu0.b32.cont [11/16] 0.0, 128
      %946 = vxpose.xlu0.b32.cont [12/16] 0.0, 128
      %947 = vxpose.xlu0.b32.cont [13/16] 0.0, 128
      %948 = vxpose.xlu0.b32.cont [14/16] 0.0, 128
      %949 = vxpose.xlu0.b32.cont [15/16] 0.0, 128
      %950 = vxpose.xlu0.b32.end [16/16] 0.0, 128
      %v951 = vpop.trf.xlu0
      %v952 = vpop.trf.xlu0
      %v953 = vpop.trf.xlu0
      %v954 = vpop.trf.xlu0
      %v955 = vpop.trf.xlu0
      %v956 = vpop.trf.xlu0
      %v957 = vpop.trf.xlu0
      %v958 = vpop.trf.xlu0
      %v959 = vpop.trf.xlu0
      %v960 = vpop.trf.xlu0
      %v961 = vpop.trf.xlu0
      %v962 = vpop.trf.xlu0
      %v963 = vpop.trf.xlu0
      %v964 = vpop.trf.xlu0
      %v965 = vpop.trf.xlu0
      %v966 = vpop.trf.xlu0
      %967 = vxpose.xlu0.b32.start [1/16] %v742, 128
      %968 = vxpose.xlu0.b32.cont [2/16] 0.0, 128
      %969 = vxpose.xlu0.b32.cont [3/16] 0.0, 128
      %970 = vxpose.xlu0.b32.cont [4/16] 0.0, 128
      %971 = vxpose.xlu0.b32.cont [5/16] 0.0, 128
      %972 = vxpose.xlu0.b32.cont [6/16] 0.0, 128
      %973 = vxpose.xlu0.b32.cont [7/16] 0.0, 128
      %974 = vxpose.xlu0.b32.cont [8/16] 0.0, 128
      %975 = vxpose.xlu0.b32.cont [9/16] 0.0, 128
      %976 = vxpose.xlu0.b32.cont [10/16] 0.0, 128
      %977 = vxpose.xlu0.b32.cont [11/16] 0.0, 128
      %978 = vxpose.xlu0.b32.cont [12/16] 0.0, 128
      %979 = vxpose.xlu0.b32.cont [13/16] 0.0, 128
      %980 = vxpose.xlu0.b32.cont [14/16] 0.0, 128
      %981 = vxpose.xlu0.b32.cont [15/16] 0.0, 128
      %982 = vxpose.xlu0.b32.end [16/16] 0.0, 128
      %v983 = vpop.trf.xlu0
      %v984 = vpop.trf.xlu0
      %v985 = vpop.trf.xlu0
      %v986 = vpop.trf.xlu0
      %v987 = vpop.trf.xlu0
      %v988 = vpop.trf.xlu0
      %v989 = vpop.trf.xlu0
      %v990 = vpop.trf.xlu0
      %v991 = vpop.trf.xlu0
      %v992 = vpop.trf.xlu0
      %v993 = vpop.trf.xlu0
      %v994 = vpop.trf.xlu0
      %v995 = vpop.trf.xlu0
      %v996 = vpop.trf.xlu0
      %v997 = vpop.trf.xlu0
      %v998 = vpop.trf.xlu0
      %vm999 = vcmask 64512
      %1000 = vst.msk [vmem:[#allocation2] sm:$0xff] %vm999, %v759
      %1001 = vst.msk [vmem:[#allocation2 + $0x8] sm:$0xff] %vm999, %v760
      %1002 = vst.msk [vmem:[#allocation2 + $0x10] sm:$0xff] %vm999, %v761
      %1003 = vst.msk [vmem:[#allocation2 + $0x18] sm:$0xff] %vm999, %v762
      %1004 = vst.msk [vmem:[#allocation2 + $0x20] sm:$0xff] %vm999, %v763
      %1005 = vst.msk [vmem:[#allocation2 + $0x28] sm:$0xff] %vm999, %v764
      %1006 = vst.msk [vmem:[#allocation2 + $0x30] sm:$0xff] %vm999, %v765
      %1007 = vst.msk [vmem:[#allocation2 + $0x38] sm:$0xff] %vm999, %v766
      %1008 = vst.msk [vmem:[#allocation2 + $0x40] sm:$0xff] %vm999, %v767
      %1009 = vst.msk [vmem:[#allocation2 + $0x48] sm:$0xff] %vm999, %v768
      %1010 = vst.msk [vmem:[#allocation2 + $0x50] sm:$0xff] %vm999, %v769
      %1011 = vst.msk [vmem:[#allocation2 + $0x58] sm:$0xff] %vm999, %v770
      %1012 = vst.msk [vmem:[#allocation2 + $0x60] sm:$0xff] %vm999, %v771
      %1013 = vst.msk [vmem:[#allocation2 + $0x68] sm:$0xff] %vm999, %v772
      %1014 = vst.msk [vmem:[#allocation2 + $0x70] sm:$0xff] %vm999, %v773
      %1015 = vst.msk [vmem:[#allocation2 + $0x78] sm:$0xff] %vm999, %v774
      %1016 = vst.msk [vmem:[#allocation2 + $0x80] sm:$0xff] %vm999, %v791
      %1017 = vst.msk [vmem:[#allocation2 + $0x88] sm:$0xff] %vm999, %v792
      %1018 = vst.msk [vmem:[#allocation2 + $0x90] sm:$0xff] %vm999, %v793
      %1019 = vst.msk [vmem:[#allocation2 + $0x98] sm:$0xff] %vm999, %v794
      %1020 = vst.msk [vmem:[#allocation2 + $0xa0] sm:$0xff] %vm999, %v795
      %1021 = vst.msk [vmem:[#allocation2 + $0xa8] sm:$0xff] %vm999, %v796
      %1022 = vst.msk [vmem:[#allocation2 + $0xb0] sm:$0xff] %vm999, %v797
      %1023 = vst.msk [vmem:[#allocation2 + $0xb8] sm:$0xff] %vm999, %v798
      %1024 = vst.msk [vmem:[#allocation2 + $0xc0] sm:$0xff] %vm999, %v799
      %1025 = vst.msk [vmem:[#allocation2 + $0xc8] sm:$0xff] %vm999, %v800
      %1026 = vst.msk [vmem:[#allocation2 + $0xd0] sm:$0xff] %vm999, %v801
      %1027 = vst.msk [vmem:[#allocation2 + $0xd8] sm:$0xff] %vm999, %v802
      %1028 = vst.msk [vmem:[#allocation2 + $0xe0] sm:$0xff] %vm999, %v803
      %1029 = vst.msk [vmem:[#allocation2 + $0xe8] sm:$0xff] %vm999, %v804
      %1030 = vst.msk [vmem:[#allocation2 + $0xf0] sm:$0xff] %vm999, %v805
      %1031 = vst.msk [vmem:[#allocation2 + $0xf8] sm:$0xff] %vm999, %v806
      %1032 = vst.msk [vmem:[#allocation2 + $0x100] sm:$0xff] %vm999, %v823
      %1033 = vst.msk [vmem:[#allocation2 + $0x108] sm:$0xff] %vm999, %v824
      %1034 = vst.msk [vmem:[#allocation2 + $0x110] sm:$0xff] %vm999, %v825
      %1035 = vst.msk [vmem:[#allocation2 + $0x118] sm:$0xff] %vm999, %v826
      %1036 = vst.msk [vmem:[#allocation2 + $0x120] sm:$0xff] %vm999, %v827
      %1037 = vst.msk [vmem:[#allocation2 + $0x128] sm:$0xff] %vm999, %v828
      %1038 = vst.msk [vmem:[#allocation2 + $0x130] sm:$0xff] %vm999, %v829
      %1039 = vst.msk [vmem:[#allocation2 + $0x138] sm:$0xff] %vm999, %v830
      %1040 = vst.msk [vmem:[#allocation2 + $0x140] sm:$0xff] %vm999, %v831
      %1041 = vst.msk [vmem:[#allocation2 + $0x148] sm:$0xff] %vm999, %v832
      %1042 = vst.msk [vmem:[#allocation2 + $0x150] sm:$0xff] %vm999, %v833
      %1043 = vst.msk [vmem:[#allocation2 + $0x158] sm:$0xff] %vm999, %v834
      %1044 = vst.msk [vmem:[#allocation2 + $0x160] sm:$0xff] %vm999, %v835
      %1045 = vst.msk [vmem:[#allocation2 + $0x168] sm:$0xff] %vm999, %v836
      %1046 = vst.msk [vmem:[#allocation2 + $0x170] sm:$0xff] %vm999, %v837
      %1047 = vst.msk [vmem:[#allocation2 + $0x178] sm:$0xff] %vm999, %v838
      %1048 = vst.msk [vmem:[#allocation2 + $0x180] sm:$0xff] %vm999, %v855
      %1049 = vst.msk [vmem:[#allocation2 + $0x188] sm:$0xff] %vm999, %v856
      %1050 = vst.msk [vmem:[#allocation2 + $0x190] sm:$0xff] %vm999, %v857
      %1051 = vst.msk [vmem:[#allocation2 + $0x198] sm:$0xff] %vm999, %v858
      %1052 = vst.msk [vmem:[#allocation2 + $0x1a0] sm:$0xff] %vm999, %v859
      %1053 = vst.msk [vmem:[#allocation2 + $0x1a8] sm:$0xff] %vm999, %v860
      %1054 = vst.msk [vmem:[#allocation2 + $0x1b0] sm:$0xff] %vm999, %v861
      %1055 = vst.msk [vmem:[#allocation2 + $0x1b8] sm:$0xff] %vm999, %v862
      %1056 = vst.msk [vmem:[#allocation2 + $0x1c0] sm:$0xff] %vm999, %v863
      %1057 = vst.msk [vmem:[#allocation2 + $0x1c8] sm:$0xff] %vm999, %v864
      %1058 = vst.msk [vmem:[#allocation2 + $0x1d0] sm:$0xff] %vm999, %v865
      %1059 = vst.msk [vmem:[#allocation2 + $0x1d8] sm:$0xff] %vm999, %v866
      %1060 = vst.msk [vmem:[#allocation2 + $0x1e0] sm:$0xff] %vm999, %v867
      %1061 = vst.msk [vmem:[#allocation2 + $0x1e8] sm:$0xff] %vm999, %v868
      %1062 = vst.msk [vmem:[#allocation2 + $0x1f0] sm:$0xff] %vm999, %v869
      %1063 = vst.msk [vmem:[#allocation2 + $0x1f8] sm:$0xff] %vm999, %v870
      %1064 = vst.msk [vmem:[#allocation2 + $0x200] sm:$0xff] %vm999, %v887
      %1065 = vst.msk [vmem:[#allocation2 + $0x208] sm:$0xff] %vm999, %v888
      %1066 = vst.msk [vmem:[#allocation2 + $0x210] sm:$0xff] %vm999, %v889
      %1067 = vst.msk [vmem:[#allocation2 + $0x218] sm:$0xff] %vm999, %v890
      %1068 = vst.msk [vmem:[#allocation2 + $0x220] sm:$0xff] %vm999, %v891
      %1069 = vst.msk [vmem:[#allocation2 + $0x228] sm:$0xff] %vm999, %v892
      %1070 = vst.msk [vmem:[#allocation2 + $0x230] sm:$0xff] %vm999, %v893
      %1071 = vst.msk [vmem:[#allocation2 + $0x238] sm:$0xff] %vm999, %v894
      %1072 = vst.msk [vmem:[#allocation2 + $0x240] sm:$0xff] %vm999, %v895
      %1073 = vst.msk [vmem:[#allocation2 + $0x248] sm:$0xff] %vm999, %v896
      %1074 = vst.msk [vmem:[#allocation2 + $0x250] sm:$0xff] %vm999, %v897
      %1075 = vst.msk [vmem:[#allocation2 + $0x258] sm:$0xff] %vm999, %v898
      %1076 = vst.msk [vmem:[#allocation2 + $0x260] sm:$0xff] %vm999, %v899
      %1077 = vst.msk [vmem:[#allocation2 + $0x268] sm:$0xff] %vm999, %v900
      %1078 = vst.msk [vmem:[#allocation2 + $0x270] sm:$0xff] %vm999, %v901
      %1079 = vst.msk [vmem:[#allocation2 + $0x278] sm:$0xff] %vm999, %v902
      %1080 = vst.msk [vmem:[#allocation2 + $0x280] sm:$0xff] %vm999, %v919
      %1081 = vst.msk [vmem:[#allocation2 + $0x288] sm:$0xff] %vm999, %v920
      %1082 = vst.msk [vmem:[#allocation2 + $0x290] sm:$0xff] %vm999, %v921
      %1083 = vst.msk [vmem:[#allocation2 + $0x298] sm:$0xff] %vm999, %v922
      %1084 = vst.msk [vmem:[#allocation2 + $0x2a0] sm:$0xff] %vm999, %v923
      %1085 = vst.msk [vmem:[#allocation2 + $0x2a8] sm:$0xff] %vm999, %v924
      %1086 = vst.msk [vmem:[#allocation2 + $0x2b0] sm:$0xff] %vm999, %v925
      %1087 = vst.msk [vmem:[#allocation2 + $0x2b8] sm:$0xff] %vm999, %v926
      %1088 = vst.msk [vmem:[#allocation2 + $0x2c0] sm:$0xff] %vm999, %v927
      %1089 = vst.msk [vmem:[#allocation2 + $0x2c8] sm:$0xff] %vm999, %v928
      %1090 = vst.msk [vmem:[#allocation2 + $0x2d0] sm:$0xff] %vm999, %v929
      %1091 = vst.msk [vmem:[#allocation2 + $0x2d8] sm:$0xff] %vm999, %v930
      %1092 = vst.msk [vmem:[#allocation2 + $0x2e0] sm:$0xff] %vm999, %v931
      %1093 = vst.msk [vmem:[#allocation2 + $0x2e8] sm:$0xff] %vm999, %v932
      %1094 = vst.msk [vmem:[#allocation2 + $0x2f0] sm:$0xff] %vm999, %v933
      %1095 = vst.msk [vmem:[#allocation2 + $0x2f8] sm:$0xff] %vm999, %v934
      %1096 = vst.msk [vmem:[#allocation2 + $0x300] sm:$0xff] %vm999, %v951
      %1097 = vst.msk [vmem:[#allocation2 + $0x308] sm:$0xff] %vm999, %v952
      %1098 = vst.msk [vmem:[#allocation2 + $0x310] sm:$0xff] %vm999, %v953
      %1099 = vst.msk [vmem:[#allocation2 + $0x318] sm:$0xff] %vm999, %v954
      %1100 = vst.msk [vmem:[#allocation2 + $0x320] sm:$0xff] %vm999, %v955
      %1101 = vst.msk [vmem:[#allocation2 + $0x328] sm:$0xff] %vm999, %v956
      %1102 = vst.msk [vmem:[#allocation2 + $0x330] sm:$0xff] %vm999, %v957
      %1103 = vst.msk [vmem:[#allocation2 + $0x338] sm:$0xff] %vm999, %v958
      %1104 = vst.msk [vmem:[#allocation2 + $0x340] sm:$0xff] %vm999, %v959
      %1105 = vst.msk [vmem:[#allocation2 + $0x348] sm:$0xff] %vm999, %v960
      %1106 = vst.msk [vmem:[#allocation2 + $0x350] sm:$0xff] %vm999, %v961
      %1107 = vst.msk [vmem:[#allocation2 + $0x358] sm:$0xff] %vm999, %v962
      %1108 = vst.msk [vmem:[#allocation2 + $0x360] sm:$0xff] %vm999, %v963
      %1109 = vst.msk [vmem:[#allocation2 + $0x368] sm:$0xff] %vm999, %v964
      %1110 = vst.msk [vmem:[#allocation2 + $0x370] sm:$0xff] %vm999, %v965
      %1111 = vst.msk [vmem:[#allocation2 + $0x378] sm:$0xff] %vm999, %v966
      %1112 = vst.msk [vmem:[#allocation2 + $0x380] sm:$0xff] %vm999, %v983
      %1113 = vst.msk [vmem:[#allocation2 + $0x388] sm:$0xff] %vm999, %v984
      %1114 = vst.msk [vmem:[#allocation2 + $0x390] sm:$0xff] %vm999, %v985
      %1115 = vst.msk [vmem:[#allocation2 + $0x398] sm:$0xff] %vm999, %v986
      %1116 = vst.msk [vmem:[#allocation2 + $0x3a0] sm:$0xff] %vm999, %v987
      %1117 = vst.msk [vmem:[#allocation2 + $0x3a8] sm:$0xff] %vm999, %v988
      %1118 = vst.msk [vmem:[#allocation2 + $0x3b0] sm:$0xff] %vm999, %v989
      %1119 = vst.msk [vmem:[#allocation2 + $0x3b8] sm:$0xff] %vm999, %v990
      %1120 = vst.msk [vmem:[#allocation2 + $0x3c0] sm:$0xff] %vm999, %v991
      %1121 = vst.msk [vmem:[#allocation2 + $0x3c8] sm:$0xff] %vm999, %v992
      %1122 = vst.msk [vmem:[#allocation2 + $0x3d0] sm:$0xff] %vm999, %v993
      %1123 = vst.msk [vmem:[#allocation2 + $0x3d8] sm:$0xff] %vm999, %v994
      %1124 = vst.msk [vmem:[#allocation2 + $0x3e0] sm:$0xff] %vm999, %v995
      %1125 = vst.msk [vmem:[#allocation2 + $0x3e8] sm:$0xff] %vm999, %v996
      %1126 = vst.msk [vmem:[#allocation2 + $0x3f0] sm:$0xff] %vm999, %v997
      %1127 = vst.msk [vmem:[#allocation2 + $0x3f8] sm:$0xff] %vm999, %v998
      %v1128 = vld [vmem:[#allocation2] ss:$2 sm:$0xff]
      %s1129 = scalar_lea.vmem [#allocation2], 16
      %v1130 = vld [vmem:[%s1129] ss:$2 sm:$0xff]
      %s1131 = scalar_lea.vmem [#allocation2], 32
      %v1132 = vld [vmem:[%s1131] ss:$2 sm:$0xff]
      %s1133 = scalar_lea.vmem [#allocation2], 48
      %v1134 = vld [vmem:[%s1133] ss:$2 sm:$0xff]
      %s1135 = scalar_lea.vmem [#allocation2], 64
      %v1136 = vld [vmem:[%s1135] ss:$2 sm:$0xff]
      %s1137 = scalar_lea.vmem [#allocation2], 80
      %v1138 = vld [vmem:[%s1137] ss:$2 sm:$0xff]
      %s1139 = scalar_lea.vmem [#allocation2], 96
      %v1140 = vld [vmem:[%s1139] ss:$2 sm:$0xff]
      %s1141 = scalar_lea.vmem [#allocation2], 112
      %v1142 = vld [vmem:[%s1141] ss:$2 sm:$0xff]
      %s1143 = scalar_lea.vmem [#allocation2], 128
      %v1144 = vld [vmem:[%s1143] ss:$2 sm:$0xff]
      %s1145 = scalar_lea.vmem [#allocation2], 144
      %v1146 = vld [vmem:[%s1145] ss:$2 sm:$0xff]
      %s1147 = scalar_lea.vmem [#allocation2], 160
      %v1148 = vld [vmem:[%s1147] ss:$2 sm:$0xff]
      %s1149 = scalar_lea.vmem [#allocation2], 176
      %v1150 = vld [vmem:[%s1149] ss:$2 sm:$0xff]
      %s1151 = scalar_lea.vmem [#allocation2], 192
      %v1152 = vld [vmem:[%s1151] ss:$2 sm:$0xff]
      %s1153 = scalar_lea.vmem [#allocation2], 208
      %v1154 = vld [vmem:[%s1153] ss:$2 sm:$0xff]
      %s1155 = scalar_lea.vmem [#allocation2], 224
      %v1156 = vld [vmem:[%s1155] ss:$2 sm:$0xff]
      %s1157 = scalar_lea.vmem [#allocation2], 240
      %v1158 = vld [vmem:[%s1157] ss:$2 sm:$0xff]
      %s1159 = scalar_lea.vmem [#allocation2], 256
      %v1160 = vld [vmem:[%s1159] ss:$2 sm:$0xff]
      %s1161 = scalar_lea.vmem [#allocation2], 272
      %v1162 = vld [vmem:[%s1161] ss:$2 sm:$0xff]
      %s1163 = scalar_lea.vmem [#allocation2], 288
      %v1164 = vld [vmem:[%s1163] ss:$2 sm:$0xff]
      %s1165 = scalar_lea.vmem [#allocation2], 304
      %v1166 = vld [vmem:[%s1165] ss:$2 sm:$0xff]
      %s1167 = scalar_lea.vmem [#allocation2], 320
      %v1168 = vld [vmem:[%s1167] ss:$2 sm:$0xff]
      %s1169 = scalar_lea.vmem [#allocation2], 336
      %v1170 = vld [vmem:[%s1169] ss:$2 sm:$0xff]
      %s1171 = scalar_lea.vmem [#allocation2], 352
      %v1172 = vld [vmem:[%s1171] ss:$2 sm:$0xff]
      %s1173 = scalar_lea.vmem [#allocation2], 368
      %v1174 = vld [vmem:[%s1173] ss:$2 sm:$0xff]
      %s1175 = scalar_lea.vmem [#allocation2], 384
      %v1176 = vld [vmem:[%s1175] ss:$2 sm:$0xff]
      %s1177 = scalar_lea.vmem [#allocation2], 400
      %v1178 = vld [vmem:[%s1177] ss:$2 sm:$0xff]
      %s1179 = scalar_lea.vmem [#allocation2], 416
      %v1180 = vld [vmem:[%s1179] ss:$2 sm:$0xff]
      %s1181 = scalar_lea.vmem [#allocation2], 432
      %v1182 = vld [vmem:[%s1181] ss:$2 sm:$0xff]
      %s1183 = scalar_lea.vmem [#allocation2], 448
      %v1184 = vld [vmem:[%s1183] ss:$2 sm:$0xff]
      %s1185 = scalar_lea.vmem [#allocation2], 464
      %v1186 = vld [vmem:[%s1185] ss:$2 sm:$0xff]
      %s1187 = scalar_lea.vmem [#allocation2], 480
      %v1188 = vld [vmem:[%s1187] ss:$2 sm:$0xff]
      %s1189 = scalar_lea.vmem [#allocation2], 496
      %v1190 = vld [vmem:[%s1189] ss:$2 sm:$0xff]
      %s1191 = scalar_lea.vmem [#allocation2], 512
      %v1192 = vld [vmem:[%s1191] ss:$2 sm:$0xff]
      %s1193 = scalar_lea.vmem [#allocation2], 528
      %v1194 = vld [vmem:[%s1193] ss:$2 sm:$0xff]
      %s1195 = scalar_lea.vmem [#allocation2], 544
      %v1196 = vld [vmem:[%s1195] ss:$2 sm:$0xff]
      %s1197 = scalar_lea.vmem [#allocation2], 560
      %v1198 = vld [vmem:[%s1197] ss:$2 sm:$0xff]
      %s1199 = scalar_lea.vmem [#allocation2], 576
      %v1200 = vld [vmem:[%s1199] ss:$2 sm:$0xff]
      %s1201 = scalar_lea.vmem [#allocation2], 592
      %v1202 = vld [vmem:[%s1201] ss:$2 sm:$0xff]
      %s1203 = scalar_lea.vmem [#allocation2], 608
      %v1204 = vld [vmem:[%s1203] ss:$2 sm:$0xff]
      %s1205 = scalar_lea.vmem [#allocation2], 624
      %v1206 = vld [vmem:[%s1205] ss:$2 sm:$0xff]
      %s1207 = scalar_lea.vmem [#allocation2], 640
      %v1208 = vld [vmem:[%s1207] ss:$2 sm:$0xff]
      %s1209 = scalar_lea.vmem [#allocation2], 656
      %v1210 = vld [vmem:[%s1209] ss:$2 sm:$0xff]
      %s1211 = scalar_lea.vmem [#allocation2], 672
      %v1212 = vld [vmem:[%s1211] ss:$2 sm:$0xff]
      %s1213 = scalar_lea.vmem [#allocation2], 688
      %v1214 = vld [vmem:[%s1213] ss:$2 sm:$0xff]
      %s1215 = scalar_lea.vmem [#allocation2], 704
      %v1216 = vld [vmem:[%s1215] ss:$2 sm:$0xff]
      %s1217 = scalar_lea.vmem [#allocation2], 720
      %v1218 = vld [vmem:[%s1217] ss:$2 sm:$0xff]
      %s1219 = scalar_lea.vmem [#allocation2], 736
      %v1220 = vld [vmem:[%s1219] ss:$2 sm:$0xff]
      %s1221 = scalar_lea.vmem [#allocation2], 752
      %v1222 = vld [vmem:[%s1221] ss:$2 sm:$0xff]
      %s1223 = scalar_lea.vmem [#allocation2], 768
      %v1224 = vld [vmem:[%s1223] ss:$2 sm:$0xff]
      %s1225 = scalar_lea.vmem [#allocation2], 784
      %v1226 = vld [vmem:[%s1225] ss:$2 sm:$0xff]
      %s1227 = scalar_lea.vmem [#allocation2], 800
      %v1228 = vld [vmem:[%s1227] ss:$2 sm:$0xff]
      %s1229 = scalar_lea.vmem [#allocation2], 816
      %v1230 = vld [vmem:[%s1229] ss:$2 sm:$0xff]
      %s1231 = scalar_lea.vmem [#allocation2], 832
      %v1232 = vld [vmem:[%s1231] ss:$2 sm:$0xff]
      %s1233 = scalar_lea.vmem [#allocation2], 848
      %v1234 = vld [vmem:[%s1233] ss:$2 sm:$0xff]
      %s1235 = scalar_lea.vmem [#allocation2], 864
      %v1236 = vld [vmem:[%s1235] ss:$2 sm:$0xff]
      %s1237 = scalar_lea.vmem [#allocation2], 880
      %v1238 = vld [vmem:[%s1237] ss:$2 sm:$0xff]
      %s1239 = scalar_lea.vmem [#allocation2], 896
      %v1240 = vld [vmem:[%s1239] ss:$2 sm:$0xff]
      %s1241 = scalar_lea.vmem [#allocation2], 912
      %v1242 = vld [vmem:[%s1241] ss:$2 sm:$0xff]
      %s1243 = scalar_lea.vmem [#allocation2], 928
      %v1244 = vld [vmem:[%s1243] ss:$2 sm:$0xff]
      %s1245 = scalar_lea.vmem [#allocation2], 944
      %v1246 = vld [vmem:[%s1245] ss:$2 sm:$0xff]
      %s1247 = scalar_lea.vmem [#allocation2], 960
      %v1248 = vld [vmem:[%s1247] ss:$2 sm:$0xff]
      %s1249 = scalar_lea.vmem [#allocation2], 976
      %v1250 = vld [vmem:[%s1249] ss:$2 sm:$0xff]
      %s1251 = scalar_lea.vmem [#allocation2], 992
      %v1252 = vld [vmem:[%s1251] ss:$2 sm:$0xff]
      %s1253 = scalar_lea.vmem [#allocation2], 1008
      %v1254 = vld [vmem:[%s1253] ss:$2 sm:$0xff]
      %s1255 = scalar_lea.vmem [#allocation2], 1
      %v1256 = vld [vmem:[%s1255] ss:$2 sm:$0xff]
      %s1257 = scalar_lea.vmem [#allocation2], 17
      %v1258 = vld [vmem:[%s1257] ss:$2 sm:$0xff]
      %s1259 = scalar_lea.vmem [#allocation2], 33
      %v1260 = vld [vmem:[%s1259] ss:$2 sm:$0xff]
      %s1261 = scalar_lea.vmem [#allocation2], 49
      %v1262 = vld [vmem:[%s1261] ss:$2 sm:$0xff]
      %s1263 = scalar_lea.vmem [#allocation2], 65
      %v1264 = vld [vmem:[%s1263] ss:$2 sm:$0xff]
      %s1265 = scalar_lea.vmem [#allocation2], 81
      %v1266 = vld [vmem:[%s1265] ss:$2 sm:$0xff]
      %s1267 = scalar_lea.vmem [#allocation2], 97
      %v1268 = vld [vmem:[%s1267] ss:$2 sm:$0xff]
      %s1269 = scalar_lea.vmem [#allocation2], 113
      %v1270 = vld [vmem:[%s1269] ss:$2 sm:$0xff]
      %s1271 = scalar_lea.vmem [#allocation2], 129
      %v1272 = vld [vmem:[%s1271] ss:$2 sm:$0xff]
      %s1273 = scalar_lea.vmem [#allocation2], 145
      %v1274 = vld [vmem:[%s1273] ss:$2 sm:$0xff]
      %s1275 = scalar_lea.vmem [#allocation2], 161
      %v1276 = vld [vmem:[%s1275] ss:$2 sm:$0xff]
      %s1277 = scalar_lea.vmem [#allocation2], 177
      %v1278 = vld [vmem:[%s1277] ss:$2 sm:$0xff]
      %s1279 = scalar_lea.vmem [#allocation2], 193
      %v1280 = vld [vmem:[%s1279] ss:$2 sm:$0xff]
      %s1281 = scalar_lea.vmem [#allocation2], 209
      %v1282 = vld [vmem:[%s1281] ss:$2 sm:$0xff]
      %s1283 = scalar_lea.vmem [#allocation2], 225
      %v1284 = vld [vmem:[%s1283] ss:$2 sm:$0xff]
      %s1285 = scalar_lea.vmem [#allocation2], 241
      %v1286 = vld [vmem:[%s1285] ss:$2 sm:$0xff]
      %s1287 = scalar_lea.vmem [#allocation2], 257
      %v1288 = vld [vmem:[%s1287] ss:$2 sm:$0xff]
      %s1289 = scalar_lea.vmem [#allocation2], 273
      %v1290 = vld [vmem:[%s1289] ss:$2 sm:$0xff]
      %s1291 = scalar_lea.vmem [#allocation2], 289
      %v1292 = vld [vmem:[%s1291] ss:$2 sm:$0xff]
      %s1293 = scalar_lea.vmem [#allocation2], 305
      %v1294 = vld [vmem:[%s1293] ss:$2 sm:$0xff]
      %s1295 = scalar_lea.vmem [#allocation2], 321
      %v1296 = vld [vmem:[%s1295] ss:$2 sm:$0xff]
      %s1297 = scalar_lea.vmem [#allocation2], 337
      %v1298 = vld [vmem:[%s1297] ss:$2 sm:$0xff]
      %s1299 = scalar_lea.vmem [#allocation2], 353
      %v1300 = vld [vmem:[%s1299] ss:$2 sm:$0xff]
      %s1301 = scalar_lea.vmem [#allocation2], 369
      %v1302 = vld [vmem:[%s1301] ss:$2 sm:$0xff]
      %s1303 = scalar_lea.vmem [#allocation2], 385
      %v1304 = vld [vmem:[%s1303] ss:$2 sm:$0xff]
      %s1305 = scalar_lea.vmem [#allocation2], 401
      %v1306 = vld [vmem:[%s1305] ss:$2 sm:$0xff]
      %s1307 = scalar_lea.vmem [#allocation2], 417
      %v1308 = vld [vmem:[%s1307] ss:$2 sm:$0xff]
      %s1309 = scalar_lea.vmem [#allocation2], 433
      %v1310 = vld [vmem:[%s1309] ss:$2 sm:$0xff]
      %s1311 = scalar_lea.vmem [#allocation2], 449
      %v1312 = vld [vmem:[%s1311] ss:$2 sm:$0xff]
      %s1313 = scalar_lea.vmem [#allocation2], 465
      %v1314 = vld [vmem:[%s1313] ss:$2 sm:$0xff]
      %s1315 = scalar_lea.vmem [#allocation2], 481
      %v1316 = vld [vmem:[%s1315] ss:$2 sm:$0xff]
      %s1317 = scalar_lea.vmem [#allocation2], 497
      %v1318 = vld [vmem:[%s1317] ss:$2 sm:$0xff]
      %s1319 = scalar_lea.vmem [#allocation2], 513
      %v1320 = vld [vmem:[%s1319] ss:$2 sm:$0xff]
      %s1321 = scalar_lea.vmem [#allocation2], 529
      %v1322 = vld [vmem:[%s1321] ss:$2 sm:$0xff]
      %s1323 = scalar_lea.vmem [#allocation2], 545
      %v1324 = vld [vmem:[%s1323] ss:$2 sm:$0xff]
      %s1325 = scalar_lea.vmem [#allocation2], 561
      %v1326 = vld [vmem:[%s1325] ss:$2 sm:$0xff]
      %s1327 = scalar_lea.vmem [#allocation2], 577
      %v1328 = vld [vmem:[%s1327] ss:$2 sm:$0xff]
      %s1329 = scalar_lea.vmem [#allocation2], 593
      %v1330 = vld [vmem:[%s1329] ss:$2 sm:$0xff]
      %s1331 = scalar_lea.vmem [#allocation2], 609
      %v1332 = vld [vmem:[%s1331] ss:$2 sm:$0xff]
      %s1333 = scalar_lea.vmem [#allocation2], 625
      %v1334 = vld [vmem:[%s1333] ss:$2 sm:$0xff]
      %s1335 = scalar_lea.vmem [#allocation2], 641
      %v1336 = vld [vmem:[%s1335] ss:$2 sm:$0xff]
      %s1337 = scalar_lea.vmem [#allocation2], 657
      %v1338 = vld [vmem:[%s1337] ss:$2 sm:$0xff]
      %s1339 = scalar_lea.vmem [#allocation2], 673
      %v1340 = vld [vmem:[%s1339] ss:$2 sm:$0xff]
      %s1341 = scalar_lea.vmem [#allocation2], 689
      %v1342 = vld [vmem:[%s1341] ss:$2 sm:$0xff]
      %s1343 = scalar_lea.vmem [#allocation2], 705
      %v1344 = vld [vmem:[%s1343] ss:$2 sm:$0xff]
      %s1345 = scalar_lea.vmem [#allocation2], 721
      %v1346 = vld [vmem:[%s1345] ss:$2 sm:$0xff]
      %s1347 = scalar_lea.vmem [#allocation2], 737
      %v1348 = vld [vmem:[%s1347] ss:$2 sm:$0xff]
      %s1349 = scalar_lea.vmem [#allocation2], 753
      %v1350 = vld [vmem:[%s1349] ss:$2 sm:$0xff]
      %s1351 = scalar_lea.vmem [#allocation2], 769
      %v1352 = vld [vmem:[%s1351] ss:$2 sm:$0xff]
      %s1353 = scalar_lea.vmem [#allocation2], 785
      %v1354 = vld [vmem:[%s1353] ss:$2 sm:$0xff]
      %s1355 = scalar_lea.vmem [#allocation2], 801
      %v1356 = vld [vmem:[%s1355] ss:$2 sm:$0xff]
      %s1357 = scalar_lea.vmem [#allocation2], 817
      %v1358 = vld [vmem:[%s1357] ss:$2 sm:$0xff]
      %s1359 = scalar_lea.vmem [#allocation2], 833
      %v1360 = vld [vmem:[%s1359] ss:$2 sm:$0xff]
      %s1361 = scalar_lea.vmem [#allocation2], 849
      %v1362 = vld [vmem:[%s1361] ss:$2 sm:$0xff]
      %s1363 = scalar_lea.vmem [#allocation2], 865
      %v1364 = vld [vmem:[%s1363] ss:$2 sm:$0xff]
      %s1365 = scalar_lea.vmem [#allocation2], 881
      %v1366 = vld [vmem:[%s1365] ss:$2 sm:$0xff]
      %s1367 = scalar_lea.vmem [#allocation2], 897
      %v1368 = vld [vmem:[%s1367] ss:$2 sm:$0xff]
      %s1369 = scalar_lea.vmem [#allocation2], 913
      %v1370 = vld [vmem:[%s1369] ss:$2 sm:$0xff]
      %s1371 = scalar_lea.vmem [#allocation2], 929
      %v1372 = vld [vmem:[%s1371] ss:$2 sm:$0xff]
      %s1373 = scalar_lea.vmem [#allocation2], 945
      %v1374 = vld [vmem:[%s1373] ss:$2 sm:$0xff]
      %s1375 = scalar_lea.vmem [#allocation2], 961
      %v1376 = vld [vmem:[%s1375] ss:$2 sm:$0xff]
      %s1377 = scalar_lea.vmem [#allocation2], 977
      %v1378 = vld [vmem:[%s1377] ss:$2 sm:$0xff]
      %s1379 = scalar_lea.vmem [#allocation2], 993
      %v1380 = vld [vmem:[%s1379] ss:$2 sm:$0xff]
      %s1381 = scalar_lea.vmem [#allocation2], 1009
      %v1382 = vld [vmem:[%s1381] ss:$2 sm:$0xff]
      %v1383 = vmax.f32 %v1128, %v1256
      %v1384 = vmax.f32 %v1130, %v1258
      %v1385 = vmax.f32 %v1132, %v1260
      %v1386 = vmax.f32 %v1134, %v1262
      %v1387 = vmax.f32 %v1136, %v1264
      %v1388 = vmax.f32 %v1138, %v1266
      %v1389 = vmax.f32 %v1140, %v1268
      %v1390 = vmax.f32 %v1142, %v1270
      %v1391 = vmax.f32 %v1144, %v1272
      %v1392 = vmax.f32 %v1146, %v1274
      %v1393 = vmax.f32 %v1148, %v1276
      %v1394 = vmax.f32 %v1150, %v1278
      %v1395 = vmax.f32 %v1152, %v1280
      %v1396 = vmax.f32 %v1154, %v1282
      %v1397 = vmax.f32 %v1156, %v1284
      %v1398 = vmax.f32 %v1158, %v1286
      %v1399 = vmax.f32 %v1160, %v1288
      %v1400 = vmax.f32 %v1162, %v1290
      %v1401 = vmax.f32 %v1164, %v1292
      %v1402 = vmax.f32 %v1166, %v1294
      %v1403 = vmax.f32 %v1168, %v1296
      %v1404 = vmax.f32 %v1170, %v1298
      %v1405 = vmax.f32 %v1172, %v1300
      %v1406 = vmax.f32 %v1174, %v1302
      %v1407 = vmax.f32 %v1176, %v1304
      %v1408 = vmax.f32 %v1178, %v1306
      %v1409 = vmax.f32 %v1180, %v1308
      %v1410 = vmax.f32 %v1182, %v1310
      %v1411 = vmax.f32 %v1184, %v1312
      %v1412 = vmax.f32 %v1186, %v1314
      %v1413 = vmax.f32 %v1188, %v1316
      %v1414 = vmax.f32 %v1190, %v1318
      %v1415 = vmax.f32 %v1192, %v1320
      %v1416 = vmax.f32 %v1194, %v1322
      %v1417 = vmax.f32 %v1196, %v1324
      %v1418 = vmax.f32 %v1198, %v1326
      %v1419 = vmax.f32 %v1200, %v1328
      %v1420 = vmax.f32 %v1202, %v1330
      %v1421 = vmax.f32 %v1204, %v1332
      %v1422 = vmax.f32 %v1206, %v1334
      %v1423 = vmax.f32 %v1208, %v1336
      %v1424 = vmax.f32 %v1210, %v1338
      %v1425 = vmax.f32 %v1212, %v1340
      %v1426 = vmax.f32 %v1214, %v1342
      %v1427 = vmax.f32 %v1216, %v1344
      %v1428 = vmax.f32 %v1218, %v1346
      %v1429 = vmax.f32 %v1220, %v1348
      %v1430 = vmax.f32 %v1222, %v1350
      %v1431 = vmax.f32 %v1224, %v1352
      %v1432 = vmax.f32 %v1226, %v1354
      %v1433 = vmax.f32 %v1228, %v1356
      %v1434 = vmax.f32 %v1230, %v1358
      %v1435 = vmax.f32 %v1232, %v1360
      %v1436 = vmax.f32 %v1234, %v1362
      %v1437 = vmax.f32 %v1236, %v1364
      %v1438 = vmax.f32 %v1238, %v1366
      %v1439 = vmax.f32 %v1240, %v1368
      %v1440 = vmax.f32 %v1242, %v1370
      %v1441 = vmax.f32 %v1244, %v1372
      %v1442 = vmax.f32 %v1246, %v1374
      %v1443 = vmax.f32 %v1248, %v1376
      %v1444 = vmax.f32 %v1250, %v1378
      %v1445 = vmax.f32 %v1252, %v1380
      %v1446 = vmax.f32 %v1254, %v1382
      %v1447 = vld [vmem:[%s3] sm:$0xff]
      %v1448 = vld [vmem:[%s3 + $0x8] sm:$0xff]
      %v1449 = vld [vmem:[%s3 + $0x10] sm:$0xff]
      %v1450 = vld [vmem:[%s4] sm:$0x1]
      %vm1515 = vcmask 1040384
      %v1516 = vrot.slane %v1383, 7
      %v1517 = vrot.slane %v1384, 7
      %v1518 = vsel %vm1515, %v1516, %v1517
      %v1519 = vrot.slane %v1385, 7
      %v1520 = vsel %vm1515, %v1517, %v1519
      %v1521 = vrot.slane %v1386, 7
      %v1522 = vsel %vm1515, %v1519, %v1521
      %v1523 = vrot.slane %v1387, 7
      %v1524 = vsel %vm1515, %v1521, %v1523
      %v1525 = vrot.slane %v1388, 7
      %v1526 = vsel %vm1515, %v1523, %v1525
      %v1527 = vrot.slane %v1389, 7
      %v1528 = vsel %vm1515, %v1525, %v1527
      %v1529 = vrot.slane %v1390, 7
      %v1530 = vsel %vm1515, %v1527, %v1529
      %v1531 = vrot.slane %v1391, 7
      %v1532 = vrot.slane %v1392, 7
      %v1533 = vsel %vm1515, %v1531, %v1532
      %v1534 = vrot.slane %v1393, 7
      %v1535 = vsel %vm1515, %v1532, %v1534
      %v1536 = vrot.slane %v1394, 7
      %v1537 = vsel %vm1515, %v1534, %v1536
      %v1538 = vrot.slane %v1395, 7
      %v1539 = vsel %vm1515, %v1536, %v1538
      %v1540 = vrot.slane %v1396, 7
      %v1541 = vsel %vm1515, %v1538, %v1540
      %v1542 = vrot.slane %v1397, 7
      %v1543 = vsel %vm1515, %v1540, %v1542
      %v1544 = vrot.slane %v1398, 7
      %v1545 = vsel %vm1515, %v1542, %v1544
      %v1546 = vrot.slane %v1399, 7
      %v1547 = vrot.slane %v1400, 7
      %v1548 = vsel %vm1515, %v1546, %v1547
      %v1549 = vrot.slane %v1401, 7
      %v1550 = vsel %vm1515, %v1547, %v1549
      %v1551 = vrot.slane %v1402, 7
      %v1552 = vsel %vm1515, %v1549, %v1551
      %v1553 = vrot.slane %v1403, 7
      %v1554 = vsel %vm1515, %v1551, %v1553
      %v1555 = vrot.slane %v1404, 7
      %v1556 = vsel %vm1515, %v1553, %v1555
      %v1557 = vrot.slane %v1405, 7
      %v1558 = vsel %vm1515, %v1555, %v1557
      %v1559 = vrot.slane %v1406, 7
      %v1560 = vsel %vm1515, %v1557, %v1559
      %v1561 = vrot.slane %v1407, 7
      %v1562 = vrot.slane %v1408, 7
      %v1563 = vsel %vm1515, %v1561, %v1562
      %v1564 = vrot.slane %v1409, 7
      %v1565 = vsel %vm1515, %v1562, %v1564
      %v1566 = vrot.slane %v1410, 7
      %v1567 = vsel %vm1515, %v1564, %v1566
      %v1568 = vrot.slane %v1411, 7
      %v1569 = vsel %vm1515, %v1566, %v1568
      %v1570 = vrot.slane %v1412, 7
      %v1571 = vsel %vm1515, %v1568, %v1570
      %v1572 = vrot.slane %v1413, 7
      %v1573 = vsel %vm1515, %v1570, %v1572
      %v1574 = vrot.slane %v1414, 7
      %v1575 = vsel %vm1515, %v1572, %v1574
      %v1576 = vrot.slane %v1415, 7
      %v1577 = vrot.slane %v1416, 7
      %v1578 = vsel %vm1515, %v1576, %v1577
      %v1579 = vrot.slane %v1417, 7
      %v1580 = vsel %vm1515, %v1577, %v1579
      %v1581 = vrot.slane %v1418, 7
      %v1582 = vsel %vm1515, %v1579, %v1581
      %v1583 = vrot.slane %v1419, 7
      %v1584 = vsel %vm1515, %v1581, %v1583
      %v1585 = vrot.slane %v1420, 7
      %v1586 = vsel %vm1515, %v1583, %v1585
      %v1587 = vrot.slane %v1421, 7
      %v1588 = vsel %vm1515, %v1585, %v1587
      %v1589 = vrot.slane %v1422, 7
      %v1590 = vsel %vm1515, %v1587, %v1589
      %v1591 = vrot.slane %v1423, 7
      %v1592 = vrot.slane %v1424, 7
      %v1593 = vsel %vm1515, %v1591, %v1592
      %v1594 = vrot.slane %v1425, 7
      %v1595 = vsel %vm1515, %v1592, %v1594
      %v1596 = vrot.slane %v1426, 7
      %v1597 = vsel %vm1515, %v1594, %v1596
      %v1598 = vrot.slane %v1427, 7
      %v1599 = vsel %vm1515, %v1596, %v1598
      %v1600 = vrot.slane %v1428, 7
      %v1601 = vsel %vm1515, %v1598, %v1600
      %v1602 = vrot.slane %v1429, 7
      %v1603 = vsel %vm1515, %v1600, %v1602
      %v1604 = vrot.slane %v1430, 7
      %v1605 = vsel %vm1515, %v1602, %v1604
      %v1606 = vrot.slane %v1431, 7
      %v1607 = vrot.slane %v1432, 7
      %v1608 = vsel %vm1515, %v1606, %v1607
      %v1609 = vrot.slane %v1433, 7
      %v1610 = vsel %vm1515, %v1607, %v1609
      %v1611 = vrot.slane %v1434, 7
      %v1612 = vsel %vm1515, %v1609, %v1611
      %v1613 = vrot.slane %v1435, 7
      %v1614 = vsel %vm1515, %v1611, %v1613
      %v1615 = vrot.slane %v1436, 7
      %v1616 = vsel %vm1515, %v1613, %v1615
      %v1617 = vrot.slane %v1437, 7
      %v1618 = vsel %vm1515, %v1615, %v1617
      %v1619 = vrot.slane %v1438, 7
      %v1620 = vsel %vm1515, %v1617, %v1619
      %v1621 = vrot.slane %v1439, 7
      %v1622 = vrot.slane %v1440, 7
      %v1623 = vsel %vm1515, %v1621, %v1622
      %v1624 = vrot.slane %v1441, 7
      %v1625 = vsel %vm1515, %v1622, %v1624
      %v1626 = vrot.slane %v1442, 7
      %v1627 = vsel %vm1515, %v1624, %v1626
      %v1628 = vrot.slane %v1443, 7
      %v1629 = vsel %vm1515, %v1626, %v1628
      %v1630 = vrot.slane %v1444, 7
      %v1631 = vsel %vm1515, %v1628, %v1630
      %v1632 = vrot.slane %v1445, 7
      %v1633 = vsel %vm1515, %v1630, %v1632
      %v1634 = vrot.slane %v1446, 7
      %v1635 = vsel %vm1515, %v1632, %v1634
      %v1700 = vsel %vm1515, 0.0, %v1516
      %v1701 = vsel %vm1515, 0.0, %v1531
      %v1702 = vsel %vm1515, 0.0, %v1546
      %v1703 = vsel %vm1515, 0.0, %v1561
      %v1704 = vsel %vm1515, 0.0, %v1576
      %v1705 = vsel %vm1515, 0.0, %v1591
      %v1706 = vsel %vm1515, 0.0, %v1606
      %v1707 = vsel %vm1515, 0.0, %v1621
      %vm1708 = vcmask 1046528
      %v1709 = vrot.slane %v1383, 1
      %v1710 = vrot.slane %v1384, 1
      %v1711 = vsel %vm1708, %v1709, %v1710
      %v1712 = vrot.slane %v1385, 1
      %v1713 = vsel %vm1708, %v1710, %v1712
      %v1714 = vrot.slane %v1386, 1
      %v1715 = vsel %vm1708, %v1712, %v1714
      %v1716 = vrot.slane %v1387, 1
      %v1717 = vsel %vm1708, %v1714, %v1716
      %v1718 = vrot.slane %v1388, 1
      %v1719 = vsel %vm1708, %v1716, %v1718
      %v1720 = vrot.slane %v1389, 1
      %v1721 = vsel %vm1708, %v1718, %v1720
      %v1722 = vrot.slane %v1390, 1
      %v1723 = vsel %vm1708, %v1720, %v1722
      %v1724 = vrot.slane %v1391, 1
      %v1725 = vrot.slane %v1392, 1
      %v1726 = vsel %vm1708, %v1724, %v1725
      %v1727 = vrot.slane %v1393, 1
      %v1728 = vsel %vm1708, %v1725, %v1727
      %v1729 = vrot.slane %v1394, 1
      %v1730 = vsel %vm1708, %v1727, %v1729
      %v1731 = vrot.slane %v1395, 1
      %v1732 = vsel %vm1708, %v1729, %v1731
      %v1733 = vrot.slane %v1396, 1
      %v1734 = vsel %vm1708, %v1731, %v1733
      %v1735 = vrot.slane %v1397, 1
      %v1736 = vsel %vm1708, %v1733, %v1735
      %v1737 = vrot.slane %v1398, 1
      %v1738 = vsel %vm1708, %v1735, %v1737
      %v1739 = vrot.slane %v1399, 1
      %v1740 = vrot.slane %v1400, 1
      %v1741 = vsel %vm1708, %v1739, %v1740
      %v1742 = vrot.slane %v1401, 1
      %v1743 = vsel %vm1708, %v1740, %v1742
      %v1744 = vrot.slane %v1402, 1
      %v1745 = vsel %vm1708, %v1742, %v1744
      %v1746 = vrot.slane %v1403, 1
      %v1747 = vsel %vm1708, %v1744, %v1746
      %v1748 = vrot.slane %v1404, 1
      %v1749 = vsel %vm1708, %v1746, %v1748
      %v1750 = vrot.slane %v1405, 1
      %v1751 = vsel %vm1708, %v1748, %v1750
      %v1752 = vrot.slane %v1406, 1
      %v1753 = vsel %vm1708, %v1750, %v1752
      %v1754 = vrot.slane %v1407, 1
      %v1755 = vrot.slane %v1408, 1
      %v1756 = vsel %vm1708, %v1754, %v1755
      %v1757 = vrot.slane %v1409, 1
      %v1758 = vsel %vm1708, %v1755, %v1757
      %v1759 = vrot.slane %v1410, 1
      %v1760 = vsel %vm1708, %v1757, %v1759
      %v1761 = vrot.slane %v1411, 1
      %v1762 = vsel %vm1708, %v1759, %v1761
      %v1763 = vrot.slane %v1412, 1
      %v1764 = vsel %vm1708, %v1761, %v1763
      %v1765 = vrot.slane %v1413, 1
      %v1766 = vsel %vm1708, %v1763, %v1765
      %v1767 = vrot.slane %v1414, 1
      %v1768 = vsel %vm1708, %v1765, %v1767
      %v1769 = vrot.slane %v1415, 1
      %v1770 = vrot.slane %v1416, 1
      %v1771 = vsel %vm1708, %v1769, %v1770
      %v1772 = vrot.slane %v1417, 1
      %v1773 = vsel %vm1708, %v1770, %v1772
      %v1774 = vrot.slane %v1418, 1
      %v1775 = vsel %vm1708, %v1772, %v1774
      %v1776 = vrot.slane %v1419, 1
      %v1777 = vsel %vm1708, %v1774, %v1776
      %v1778 = vrot.slane %v1420, 1
      %v1779 = vsel %vm1708, %v1776, %v1778
      %v1780 = vrot.slane %v1421, 1
      %v1781 = vsel %vm1708, %v1778, %v1780
      %v1782 = vrot.slane %v1422, 1
      %v1783 = vsel %vm1708, %v1780, %v1782
      %v1784 = vrot.slane %v1423, 1
      %v1785 = vrot.slane %v1424, 1
      %v1786 = vsel %vm1708, %v1784, %v1785
      %v1787 = vrot.slane %v1425, 1
      %v1788 = vsel %vm1708, %v1785, %v1787
      %v1789 = vrot.slane %v1426, 1
      %v1790 = vsel %vm1708, %v1787, %v1789
      %v1791 = vrot.slane %v1427, 1
      %v1792 = vsel %vm1708, %v1789, %v1791
      %v1793 = vrot.slane %v1428, 1
      %v1794 = vsel %vm1708, %v1791, %v1793
      %v1795 = vrot.slane %v1429, 1
      %v1796 = vsel %vm1708, %v1793, %v1795
      %v1797 = vrot.slane %v1430, 1
      %v1798 = vsel %vm1708, %v1795, %v1797
      %v1799 = vrot.slane %v1431, 1
      %v1800 = vrot.slane %v1432, 1
      %v1801 = vsel %vm1708, %v1799, %v1800
      %v1802 = vrot.slane %v1433, 1
      %v1803 = vsel %vm1708, %v1800, %v1802
      %v1804 = vrot.slane %v1434, 1
      %v1805 = vsel %vm1708, %v1802, %v1804
      %v1806 = vrot.slane %v1435, 1
      %v1807 = vsel %vm1708, %v1804, %v1806
      %v1808 = vrot.slane %v1436, 1
      %v1809 = vsel %vm1708, %v1806, %v1808
      %v1810 = vrot.slane %v1437, 1
      %v1811 = vsel %vm1708, %v1808, %v1810
      %v1812 = vrot.slane %v1438, 1
      %v1813 = vsel %vm1708, %v1810, %v1812
      %v1814 = vrot.slane %v1439, 1
      %v1815 = vrot.slane %v1440, 1
      %v1816 = vsel %vm1708, %v1814, %v1815
      %v1817 = vrot.slane %v1441, 1
      %v1818 = vsel %vm1708, %v1815, %v1817
      %v1819 = vrot.slane %v1442, 1
      %v1820 = vsel %vm1708, %v1817, %v1819
      %v1821 = vrot.slane %v1443, 1
      %v1822 = vsel %vm1708, %v1819, %v1821
      %v1823 = vrot.slane %v1444, 1
      %v1824 = vsel %vm1708, %v1821, %v1823
      %v1825 = vrot.slane %v1445, 1
      %v1826 = vsel %vm1708, %v1823, %v1825
      %v1827 = vrot.slane %v1446, 1
      %v1828 = vsel %vm1708, %v1825, %v1827
      %v1837 = vsel %vm1708, %v1722, 0.0
      %v1838 = vsel %vm1708, %v1737, 0.0
      %v1839 = vsel %vm1708, %v1752, 0.0
      %v1840 = vsel %vm1708, %v1767, 0.0
      %v1841 = vsel %vm1708, %v1782, 0.0
      %v1842 = vsel %vm1708, %v1797, 0.0
      %v1843 = vsel %vm1708, %v1812, 0.0
      %v1844 = vsel %vm1708, %v1827, 0.0
      %1845 = vrot.lane.b32.xlu0 %v1383, 8
      %v1846 = vpop.permute.xlu0 %1845
      %1847 = vrot.lane.b32.xlu0 %v1384, 8
      %v1848 = vpop.permute.xlu0 %1847
      %1849 = vrot.lane.b32.xlu0 %v1385, 8
      %v1850 = vpop.permute.xlu0 %1849
      %1851 = vrot.lane.b32.xlu0 %v1386, 8
      %v1852 = vpop.permute.xlu0 %1851
      %1853 = vrot.lane.b32.xlu0 %v1387, 8
      %v1854 = vpop.permute.xlu0 %1853
      %1855 = vrot.lane.b32.xlu0 %v1388, 8
      %v1856 = vpop.permute.xlu0 %1855
      %1857 = vrot.lane.b32.xlu0 %v1389, 8
      %v1858 = vpop.permute.xlu0 %1857
      %1859 = vrot.lane.b32.xlu0 %v1390, 8
      %v1860 = vpop.permute.xlu0 %1859
      %1861 = vrot.lane.b32.xlu0 %v1391, 8
      %v1862 = vpop.permute.xlu0 %1861
      %1863 = vrot.lane.b32.xlu0 %v1392, 8
      %v1864 = vpop.permute.xlu0 %1863
      %1865 = vrot.lane.b32.xlu0 %v1393, 8
      %v1866 = vpop.permute.xlu0 %1865
      %1867 = vrot.lane.b32.xlu0 %v1394, 8
      %v1868 = vpop.permute.xlu0 %1867
      %1869 = vrot.lane.b32.xlu0 %v1395, 8
      %v1870 = vpop.permute.xlu0 %1869
      %1871 = vrot.lane.b32.xlu0 %v1396, 8
      %v1872 = vpop.permute.xlu0 %1871
      %1873 = vrot.lane.b32.xlu0 %v1397, 8
      %v1874 = vpop.permute.xlu0 %1873
      %1875 = vrot.lane.b32.xlu0 %v1398, 8
      %v1876 = vpop.permute.xlu0 %1875
      %1877 = vrot.lane.b32.xlu0 %v1399, 8
      %v1878 = vpop.permute.xlu0 %1877
      %1879 = vrot.lane.b32.xlu0 %v1400, 8
      %v1880 = vpop.permute.xlu0 %1879
      %1881 = vrot.lane.b32.xlu0 %v1401, 8
      %v1882 = vpop.permute.xlu0 %1881
      %1883 = vrot.lane.b32.xlu0 %v1402, 8
      %v1884 = vpop.permute.xlu0 %1883
      %1885 = vrot.lane.b32.xlu0 %v1403, 8
      %v1886 = vpop.permute.xlu0 %1885
      %1887 = vrot.lane.b32.xlu0 %v1404, 8
      %v1888 = vpop.permute.xlu0 %1887
      %1889 = vrot.lane.b32.xlu0 %v1405, 8
      %v1890 = vpop.permute.xlu0 %1889
      %1891 = vrot.lane.b32.xlu0 %v1406, 8
      %v1892 = vpop.permute.xlu0 %1891
      %1893 = vrot.lane.b32.xlu0 %v1407, 8
      %v1894 = vpop.permute.xlu0 %1893
      %1895 = vrot.lane.b32.xlu0 %v1408, 8
      %v1896 = vpop.permute.xlu0 %1895
      %1897 = vrot.lane.b32.xlu0 %v1409, 8
      %v1898 = vpop.permute.xlu0 %1897
      %1899 = vrot.lane.b32.xlu0 %v1410, 8
      %v1900 = vpop.permute.xlu0 %1899
      %1901 = vrot.lane.b32.xlu0 %v1411, 8
      %v1902 = vpop.permute.xlu0 %1901
      %1903 = vrot.lane.b32.xlu0 %v1412, 8
      %v1904 = vpop.permute.xlu0 %1903
      %1905 = vrot.lane.b32.xlu0 %v1413, 8
      %v1906 = vpop.permute.xlu0 %1905
      %1907 = vrot.lane.b32.xlu0 %v1414, 8
      %v1908 = vpop.permute.xlu0 %1907
      %1909 = vrot.lane.b32.xlu0 %v1415, 8
      %v1910 = vpop.permute.xlu0 %1909
      %1911 = vrot.lane.b32.xlu0 %v1416, 8
      %v1912 = vpop.permute.xlu0 %1911
      %1913 = vrot.lane.b32.xlu0 %v1417, 8
      %v1914 = vpop.permute.xlu0 %1913
      %1915 = vrot.lane.b32.xlu0 %v1418, 8
      %v1916 = vpop.permute.xlu0 %1915
      %1917 = vrot.lane.b32.xlu0 %v1419, 8
      %v1918 = vpop.permute.xlu0 %1917
      %1919 = vrot.lane.b32.xlu0 %v1420, 8
      %v1920 = vpop.permute.xlu0 %1919
      %1921 = vrot.lane.b32.xlu0 %v1421, 8
      %v1922 = vpop.permute.xlu0 %1921
      %1923 = vrot.lane.b32.xlu0 %v1422, 8
      %v1924 = vpop.permute.xlu0 %1923
      %1925 = vrot.lane.b32.xlu0 %v1423, 8
      %v1926 = vpop.permute.xlu0 %1925
      %1927 = vrot.lane.b32.xlu0 %v1424, 8
      %v1928 = vpop.permute.xlu0 %1927
      %1929 = vrot.lane.b32.xlu0 %v1425, 8
      %v1930 = vpop.permute.xlu0 %1929
      %1931 = vrot.lane.b32.xlu0 %v1426, 8
      %v1932 = vpop.permute.xlu0 %1931
      %1933 = vrot.lane.b32.xlu0 %v1427, 8
      %v1934 = vpop.permute.xlu0 %1933
      %1935 = vrot.lane.b32.xlu0 %v1428, 8
      %v1936 = vpop.permute.xlu0 %1935
      %1937 = vrot.lane.b32.xlu0 %v1429, 8
      %v1938 = vpop.permute.xlu0 %1937
      %1939 = vrot.lane.b32.xlu0 %v1430, 8
      %v1940 = vpop.permute.xlu0 %1939
      %1941 = vrot.lane.b32.xlu0 %v1431, 8
      %v1942 = vpop.permute.xlu0 %1941
      %1943 = vrot.lane.b32.xlu0 %v1432, 8
      %v1944 = vpop.permute.xlu0 %1943
      %1945 = vrot.lane.b32.xlu0 %v1433, 8
      %v1946 = vpop.permute.xlu0 %1945
      %1947 = vrot.lane.b32.xlu0 %v1434, 8
      %v1948 = vpop.permute.xlu0 %1947
      %1949 = vrot.lane.b32.xlu0 %v1435, 8
      %v1950 = vpop.permute.xlu0 %1949
      %1951 = vrot.lane.b32.xlu0 %v1436, 8
      %v1952 = vpop.permute.xlu0 %1951
      %1953 = vrot.lane.b32.xlu0 %v1437, 8
      %v1954 = vpop.permute.xlu0 %1953
      %1955 = vrot.lane.b32.xlu0 %v1438, 8
      %v1956 = vpop.permute.xlu0 %1955
      %1957 = vrot.lane.b32.xlu0 %v1439, 8
      %v1958 = vpop.permute.xlu0 %1957
      %1959 = vrot.lane.b32.xlu0 %v1440, 8
      %v1960 = vpop.permute.xlu0 %1959
      %1961 = vrot.lane.b32.xlu0 %v1441, 8
      %v1962 = vpop.permute.xlu0 %1961
      %1963 = vrot.lane.b32.xlu0 %v1442, 8
      %v1964 = vpop.permute.xlu0 %1963
      %1965 = vrot.lane.b32.xlu0 %v1443, 8
      %v1966 = vpop.permute.xlu0 %1965
      %1967 = vrot.lane.b32.xlu0 %v1444, 8
      %v1968 = vpop.permute.xlu0 %1967
      %1969 = vrot.lane.b32.xlu0 %v1445, 8
      %v1970 = vpop.permute.xlu0 %1969
      %1971 = vrot.lane.b32.xlu0 %v1446, 8
      %v1972 = vpop.permute.xlu0 %1971
      %2045 = vrot.lane.b32.xlu0 %v1711, 16
      %v2046 = vpop.permute.xlu0 %2045
      %2047 = vrot.lane.b32.xlu0 %v1713, 16
      %v2048 = vpop.permute.xlu0 %2047
      %2049 = vrot.lane.b32.xlu0 %v1715, 16
      %v2050 = vpop.permute.xlu0 %2049
      %2051 = vrot.lane.b32.xlu0 %v1717, 16
      %v2052 = vpop.permute.xlu0 %2051
      %2053 = vrot.lane.b32.xlu0 %v1719, 16
      %v2054 = vpop.permute.xlu0 %2053
      %2055 = vrot.lane.b32.xlu0 %v1721, 16
      %v2056 = vpop.permute.xlu0 %2055
      %2057 = vrot.lane.b32.xlu0 %v1723, 16
      %v2058 = vpop.permute.xlu0 %2057
      %2059 = vrot.lane.b32.xlu0 %v1837, 16
      %v2060 = vpop.permute.xlu0 %2059
      %2061 = vrot.lane.b32.xlu0 %v1726, 16
      %v2062 = vpop.permute.xlu0 %2061
      %2063 = vrot.lane.b32.xlu0 %v1728, 16
      %v2064 = vpop.permute.xlu0 %2063
      %2065 = vrot.lane.b32.xlu0 %v1730, 16
      %v2066 = vpop.permute.xlu0 %2065
      %2067 = vrot.lane.b32.xlu0 %v1732, 16
      %v2068 = vpop.permute.xlu0 %2067
      %2069 = vrot.lane.b32.xlu0 %v1734, 16
      %v2070 = vpop.permute.xlu0 %2069
      %2071 = vrot.lane.b32.xlu0 %v1736, 16
      %v2072 = vpop.permute.xlu0 %2071
      %2073 = vrot.lane.b32.xlu0 %v1738, 16
      %v2074 = vpop.permute.xlu0 %2073
      %2075 = vrot.lane.b32.xlu0 %v1838, 16
      %v2076 = vpop.permute.xlu0 %2075
      %2077 = vrot.lane.b32.xlu0 %v1741, 16
      %v2078 = vpop.permute.xlu0 %2077
      %2079 = vrot.lane.b32.xlu0 %v1743, 16
      %v2080 = vpop.permute.xlu0 %2079
      %2081 = vrot.lane.b32.xlu0 %v1745, 16
      %v2082 = vpop.permute.xlu0 %2081
      %2083 = vrot.lane.b32.xlu0 %v1747, 16
      %v2084 = vpop.permute.xlu0 %2083
      %2085 = vrot.lane.b32.xlu0 %v1749, 16
      %v2086 = vpop.permute.xlu0 %2085
      %2087 = vrot.lane.b32.xlu0 %v1751, 16
      %v2088 = vpop.permute.xlu0 %2087
      %2089 = vrot.lane.b32.xlu0 %v1753, 16
      %v2090 = vpop.permute.xlu0 %2089
      %2091 = vrot.lane.b32.xlu0 %v1839, 16
      %v2092 = vpop.permute.xlu0 %2091
      %2093 = vrot.lane.b32.xlu0 %v1756, 16
      %v2094 = vpop.permute.xlu0 %2093
      %2095 = vrot.lane.b32.xlu0 %v1758, 16
      %v2096 = vpop.permute.xlu0 %2095
      %2097 = vrot.lane.b32.xlu0 %v1760, 16
      %v2098 = vpop.permute.xlu0 %2097
      %2099 = vrot.lane.b32.xlu0 %v1762, 16
      %v2100 = vpop.permute.xlu0 %2099
      %2101 = vrot.lane.b32.xlu0 %v1764, 16
      %v2102 = vpop.permute.xlu0 %2101
      %2103 = vrot.lane.b32.xlu0 %v1766, 16
      %v2104 = vpop.permute.xlu0 %2103
      %2105 = vrot.lane.b32.xlu0 %v1768, 16
      %v2106 = vpop.permute.xlu0 %2105
      %2107 = vrot.lane.b32.xlu0 %v1840, 16
      %v2108 = vpop.permute.xlu0 %2107
      %2109 = vrot.lane.b32.xlu0 %v1771, 16
      %v2110 = vpop.permute.xlu0 %2109
      %2111 = vrot.lane.b32.xlu0 %v1773, 16
      %v2112 = vpop.permute.xlu0 %2111
      %2113 = vrot.lane.b32.xlu0 %v1775, 16
      %v2114 = vpop.permute.xlu0 %2113
      %2115 = vrot.lane.b32.xlu0 %v1777, 16
      %v2116 = vpop.permute.xlu0 %2115
      %2117 = vrot.lane.b32.xlu0 %v1779, 16
      %v2118 = vpop.permute.xlu0 %2117
      %2119 = vrot.lane.b32.xlu0 %v1781, 16
      %v2120 = vpop.permute.xlu0 %2119
      %2121 = vrot.lane.b32.xlu0 %v1783, 16
      %v2122 = vpop.permute.xlu0 %2121
      %2123 = vrot.lane.b32.xlu0 %v1841, 16
      %v2124 = vpop.permute.xlu0 %2123
      %2125 = vrot.lane.b32.xlu0 %v1786, 16
      %v2126 = vpop.permute.xlu0 %2125
      %2127 = vrot.lane.b32.xlu0 %v1788, 16
      %v2128 = vpop.permute.xlu0 %2127
      %2129 = vrot.lane.b32.xlu0 %v1790, 16
      %v2130 = vpop.permute.xlu0 %2129
      %2131 = vrot.lane.b32.xlu0 %v1792, 16
      %v2132 = vpop.permute.xlu0 %2131
      %2133 = vrot.lane.b32.xlu0 %v1794, 16
      %v2134 = vpop.permute.xlu0 %2133
      %2135 = vrot.lane.b32.xlu0 %v1796, 16
      %v2136 = vpop.permute.xlu0 %2135
      %2137 = vrot.lane.b32.xlu0 %v1798, 16
      %v2138 = vpop.permute.xlu0 %2137
      %2139 = vrot.lane.b32.xlu0 %v1842, 16
      %v2140 = vpop.permute.xlu0 %2139
      %2141 = vrot.lane.b32.xlu0 %v1801, 16
      %v2142 = vpop.permute.xlu0 %2141
      %2143 = vrot.lane.b32.xlu0 %v1803, 16
      %v2144 = vpop.permute.xlu0 %2143
      %2145 = vrot.lane.b32.xlu0 %v1805, 16
      %v2146 = vpop.permute.xlu0 %2145
      %2147 = vrot.lane.b32.xlu0 %v1807, 16
      %v2148 = vpop.permute.xlu0 %2147
      %2149 = vrot.lane.b32.xlu0 %v1809, 16
      %v2150 = vpop.permute.xlu0 %2149
      %2151 = vrot.lane.b32.xlu0 %v1811, 16
      %v2152 = vpop.permute.xlu0 %2151
      %2153 = vrot.lane.b32.xlu0 %v1813, 16
      %v2154 = vpop.permute.xlu0 %2153
      %2155 = vrot.lane.b32.xlu0 %v1843, 16
      %v2156 = vpop.permute.xlu0 %2155
      %2157 = vrot.lane.b32.xlu0 %v1816, 16
      %v2158 = vpop.permute.xlu0 %2157
      %2159 = vrot.lane.b32.xlu0 %v1818, 16
      %v2160 = vpop.permute.xlu0 %2159
      %2161 = vrot.lane.b32.xlu0 %v1820, 16
      %v2162 = vpop.permute.xlu0 %2161
      %2163 = vrot.lane.b32.xlu0 %v1822, 16
      %v2164 = vpop.permute.xlu0 %2163
      %2165 = vrot.lane.b32.xlu0 %v1824, 16
      %v2166 = vpop.permute.xlu0 %2165
      %2167 = vrot.lane.b32.xlu0 %v1826, 16
      %v2168 = vpop.permute.xlu0 %2167
      %2169 = vrot.lane.b32.xlu0 %v1828, 16
      %v2170 = vpop.permute.xlu0 %2169
      %2171 = vrot.lane.b32.xlu0 %v1844, 16
      %v2172 = vpop.permute.xlu0 %2171
      %v2237 = vsel %vm999, %v1700, %v1846
      %v2238 = vsel %vm999, %v1518, %v1848
      %v2239 = vsel %vm999, %v1520, %v1850
      %v2240 = vsel %vm999, %v1522, %v1852
      %v2241 = vsel %vm999, %v1524, %v1854
      %v2242 = vsel %vm999, %v1526, %v1856
      %v2243 = vsel %vm999, %v1528, %v1858
      %v2244 = vsel %vm999, %v1530, %v1860
      %v2245 = vsel %vm999, %v1701, %v1862
      %v2246 = vsel %vm999, %v1533, %v1864
      %v2247 = vsel %vm999, %v1535, %v1866
      %v2248 = vsel %vm999, %v1537, %v1868
      %v2249 = vsel %vm999, %v1539, %v1870
      %v2250 = vsel %vm999, %v1541, %v1872
      %v2251 = vsel %vm999, %v1543, %v1874
      %v2252 = vsel %vm999, %v1545, %v1876
      %v2253 = vsel %vm999, %v1702, %v1878
      %v2254 = vsel %vm999, %v1548, %v1880
      %v2255 = vsel %vm999, %v1550, %v1882
      %v2256 = vsel %vm999, %v1552, %v1884
      %v2257 = vsel %vm999, %v1554, %v1886
      %v2258 = vsel %vm999, %v1556, %v1888
      %v2259 = vsel %vm999, %v1558, %v1890
      %v2260 = vsel %vm999, %v1560, %v1892
      %v2261 = vsel %vm999, %v1703, %v1894
      %v2262 = vsel %vm999, %v1563, %v1896
      %v2263 = vsel %vm999, %v1565, %v1898
      %v2264 = vsel %vm999, %v1567, %v1900
      %v2265 = vsel %vm999, %v1569, %v1902
      %v2266 = vsel %vm999, %v1571, %v1904
      %v2267 = vsel %vm999, %v1573, %v1906
      %v2268 = vsel %vm999, %v1575, %v1908
      %v2269 = vsel %vm999, %v1704, %v1910
      %v2270 = vsel %vm999, %v1578, %v1912
      %v2271 = vsel %vm999, %v1580, %v1914
      %v2272 = vsel %vm999, %v1582, %v1916
      %v2273 = vsel %vm999, %v1584, %v1918
      %v2274 = vsel %vm999, %v1586, %v1920
      %v2275 = vsel %vm999, %v1588, %v1922
      %v2276 = vsel %vm999, %v1590, %v1924
      %v2277 = vsel %vm999, %v1705, %v1926
      %v2278 = vsel %vm999, %v1593, %v1928
      %v2279 = vsel %vm999, %v1595, %v1930
      %v2280 = vsel %vm999, %v1597, %v1932
      %v2281 = vsel %vm999, %v1599, %v1934
      %v2282 = vsel %vm999, %v1601, %v1936
      %v2283 = vsel %vm999, %v1603, %v1938
      %v2284 = vsel %vm999, %v1605, %v1940
      %v2285 = vsel %vm999, %v1706, %v1942
      %v2286 = vsel %vm999, %v1608, %v1944
      %v2287 = vsel %vm999, %v1610, %v1946
      %v2288 = vsel %vm999, %v1612, %v1948
      %v2289 = vsel %vm999, %v1614, %v1950
      %v2290 = vsel %vm999, %v1616, %v1952
      %v2291 = vsel %vm999, %v1618, %v1954
      %v2292 = vsel %vm999, %v1620, %v1956
      %v2293 = vsel %vm999, %v1707, %v1958
      %v2294 = vsel %vm999, %v1623, %v1960
      %v2295 = vsel %vm999, %v1625, %v1962
      %v2296 = vsel %vm999, %v1627, %v1964
      %v2297 = vsel %vm999, %v1629, %v1966
      %v2298 = vsel %vm999, %v1631, %v1968
      %v2299 = vsel %vm999, %v1633, %v1970
      %v2300 = vsel %vm999, %v1635, %v1972
      %vm2301 = vcmask 130048
      %v2302 = vsel %vm2301, %v2237, %v2046
      %v2303 = vsel %vm2301, %v2238, %v2048
      %v2304 = vsel %vm2301, %v2239, %v2050
      %v2305 = vsel %vm2301, %v2240, %v2052
      %v2306 = vsel %vm2301, %v2241, %v2054
      %v2307 = vsel %vm2301, %v2242, %v2056
      %v2308 = vsel %vm2301, %v2243, %v2058
      %v2309 = vsel %vm2301, %v2244, %v2060
      %v2310 = vsel %vm2301, %v2245, %v2062
      %v2311 = vsel %vm2301, %v2246, %v2064
      %v2312 = vsel %vm2301, %v2247, %v2066
      %v2313 = vsel %vm2301, %v2248, %v2068
      %v2314 = vsel %vm2301, %v2249, %v2070
      %v2315 = vsel %vm2301, %v2250, %v2072
      %v2316 = vsel %vm2301, %v2251, %v2074
      %v2317 = vsel %vm2301, %v2252, %v2076
      %v2318 = vsel %vm2301, %v2253, %v2078
      %v2319 = vsel %vm2301, %v2254, %v2080
      %v2320 = vsel %vm2301, %v2255, %v2082
      %v2321 = vsel %vm2301, %v2256, %v2084
      %v2322 = vsel %vm2301, %v2257, %v2086
      %v2323 = vsel %vm2301, %v2258, %v2088
      %v2324 = vsel %vm2301, %v2259, %v2090
      %v2325 = vsel %vm2301, %v2260, %v2092
      %v2326 = vsel %vm2301, %v2261, %v2094
      %v2327 = vsel %vm2301, %v2262, %v2096
      %v2328 = vsel %vm2301, %v2263, %v2098
      %v2329 = vsel %vm2301, %v2264, %v2100
      %v2330 = vsel %vm2301, %v2265, %v2102
      %v2331 = vsel %vm2301, %v2266, %v2104
      %v2332 = vsel %vm2301, %v2267, %v2106
      %v2333 = vsel %vm2301, %v2268, %v2108
      %v2334 = vsel %vm2301, %v2269, %v2110
      %v2335 = vsel %vm2301, %v2270, %v2112
      %v2336 = vsel %vm2301, %v2271, %v2114
      %v2337 = vsel %vm2301, %v2272, %v2116
      %v2338 = vsel %vm2301, %v2273, %v2118
      %v2339 = vsel %vm2301, %v2274, %v2120
      %v2340 = vsel %vm2301, %v2275, %v2122
      %v2341 = vsel %vm2301, %v2276, %v2124
      %v2342 = vsel %vm2301, %v2277, %v2126
      %v2343 = vsel %vm2301, %v2278, %v2128
      %v2344 = vsel %vm2301, %v2279, %v2130
      %v2345 = vsel %vm2301, %v2280, %v2132
      %v2346 = vsel %vm2301, %v2281, %v2134
      %v2347 = vsel %vm2301, %v2282, %v2136
      %v2348 = vsel %vm2301, %v2283, %v2138
      %v2349 = vsel %vm2301, %v2284, %v2140
      %v2350 = vsel %vm2301, %v2285, %v2142
      %v2351 = vsel %vm2301, %v2286, %v2144
      %v2352 = vsel %vm2301, %v2287, %v2146
      %v2353 = vsel %vm2301, %v2288, %v2148
      %v2354 = vsel %vm2301, %v2289, %v2150
      %v2355 = vsel %vm2301, %v2290, %v2152
      %v2356 = vsel %vm2301, %v2291, %v2154
      %v2357 = vsel %vm2301, %v2292, %v2156
      %v2358 = vsel %vm2301, %v2293, %v2158
      %v2359 = vsel %vm2301, %v2294, %v2160
      %v2360 = vsel %vm2301, %v2295, %v2162
      %v2361 = vsel %vm2301, %v2296, %v2164
      %v2362 = vsel %vm2301, %v2297, %v2166
      %v2363 = vsel %vm2301, %v2298, %v2168
      %v2364 = vsel %vm2301, %v2299, %v2170
      %v2365 = vsel %vm2301, %v2300, %v2172
      %v2367 = vlaneseq
      %v2368 = vshrl.u32 %v2367, 7
      %v2369 = vsub.s32 0, %v2368
      %v2370 = vrot.slane %v1450, %v2369
      %vm2372 = vcmask 195584
      %v2374 = vsel %vm2372, %v2302, 0
      %v2377 = vsel %vm2372, %v2303, 0
      %v2380 = vsel %vm2372, %v2304, 0
      %v2383 = vsel %vm2372, %v2305, 0
      %v2386 = vsel %vm2372, %v2306, 0
      %v2389 = vsel %vm2372, %v2307, 0
      %v2392 = vsel %vm2372, %v2308, 0
      %v2395 = vsel %vm2372, %v2309, 0
      %v2398 = vsel %vm2372, %v2310, 0
      %v2401 = vsel %vm2372, %v2311, 0
      %v2404 = vsel %vm2372, %v2312, 0
      %v2407 = vsel %vm2372, %v2313, 0
      %v2410 = vsel %vm2372, %v2314, 0
      %v2413 = vsel %vm2372, %v2315, 0
      %v2416 = vsel %vm2372, %v2316, 0
      %v2419 = vsel %vm2372, %v2317, 0
      %v2422 = vsel %vm2372, %v2318, 0
      %v2425 = vsel %vm2372, %v2319, 0
      %v2428 = vsel %vm2372, %v2320, 0
      %v2431 = vsel %vm2372, %v2321, 0
      %v2434 = vsel %vm2372, %v2322, 0
      %v2437 = vsel %vm2372, %v2323, 0
      %v2440 = vsel %vm2372, %v2324, 0
      %v2443 = vsel %vm2372, %v2325, 0
      %v2446 = vsel %vm2372, %v2326, 0
      %v2449 = vsel %vm2372, %v2327, 0
      %v2452 = vsel %vm2372, %v2328, 0
      %v2455 = vsel %vm2372, %v2329, 0
      %v2458 = vsel %vm2372, %v2330, 0
      %v2461 = vsel %vm2372, %v2331, 0
      %v2464 = vsel %vm2372, %v2332, 0
      %v2467 = vsel %vm2372, %v2333, 0
      %v2470 = vsel %vm2372, %v2334, 0
      %v2473 = vsel %vm2372, %v2335, 0
      %v2476 = vsel %vm2372, %v2336, 0
      %v2479 = vsel %vm2372, %v2337, 0
      %v2482 = vsel %vm2372, %v2338, 0
      %v2485 = vsel %vm2372, %v2339, 0
      %v2488 = vsel %vm2372, %v2340, 0
      %v2491 = vsel %vm2372, %v2341, 0
      %v2494 = vsel %vm2372, %v2342, 0
      %v2497 = vsel %vm2372, %v2343, 0
      %v2500 = vsel %vm2372, %v2344, 0
      %v2503 = vsel %vm2372, %v2345, 0
      %v2506 = vsel %vm2372, %v2346, 0
      %v2509 = vsel %vm2372, %v2347, 0
      %v2512 = vsel %vm2372, %v2348, 0
      %v2515 = vsel %vm2372, %v2349, 0
      %v2518 = vsel %vm2372, %v2350, 0
      %v2521 = vsel %vm2372, %v2351, 0
      %v2524 = vsel %vm2372, %v2352, 0
      %v2527 = vsel %vm2372, %v2353, 0
      %v2530 = vsel %vm2372, %v2354, 0
      %v2533 = vsel %vm2372, %v2355, 0
      %v2536 = vsel %vm2372, %v2356, 0
      %v2539 = vsel %vm2372, %v2357, 0
      %v2542 = vsel %vm2372, %v2358, 0
      %v2545 = vsel %vm2372, %v2359, 0
      %v2548 = vsel %vm2372, %v2360, 0
      %v2551 = vsel %vm2372, %v2361, 0
      %v2554 = vsel %vm2372, %v2362, 0
      %v2557 = vsel %vm2372, %v2363, 0
      %v2560 = vsel %vm2372, %v2364, 0
      %v2563 = vsel %vm2372, %v2365, 0
      %2565 = vmatprep.subr.mxu0 0.0
      %2566 = vmatpush1.msra.mxu0 %v1447
      %2567 = vmatprep.subr.mxu0 0.0
      %2568 = vmatpush1.msra.mxu0 %v1448
      %2569 = vmatprep.subr.mxu0 0.0
      %2570 = vmatpush1.msra.mxu0 %v1449
      %2571 = vmatprep.subr.mxu0 0.0
      %2572 = vmatpush1.msra.mxu0 0.0
      %2573 = vmatprep.subr.mxu0 0.0
      %2574 = vmatpush1.msra.mxu0 0.0
      %2575 = vmatprep.subr.mxu0 0.0
      %2576 = vmatpush1.msra.mxu0 0.0
      %2577 = vmatprep.subr.mxu0 0.0
      %2578 = vmatpush1.msra.mxu0 0.0
      %2579 = vmatprep.subr.mxu0 0.0
      %2580 = vmatpush1.msra.mxu0 0.0
      %2581 = vmatprep.subr.mxu0 0.0
      %2582 = vmatpush1.msra.mxu0 0.0
      %2583 = vmatprep.subr.mxu0 0.0
      %2584 = vmatpush1.msra.mxu0 0.0
      %2585 = vmatprep.subr.mxu0 0.0
      %2586 = vmatpush1.msra.mxu0 0.0
      %2587 = vmatprep.subr.mxu0 0.0
      %2588 = vmatpush1.msra.mxu0 0.0
      %2589 = vmatprep.subr.mxu0 0.0
      %2590 = vmatpush1.msra.mxu0 0.0
      %2591 = vmatprep.subr.mxu0 0.0
      %2592 = vmatpush1.msra.mxu0 0.0
      %2593 = vmatprep.subr.mxu0 0.0
      %2594 = vmatpush1.msra.mxu0 0.0
      %2595 = vmatprep.subr.mxu0 0.0
      %2596 = vmatpush1.msra.mxu0 0.0
      %2597 = vmatprep.subr.mxu0 0.0
      %2598 = vmatpush1.msra.mxu0 0.0
      %2599 = vmatprep.subr.mxu0 0.0
      %2600 = vmatpush1.msra.mxu0 0.0
      %2601 = vmatprep.subr.mxu0 0.0
      %2602 = vmatpush1.msra.mxu0 0.0
      %2603 = vmatprep.subr.mxu0 0.0
      %2604 = vmatpush1.msra.mxu0 0.0
      %2605 = vmatprep.subr.mxu0 0.0
      %2606 = vmatpush1.msra.mxu0 0.0
      %2607 = vmatprep.subr.mxu0 0.0
      %2608 = vmatpush1.msra.mxu0 0.0
      %2609 = vmatprep.subr.mxu0 0.0
      %2610 = vmatpush1.msra.mxu0 0.0
      %2611 = vmatprep.subr.mxu0 0.0
      %2612 = vmatpush1.msra.mxu0 0.0
      %2613 = vmatprep.subr.mxu0 0.0
      %2614 = vmatpush1.msra.mxu0 0.0
      %2615 = vmatprep.subr.mxu0 0.0
      %2616 = vmatpush1.msra.mxu0 0.0
      %2617 = vmatprep.subr.mxu0 0.0
      %2618 = vmatpush1.msra.mxu0 0.0
      %2619 = vmatprep.subr.mxu0 0.0
      %2620 = vmatpush1.msra.mxu0 0.0
      %2621 = vmatprep.subr.mxu0 0.0
      %2622 = vmatpush1.msra.mxu0 0.0
      %2623 = vmatprep.subr.mxu0 0.0
      %2624 = vmatpush1.msra.mxu0 0.0
      %2625 = vmatprep.subr.mxu0 0.0
      %2626 = vmatpush1.msra.mxu0 0.0
      %2627 = vmatprep.subr.mxu0 0.0
      %2628 = vmatpush1.msra.mxu0 0.0
      %2629 = vmatprep.mubr.f32.mxu0 0.0
      %2630 = vmatmul.mubr.f32.gmra.mrb[0].mxu0 %v2374
      %v2631 = vpop.f32.mrb[0].mxu0
      %v2632 = vadd.f32 %v2370, %v2631
      %v2633 = vpop.f32.mrb[0].mxu0
      %2634 = vmatprep.mubr.f32.mxu0 0.0
      %2635 = vmatmul.mubr.f32.gmra.mrb[0].mxu0 %v2377
      %v2636 = vpop.f32.mrb[0].mxu0
      %v2637 = vadd.f32 %v2370, %v2636
      %v2638 = vpop.f32.mrb[0].mxu0
      %2639 = vmatprep.mubr.f32.mxu0 0.0
      %2640 = vmatmul.mubr.f32.gmra.mrb[0].mxu0 %v2380
      %v2641 = vpop.f32.mrb[0].mxu0
      %v2642 = vadd.f32 %v2370, %v2641
      %v2643 = vpop.f32.mrb[0].mxu0
      %2644 = vmatprep.mubr.f32.mxu0 0.0
      %2645 = vmatmul.mubr.f32.gmra.mrb[0].mxu0 %v2383
      %v2646 = vpop.f32.mrb[0].mxu0
      %v2647 = vadd.f32 %v2370, %v2646
      %v2648 = vpop.f32.mrb[0].mxu0
      %2649 = vmatprep.mubr.f32.mxu0 0.0
      %2650 = vmatmul.mubr.f32.gmra.mrb[0].mxu0 %v2386
      %v2651 = vpop.f32.mrb[0].mxu0
      %v2652 = vadd.f32 %v2370, %v2651
      %v2653 = vpop.f32.mrb[0].mxu0
      %2654 = vmatprep.mubr.f32.mxu0 0.0
      %2655 = vmatmul.mubr.f32.gmra.mrb[0].mxu0 %v2389
      %v2656 = vpop.f32.mrb[0].mxu0
      %v2657 = vadd.f32 %v2370, %v2656
      %v2658 = vpop.f32.mrb[0].mxu0
      %2659 = vmatprep.mubr.f32.mxu0 0.0
      %2660 = vmatmul.mubr.f32.gmra.mrb[0].mxu0 %v2392
      %v2661 = vpop.f32.mrb[0].mxu0
      %v2662 = vadd.f32 %v2370, %v2661
      %v2663 = vpop.f32.mrb[0].mxu0
      %2664 = vmatprep.mubr.f32.mxu0 0.0
      %2665 = vmatmul.mubr.f32.gmra.mrb[0].mxu0 %v2395
      %v2666 = vpop.f32.mrb[0].mxu0
      %v2667 = vadd.f32 %v2370, %v2666
      %v2668 = vpop.f32.mrb[0].mxu0
      %2669 = vmatprep.mubr.f32.mxu0 0.0
      %2670 = vmatmul.mubr.f32.gmra.mrb[0].mxu0 %v2398
      %v2671 = vpop.f32.mrb[0].mxu0
      %v2672 = vadd.f32 %v2370, %v2671
      %v2673 = vpop.f32.mrb[0].mxu0
      %2674 = vmatprep.mubr.f32.mxu0 0.0
      %2675 = vmatmul.mubr.f32.gmra.mrb[0].mxu0 %v2401
      %v2676 = vpop.f32.mrb[0].mxu0
      %v2677 = vadd.f32 %v2370, %v2676
      %v2678 = vpop.f32.mrb[0].mxu0
      %2679 = vmatprep.mubr.f32.mxu0 0.0
      %2680 = vmatmul.mubr.f32.gmra.mrb[0].mxu0 %v2404
      %v2681 = vpop.f32.mrb[0].mxu0
      %v2682 = vadd.f32 %v2370, %v2681
      %v2683 = vpop.f32.mrb[0].mxu0
      %2684 = vmatprep.mubr.f32.mxu0 0.0
      %2685 = vmatmul.mubr.f32.gmra.mrb[0].mxu0 %v2407
      %v2686 = vpop.f32.mrb[0].mxu0
      %v2687 = vadd.f32 %v2370, %v2686
      %v2688 = vpop.f32.mrb[0].mxu0
      %2689 = vmatprep.mubr.f32.mxu0 0.0
      %2690 = vmatmul.mubr.f32.gmra.mrb[0].mxu0 %v2410
      %v2691 = vpop.f32.mrb[0].mxu0
      %v2692 = vadd.f32 %v2370, %v2691
      %v2693 = vpop.f32.mrb[0].mxu0
      %2694 = vmatprep.mubr.f32.mxu0 0.0
      %2695 = vmatmul.mubr.f32.gmra.mrb[0].mxu0 %v2413
      %v2696 = vpop.f32.mrb[0].mxu0
      %v2697 = vadd.f32 %v2370, %v2696
      %v2698 = vpop.f32.mrb[0].mxu0
      %2699 = vmatprep.mubr.f32.mxu0 0.0
      %2700 = vmatmul.mubr.f32.gmra.mrb[0].mxu0 %v2416
      %v2701 = vpop.f32.mrb[0].mxu0
      %v2702 = vadd.f32 %v2370, %v2701
      %v2703 = vpop.f32.mrb[0].mxu0
      %2704 = vmatprep.mubr.f32.mxu0 0.0
      %2705 = vmatmul.mubr.f32.gmra.mrb[0].mxu0 %v2419
      %v2706 = vpop.f32.mrb[0].mxu0
      %v2707 = vadd.f32 %v2370, %v2706
      %v2708 = vpop.f32.mrb[0].mxu0
      %2709 = vmatprep.mubr.f32.mxu0 0.0
      %2710 = vmatmul.mubr.f32.gmra.mrb[0].mxu0 %v2422
      %v2711 = vpop.f32.mrb[0].mxu0
      %v2712 = vadd.f32 %v2370, %v2711
      %v2713 = vpop.f32.mrb[0].mxu0
      %2714 = vmatprep.mubr.f32.mxu0 0.0
      %2715 = vmatmul.mubr.f32.gmra.mrb[0].mxu0 %v2425
      %v2716 = vpop.f32.mrb[0].mxu0
      %v2717 = vadd.f32 %v2370, %v2716
      %v2718 = vpop.f32.mrb[0].mxu0
      %2719 = vmatprep.mubr.f32.mxu0 0.0
      %2720 = vmatmul.mubr.f32.gmra.mrb[0].mxu0 %v2428
      %v2721 = vpop.f32.mrb[0].mxu0
      %v2722 = vadd.f32 %v2370, %v2721
      %v2723 = vpop.f32.mrb[0].mxu0
      %2724 = vmatprep.mubr.f32.mxu0 0.0
      %2725 = vmatmul.mubr.f32.gmra.mrb[0].mxu0 %v2431
      %v2726 = vpop.f32.mrb[0].mxu0
      %v2727 = vadd.f32 %v2370, %v2726
      %v2728 = vpop.f32.mrb[0].mxu0
      %2729 = vmatprep.mubr.f32.mxu0 0.0
      %2730 = vmatmul.mubr.f32.gmra.mrb[0].mxu0 %v2434
      %v2731 = vpop.f32.mrb[0].mxu0
      %v2732 = vadd.f32 %v2370, %v2731
      %v2733 = vpop.f32.mrb[0].mxu0
      %2734 = vmatprep.mubr.f32.mxu0 0.0
      %2735 = vmatmul.mubr.f32.gmra.mrb[0].mxu0 %v2437
      %v2736 = vpop.f32.mrb[0].mxu0
      %v2737 = vadd.f32 %v2370, %v2736
      %v2738 = vpop.f32.mrb[0].mxu0
      %2739 = vmatprep.mubr.f32.mxu0 0.0
      %2740 = vmatmul.mubr.f32.gmra.mrb[0].mxu0 %v2440
      %v2741 = vpop.f32.mrb[0].mxu0
      %v2742 = vadd.f32 %v2370, %v2741
      %v2743 = vpop.f32.mrb[0].mxu0
      %2744 = vmatprep.mubr.f32.mxu0 0.0
      %2745 = vmatmul.mubr.f32.gmra.mrb[0].mxu0 %v2443
      %v2746 = vpop.f32.mrb[0].mxu0
      %v2747 = vadd.f32 %v2370, %v2746
      %v2748 = vpop.f32.mrb[0].mxu0
      %2749 = vmatprep.mubr.f32.mxu0 0.0
      %2750 = vmatmul.mubr.f32.gmra.mrb[0].mxu0 %v2446
      %v2751 = vpop.f32.mrb[0].mxu0
      %v2752 = vadd.f32 %v2370, %v2751
      %v2753 = vpop.f32.mrb[0].mxu0
      %2754 = vmatprep.mubr.f32.mxu0 0.0
      %2755 = vmatmul.mubr.f32.gmra.mrb[0].mxu0 %v2449
      %v2756 = vpop.f32.mrb[0].mxu0
      %v2757 = vadd.f32 %v2370, %v2756
      %v2758 = vpop.f32.mrb[0].mxu0
      %2759 = vmatprep.mubr.f32.mxu0 0.0
      %2760 = vmatmul.mubr.f32.gmra.mrb[0].mxu0 %v2452
      %v2761 = vpop.f32.mrb[0].mxu0
      %v2762 = vadd.f32 %v2370, %v2761
      %v2763 = vpop.f32.mrb[0].mxu0
      %2764 = vmatprep.mubr.f32.mxu0 0.0
      %2765 = vmatmul.mubr.f32.gmra.mrb[0].mxu0 %v2455
      %v2766 = vpop.f32.mrb[0].mxu0
      %v2767 = vadd.f32 %v2370, %v2766
      %v2768 = vpop.f32.mrb[0].mxu0
      %2769 = vmatprep.mubr.f32.mxu0 0.0
      %2770 = vmatmul.mubr.f32.gmra.mrb[0].mxu0 %v2458
      %v2771 = vpop.f32.mrb[0].mxu0
      %v2772 = vadd.f32 %v2370, %v2771
      %v2773 = vpop.f32.mrb[0].mxu0
      %2774 = vmatprep.mubr.f32.mxu0 0.0
      %2775 = vmatmul.mubr.f32.gmra.mrb[0].mxu0 %v2461
      %v2776 = vpop.f32.mrb[0].mxu0
      %v2777 = vadd.f32 %v2370, %v2776
      %v2778 = vpop.f32.mrb[0].mxu0
      %2779 = vmatprep.mubr.f32.mxu0 0.0
      %2780 = vmatmul.mubr.f32.gmra.mrb[0].mxu0 %v2464
      %v2781 = vpop.f32.mrb[0].mxu0
      %v2782 = vadd.f32 %v2370, %v2781
      %v2783 = vpop.f32.mrb[0].mxu0
      %2784 = vmatprep.mubr.f32.mxu0 0.0
      %2785 = vmatmul.mubr.f32.gmra.mrb[0].mxu0 %v2467
      %v2786 = vpop.f32.mrb[0].mxu0
      %v2787 = vadd.f32 %v2370, %v2786
      %v2788 = vpop.f32.mrb[0].mxu0
      %2789 = vmatprep.mubr.f32.mxu0 0.0
      %2790 = vmatmul.mubr.f32.gmra.mrb[0].mxu0 %v2470
      %v2791 = vpop.f32.mrb[0].mxu0
      %v2792 = vadd.f32 %v2370, %v2791
      %v2793 = vpop.f32.mrb[0].mxu0
      %2794 = vmatprep.mubr.f32.mxu0 0.0
      %2795 = vmatmul.mubr.f32.gmra.mrb[0].mxu0 %v2473
      %v2796 = vpop.f32.mrb[0].mxu0
      %v2797 = vadd.f32 %v2370, %v2796
      %v2798 = vpop.f32.mrb[0].mxu0
      %2799 = vmatprep.mubr.f32.mxu0 0.0
      %2800 = vmatmul.mubr.f32.gmra.mrb[0].mxu0 %v2476
      %v2801 = vpop.f32.mrb[0].mxu0
      %v2802 = vadd.f32 %v2370, %v2801
      %v2803 = vpop.f32.mrb[0].mxu0
      %2804 = vmatprep.mubr.f32.mxu0 0.0
      %2805 = vmatmul.mubr.f32.gmra.mrb[0].mxu0 %v2479
      %v2806 = vpop.f32.mrb[0].mxu0
      %v2807 = vadd.f32 %v2370, %v2806
      %v2808 = vpop.f32.mrb[0].mxu0
      %2809 = vmatprep.mubr.f32.mxu0 0.0
      %2810 = vmatmul.mubr.f32.gmra.mrb[0].mxu0 %v2482
      %v2811 = vpop.f32.mrb[0].mxu0
      %v2812 = vadd.f32 %v2370, %v2811
      %v2813 = vpop.f32.mrb[0].mxu0
      %2814 = vmatprep.mubr.f32.mxu0 0.0
      %2815 = vmatmul.mubr.f32.gmra.mrb[0].mxu0 %v2485
      %v2816 = vpop.f32.mrb[0].mxu0
      %v2817 = vadd.f32 %v2370, %v2816
      %v2818 = vpop.f32.mrb[0].mxu0
      %2819 = vmatprep.mubr.f32.mxu0 0.0
      %2820 = vmatmul.mubr.f32.gmra.mrb[0].mxu0 %v2488
      %v2821 = vpop.f32.mrb[0].mxu0
      %v2822 = vadd.f32 %v2370, %v2821
      %v2823 = vpop.f32.mrb[0].mxu0
      %2824 = vmatprep.mubr.f32.mxu0 0.0
      %2825 = vmatmul.mubr.f32.gmra.mrb[0].mxu0 %v2491
      %v2826 = vpop.f32.mrb[0].mxu0
      %v2827 = vadd.f32 %v2370, %v2826
      %v2828 = vpop.f32.mrb[0].mxu0
      %2829 = vmatprep.mubr.f32.mxu0 0.0
      %2830 = vmatmul.mubr.f32.gmra.mrb[0].mxu0 %v2494
      %v2831 = vpop.f32.mrb[0].mxu0
      %v2832 = vadd.f32 %v2370, %v2831
      %v2833 = vpop.f32.mrb[0].mxu0
      %2834 = vmatprep.mubr.f32.mxu0 0.0
      %2835 = vmatmul.mubr.f32.gmra.mrb[0].mxu0 %v2497
      %v2836 = vpop.f32.mrb[0].mxu0
      %v2837 = vadd.f32 %v2370, %v2836
      %v2838 = vpop.f32.mrb[0].mxu0
      %2839 = vmatprep.mubr.f32.mxu0 0.0
      %2840 = vmatmul.mubr.f32.gmra.mrb[0].mxu0 %v2500
      %v2841 = vpop.f32.mrb[0].mxu0
      %v2842 = vadd.f32 %v2370, %v2841
      %v2843 = vpop.f32.mrb[0].mxu0
      %2844 = vmatprep.mubr.f32.mxu0 0.0
      %2845 = vmatmul.mubr.f32.gmra.mrb[0].mxu0 %v2503
      %v2846 = vpop.f32.mrb[0].mxu0
      %v2847 = vadd.f32 %v2370, %v2846
      %v2848 = vpop.f32.mrb[0].mxu0
      %2849 = vmatprep.mubr.f32.mxu0 0.0
      %2850 = vmatmul.mubr.f32.gmra.mrb[0].mxu0 %v2506
      %v2851 = vpop.f32.mrb[0].mxu0
      %v2852 = vadd.f32 %v2370, %v2851
      %v2853 = vpop.f32.mrb[0].mxu0
      %2854 = vmatprep.mubr.f32.mxu0 0.0
      %2855 = vmatmul.mubr.f32.gmra.mrb[0].mxu0 %v2509
      %v2856 = vpop.f32.mrb[0].mxu0
      %v2857 = vadd.f32 %v2370, %v2856
      %v2858 = vpop.f32.mrb[0].mxu0
      %2859 = vmatprep.mubr.f32.mxu0 0.0
      %2860 = vmatmul.mubr.f32.gmra.mrb[0].mxu0 %v2512
      %v2861 = vpop.f32.mrb[0].mxu0
      %v2862 = vadd.f32 %v2370, %v2861
      %v2863 = vpop.f32.mrb[0].mxu0
      %2864 = vmatprep.mubr.f32.mxu0 0.0
      %2865 = vmatmul.mubr.f32.gmra.mrb[0].mxu0 %v2515
      %v2866 = vpop.f32.mrb[0].mxu0
      %v2867 = vadd.f32 %v2370, %v2866
      %v2868 = vpop.f32.mrb[0].mxu0
      %2869 = vmatprep.mubr.f32.mxu0 0.0
      %2870 = vmatmul.mubr.f32.gmra.mrb[0].mxu0 %v2518
      %v2871 = vpop.f32.mrb[0].mxu0
      %v2872 = vadd.f32 %v2370, %v2871
      %v2873 = vpop.f32.mrb[0].mxu0
      %2874 = vmatprep.mubr.f32.mxu0 0.0
      %2875 = vmatmul.mubr.f32.gmra.mrb[0].mxu0 %v2521
      %v2876 = vpop.f32.mrb[0].mxu0
      %v2877 = vadd.f32 %v2370, %v2876
      %v2878 = vpop.f32.mrb[0].mxu0
      %2879 = vmatprep.mubr.f32.mxu0 0.0
      %2880 = vmatmul.mubr.f32.gmra.mrb[0].mxu0 %v2524
      %v2881 = vpop.f32.mrb[0].mxu0
      %v2882 = vadd.f32 %v2370, %v2881
      %v2883 = vpop.f32.mrb[0].mxu0
      %2884 = vmatprep.mubr.f32.mxu0 0.0
      %2885 = vmatmul.mubr.f32.gmra.mrb[0].mxu0 %v2527
      %v2886 = vpop.f32.mrb[0].mxu0
      %v2887 = vadd.f32 %v2370, %v2886
      %v2888 = vpop.f32.mrb[0].mxu0
      %2889 = vmatprep.mubr.f32.mxu0 0.0
      %2890 = vmatmul.mubr.f32.gmra.mrb[0].mxu0 %v2530
      %v2891 = vpop.f32.mrb[0].mxu0
      %v2892 = vadd.f32 %v2370, %v2891
      %v2893 = vpop.f32.mrb[0].mxu0
      %2894 = vmatprep.mubr.f32.mxu0 0.0
      %2895 = vmatmul.mubr.f32.gmra.mrb[0].mxu0 %v2533
      %v2896 = vpop.f32.mrb[0].mxu0
      %v2897 = vadd.f32 %v2370, %v2896
      %v2898 = vpop.f32.mrb[0].mxu0
      %2899 = vmatprep.mubr.f32.mxu0 0.0
      %2900 = vmatmul.mubr.f32.gmra.mrb[0].mxu0 %v2536
      %v2901 = vpop.f32.mrb[0].mxu0
      %v2902 = vadd.f32 %v2370, %v2901
      %v2903 = vpop.f32.mrb[0].mxu0
      %2904 = vmatprep.mubr.f32.mxu0 0.0
      %2905 = vmatmul.mubr.f32.gmra.mrb[0].mxu0 %v2539
      %v2906 = vpop.f32.mrb[0].mxu0
      %v2907 = vadd.f32 %v2370, %v2906
      %v2908 = vpop.f32.mrb[0].mxu0
      %2909 = vmatprep.mubr.f32.mxu0 0.0
      %2910 = vmatmul.mubr.f32.gmra.mrb[0].mxu0 %v2542
      %v2911 = vpop.f32.mrb[0].mxu0
      %v2912 = vadd.f32 %v2370, %v2911
      %v2913 = vpop.f32.mrb[0].mxu0
      %2914 = vmatprep.mubr.f32.mxu0 0.0
      %2915 = vmatmul.mubr.f32.gmra.mrb[0].mxu0 %v2545
      %v2916 = vpop.f32.mrb[0].mxu0
      %v2917 = vadd.f32 %v2370, %v2916
      %v2918 = vpop.f32.mrb[0].mxu0
      %2919 = vmatprep.mubr.f32.mxu0 0.0
      %2920 = vmatmul.mubr.f32.gmra.mrb[0].mxu0 %v2548
      %v2921 = vpop.f32.mrb[0].mxu0
      %v2922 = vadd.f32 %v2370, %v2921
      %v2923 = vpop.f32.mrb[0].mxu0
      %2924 = vmatprep.mubr.f32.mxu0 0.0
      %2925 = vmatmul.mubr.f32.gmra.mrb[0].mxu0 %v2551
      %v2926 = vpop.f32.mrb[0].mxu0
      %v2927 = vadd.f32 %v2370, %v2926
      %v2928 = vpop.f32.mrb[0].mxu0
      %2929 = vmatprep.mubr.f32.mxu0 0.0
      %2930 = vmatmul.mubr.f32.gmra.mrb[0].mxu0 %v2554
      %v2931 = vpop.f32.mrb[0].mxu0
      %v2932 = vadd.f32 %v2370, %v2931
      %v2933 = vpop.f32.mrb[0].mxu0
      %2934 = vmatprep.mubr.f32.mxu0 0.0
      %2935 = vmatmul.mubr.f32.gmra.mrb[0].mxu0 %v2557
      %v2936 = vpop.f32.mrb[0].mxu0
      %v2937 = vadd.f32 %v2370, %v2936
      %v2938 = vpop.f32.mrb[0].mxu0
      %2939 = vmatprep.mubr.f32.mxu0 0.0
      %2940 = vmatmul.mubr.f32.gmra.mrb[0].mxu0 %v2560
      %v2941 = vpop.f32.mrb[0].mxu0
      %v2942 = vadd.f32 %v2370, %v2941
      %v2943 = vpop.f32.mrb[0].mxu0
      %2944 = vmatprep.mubr.f32.mxu0 0.0
      %2945 = vmatmul.mubr.f32.gmra.mrb[0].mxu0 %v2563
      %v2946 = vpop.f32.mrb[0].mxu0
      %v2947 = vadd.f32 %v2370, %v2946
      %v2948 = vpop.f32.mrb[0].mxu0
      %2949 = vdwg.mxu0
      %v2950 = vmax.f32 %v2632, 0.0
      %v2951 = vmax.f32 %v2637, 0.0
      %v2952 = vmax.f32 %v2642, 0.0
      %v2953 = vmax.f32 %v2647, 0.0
      %v2954 = vmax.f32 %v2652, 0.0
      %v2955 = vmax.f32 %v2657, 0.0
      %v2956 = vmax.f32 %v2662, 0.0
      %v2957 = vmax.f32 %v2667, 0.0
      %v2958 = vmax.f32 %v2672, 0.0
      %v2959 = vmax.f32 %v2677, 0.0
      %v2960 = vmax.f32 %v2682, 0.0
      %v2961 = vmax.f32 %v2687, 0.0
      %v2962 = vmax.f32 %v2692, 0.0
      %v2963 = vmax.f32 %v2697, 0.0
      %v2964 = vmax.f32 %v2702, 0.0
      %v2965 = vmax.f32 %v2707, 0.0
      %v2966 = vmax.f32 %v2712, 0.0
      %v2967 = vmax.f32 %v2717, 0.0
      %v2968 = vmax.f32 %v2722, 0.0
      %v2969 = vmax.f32 %v2727, 0.0
      %v2970 = vmax.f32 %v2732, 0.0
      %v2971 = vmax.f32 %v2737, 0.0
      %v2972 = vmax.f32 %v2742, 0.0
      %v2973 = vmax.f32 %v2747, 0.0
      %v2974 = vmax.f32 %v2752, 0.0
      %v2975 = vmax.f32 %v2757, 0.0
      %v2976 = vmax.f32 %v2762, 0.0
      %v2977 = vmax.f32 %v2767, 0.0
      %v2978 = vmax.f32 %v2772, 0.0
      %v2979 = vmax.f32 %v2777, 0.0
      %v2980 = vmax.f32 %v2782, 0.0
      %v2981 = vmax.f32 %v2787, 0.0
      %v2982 = vmax.f32 %v2792, 0.0
      %v2983 = vmax.f32 %v2797, 0.0
      %v2984 = vmax.f32 %v2802, 0.0
      %v2985 = vmax.f32 %v2807, 0.0
      %v2986 = vmax.f32 %v2812, 0.0
      %v2987 = vmax.f32 %v2817, 0.0
      %v2988 = vmax.f32 %v2822, 0.0
      %v2989 = vmax.f32 %v2827, 0.0
      %v2990 = vmax.f32 %v2832, 0.0
      %v2991 = vmax.f32 %v2837, 0.0
      %v2992 = vmax.f32 %v2842, 0.0
      %v2993 = vmax.f32 %v2847, 0.0
      %v2994 = vmax.f32 %v2852, 0.0
      %v2995 = vmax.f32 %v2857, 0.0
      %v2996 = vmax.f32 %v2862, 0.0
      %v2997 = vmax.f32 %v2867, 0.0
      %v2998 = vmax.f32 %v2872, 0.0
      %v2999 = vmax.f32 %v2877, 0.0
      %v3000 = vmax.f32 %v2882, 0.0
      %v3001 = vmax.f32 %v2887, 0.0
      %v3002 = vmax.f32 %v2892, 0.0
      %v3003 = vmax.f32 %v2897, 0.0
      %v3004 = vmax.f32 %v2902, 0.0
      %v3005 = vmax.f32 %v2907, 0.0
      %v3006 = vmax.f32 %v2912, 0.0
      %v3007 = vmax.f32 %v2917, 0.0
      %v3008 = vmax.f32 %v2922, 0.0
      %v3009 = vmax.f32 %v2927, 0.0
      %v3010 = vmax.f32 %v2932, 0.0
      %v3011 = vmax.f32 %v2937, 0.0
      %v3012 = vmax.f32 %v2942, 0.0
      %v3013 = vmax.f32 %v2947, 0.0
      %3014 = vst.msk [vmem:[#allocation3] sm:$0xff] %vm2301, %v2950
      %3015 = vst.msk [vmem:[#allocation3 + $0x8] sm:$0xff] %vm2301, %v2951
      %3016 = vst.msk [vmem:[#allocation3 + $0x10] sm:$0xff] %vm2301, %v2952
      %3017 = vst.msk [vmem:[#allocation3 + $0x18] sm:$0xff] %vm2301, %v2953
      %3018 = vst.msk [vmem:[#allocation3 + $0x20] sm:$0xff] %vm2301, %v2954
      %3019 = vst.msk [vmem:[#allocation3 + $0x28] sm:$0xff] %vm2301, %v2955
      %3020 = vst.msk [vmem:[#allocation3 + $0x30] sm:$0xff] %vm2301, %v2956
      %3021 = vst.msk [vmem:[#allocation3 + $0x38] sm:$0xff] %vm2301, %v2957
      %3022 = vst.msk [vmem:[#allocation3 + $0x40] sm:$0xff] %vm2301, %v2958
      %3023 = vst.msk [vmem:[#allocation3 + $0x48] sm:$0xff] %vm2301, %v2959
      %3024 = vst.msk [vmem:[#allocation3 + $0x50] sm:$0xff] %vm2301, %v2960
      %3025 = vst.msk [vmem:[#allocation3 + $0x58] sm:$0xff] %vm2301, %v2961
      %3026 = vst.msk [vmem:[#allocation3 + $0x60] sm:$0xff] %vm2301, %v2962
      %3027 = vst.msk [vmem:[#allocation3 + $0x68] sm:$0xff] %vm2301, %v2963
      %3028 = vst.msk [vmem:[#allocation3 + $0x70] sm:$0xff] %vm2301, %v2964
      %3029 = vst.msk [vmem:[#allocation3 + $0x78] sm:$0xff] %vm2301, %v2965
      %3030 = vst.msk [vmem:[#allocation3 + $0x80] sm:$0xff] %vm2301, %v2966
      %3031 = vst.msk [vmem:[#allocation3 + $0x88] sm:$0xff] %vm2301, %v2967
      %3032 = vst.msk [vmem:[#allocation3 + $0x90] sm:$0xff] %vm2301, %v2968
      %3033 = vst.msk [vmem:[#allocation3 + $0x98] sm:$0xff] %vm2301, %v2969
      %3034 = vst.msk [vmem:[#allocation3 + $0xa0] sm:$0xff] %vm2301, %v2970
      %3035 = vst.msk [vmem:[#allocation3 + $0xa8] sm:$0xff] %vm2301, %v2971
      %3036 = vst.msk [vmem:[#allocation3 + $0xb0] sm:$0xff] %vm2301, %v2972
      %3037 = vst.msk [vmem:[#allocation3 + $0xb8] sm:$0xff] %vm2301, %v2973
      %3038 = vst.msk [vmem:[#allocation3 + $0xc0] sm:$0xff] %vm2301, %v2974
      %3039 = vst.msk [vmem:[#allocation3 + $0xc8] sm:$0xff] %vm2301, %v2975
      %3040 = vst.msk [vmem:[#allocation3 + $0xd0] sm:$0xff] %vm2301, %v2976
      %3041 = vst.msk [vmem:[#allocation3 + $0xd8] sm:$0xff] %vm2301, %v2977
      %3042 = vst.msk [vmem:[#allocation3 + $0xe0] sm:$0xff] %vm2301, %v2978
      %3043 = vst.msk [vmem:[#allocation3 + $0xe8] sm:$0xff] %vm2301, %v2979
      %3044 = vst.msk [vmem:[#allocation3 + $0xf0] sm:$0xff] %vm2301, %v2980
      %3045 = vst.msk [vmem:[#allocation3 + $0xf8] sm:$0xff] %vm2301, %v2981
      %3046 = vst.msk [vmem:[#allocation3 + $0x100] sm:$0xff] %vm2301, %v2982
      %3047 = vst.msk [vmem:[#allocation3 + $0x108] sm:$0xff] %vm2301, %v2983
      %3048 = vst.msk [vmem:[#allocation3 + $0x110] sm:$0xff] %vm2301, %v2984
      %3049 = vst.msk [vmem:[#allocation3 + $0x118] sm:$0xff] %vm2301, %v2985
      %3050 = vst.msk [vmem:[#allocation3 + $0x120] sm:$0xff] %vm2301, %v2986
      %3051 = vst.msk [vmem:[#allocation3 + $0x128] sm:$0xff] %vm2301, %v2987
      %3052 = vst.msk [vmem:[#allocation3 + $0x130] sm:$0xff] %vm2301, %v2988
      %3053 = vst.msk [vmem:[#allocation3 + $0x138] sm:$0xff] %vm2301, %v2989
      %3054 = vst.msk [vmem:[#allocation3 + $0x140] sm:$0xff] %vm2301, %v2990
      %3055 = vst.msk [vmem:[#allocation3 + $0x148] sm:$0xff] %vm2301, %v2991
      %3056 = vst.msk [vmem:[#allocation3 + $0x150] sm:$0xff] %vm2301, %v2992
      %3057 = vst.msk [vmem:[#allocation3 + $0x158] sm:$0xff] %vm2301, %v2993
      %3058 = vst.msk [vmem:[#allocation3 + $0x160] sm:$0xff] %vm2301, %v2994
      %3059 = vst.msk [vmem:[#allocation3 + $0x168] sm:$0xff] %vm2301, %v2995
      %3060 = vst.msk [vmem:[#allocation3 + $0x170] sm:$0xff] %vm2301, %v2996
      %3061 = vst.msk [vmem:[#allocation3 + $0x178] sm:$0xff] %vm2301, %v2997
      %3062 = vst.msk [vmem:[#allocation3 + $0x180] sm:$0xff] %vm2301, %v2998
      %3063 = vst.msk [vmem:[#allocation3 + $0x188] sm:$0xff] %vm2301, %v2999
      %3064 = vst.msk [vmem:[#allocation3 + $0x190] sm:$0xff] %vm2301, %v3000
      %3065 = vst.msk [vmem:[#allocation3 + $0x198] sm:$0xff] %vm2301, %v3001
      %3066 = vst.msk [vmem:[#allocation3 + $0x1a0] sm:$0xff] %vm2301, %v3002
      %3067 = vst.msk [vmem:[#allocation3 + $0x1a8] sm:$0xff] %vm2301, %v3003
      %3068 = vst.msk [vmem:[#allocation3 + $0x1b0] sm:$0xff] %vm2301, %v3004
      %3069 = vst.msk [vmem:[#allocation3 + $0x1b8] sm:$0xff] %vm2301, %v3005
      %3070 = vst.msk [vmem:[#allocation3 + $0x1c0] sm:$0xff] %vm2301, %v3006
      %3071 = vst.msk [vmem:[#allocation3 + $0x1c8] sm:$0xff] %vm2301, %v3007
      %3072 = vst.msk [vmem:[#allocation3 + $0x1d0] sm:$0xff] %vm2301, %v3008
      %3073 = vst.msk [vmem:[#allocation3 + $0x1d8] sm:$0xff] %vm2301, %v3009
      %3074 = vst.msk [vmem:[#allocation3 + $0x1e0] sm:$0xff] %vm2301, %v3010
      %3075 = vst.msk [vmem:[#allocation3 + $0x1e8] sm:$0xff] %vm2301, %v3011
      %3076 = vst.msk [vmem:[#allocation3 + $0x1f0] sm:$0xff] %vm2301, %v3012
      %3077 = vst.msk [vmem:[#allocation3 + $0x1f8] sm:$0xff] %vm2301, %v3013
      %v3078 = vld [vmem:[#allocation3] ss:$2 sm:$0xff]
      %s3079 = scalar_lea.vmem [#allocation3], 16
      %v3080 = vld [vmem:[%s3079] ss:$2 sm:$0xff]
      %s3081 = scalar_lea.vmem [#allocation3], 32
      %v3082 = vld [vmem:[%s3081] ss:$2 sm:$0xff]
      %s3083 = scalar_lea.vmem [#allocation3], 48
      %v3084 = vld [vmem:[%s3083] ss:$2 sm:$0xff]
      %s3085 = scalar_lea.vmem [#allocation3], 64
      %v3086 = vld [vmem:[%s3085] ss:$2 sm:$0xff]
      %s3087 = scalar_lea.vmem [#allocation3], 80
      %v3088 = vld [vmem:[%s3087] ss:$2 sm:$0xff]
      %s3089 = scalar_lea.vmem [#allocation3], 96
      %v3090 = vld [vmem:[%s3089] ss:$2 sm:$0xff]
      %s3091 = scalar_lea.vmem [#allocation3], 112
      %v3092 = vld [vmem:[%s3091] ss:$2 sm:$0xff]
      %s3093 = scalar_lea.vmem [#allocation3], 128
      %v3094 = vld [vmem:[%s3093] ss:$2 sm:$0xff]
      %s3095 = scalar_lea.vmem [#allocation3], 144
      %v3096 = vld [vmem:[%s3095] ss:$2 sm:$0xff]
      %s3097 = scalar_lea.vmem [#allocation3], 160
      %v3098 = vld [vmem:[%s3097] ss:$2 sm:$0xff]
      %s3099 = scalar_lea.vmem [#allocation3], 176
      %v3100 = vld [vmem:[%s3099] ss:$2 sm:$0xff]
      %s3101 = scalar_lea.vmem [#allocation3], 192
      %v3102 = vld [vmem:[%s3101] ss:$2 sm:$0xff]
      %s3103 = scalar_lea.vmem [#allocation3], 208
      %v3104 = vld [vmem:[%s3103] ss:$2 sm:$0xff]
      %s3105 = scalar_lea.vmem [#allocation3], 224
      %v3106 = vld [vmem:[%s3105] ss:$2 sm:$0xff]
      %s3107 = scalar_lea.vmem [#allocation3], 240
      %v3108 = vld [vmem:[%s3107] ss:$2 sm:$0xff]
      %s3109 = scalar_lea.vmem [#allocation3], 256
      %v3110 = vld [vmem:[%s3109] ss:$2 sm:$0xff]
      %s3111 = scalar_lea.vmem [#allocation3], 272
      %v3112 = vld [vmem:[%s3111] ss:$2 sm:$0xff]
      %s3113 = scalar_lea.vmem [#allocation3], 288
      %v3114 = vld [vmem:[%s3113] ss:$2 sm:$0xff]
      %s3115 = scalar_lea.vmem [#allocation3], 304
      %v3116 = vld [vmem:[%s3115] ss:$2 sm:$0xff]
      %s3117 = scalar_lea.vmem [#allocation3], 320
      %v3118 = vld [vmem:[%s3117] ss:$2 sm:$0xff]
      %s3119 = scalar_lea.vmem [#allocation3], 336
      %v3120 = vld [vmem:[%s3119] ss:$2 sm:$0xff]
      %s3121 = scalar_lea.vmem [#allocation3], 352
      %v3122 = vld [vmem:[%s3121] ss:$2 sm:$0xff]
      %s3123 = scalar_lea.vmem [#allocation3], 368
      %v3124 = vld [vmem:[%s3123] ss:$2 sm:$0xff]
      %s3125 = scalar_lea.vmem [#allocation3], 384
      %v3126 = vld [vmem:[%s3125] ss:$2 sm:$0xff]
      %s3127 = scalar_lea.vmem [#allocation3], 400
      %v3128 = vld [vmem:[%s3127] ss:$2 sm:$0xff]
      %s3129 = scalar_lea.vmem [#allocation3], 416
      %v3130 = vld [vmem:[%s3129] ss:$2 sm:$0xff]
      %s3131 = scalar_lea.vmem [#allocation3], 432
      %v3132 = vld [vmem:[%s3131] ss:$2 sm:$0xff]
      %s3133 = scalar_lea.vmem [#allocation3], 448
      %v3134 = vld [vmem:[%s3133] ss:$2 sm:$0xff]
      %s3135 = scalar_lea.vmem [#allocation3], 464
      %v3136 = vld [vmem:[%s3135] ss:$2 sm:$0xff]
      %s3137 = scalar_lea.vmem [#allocation3], 480
      %v3138 = vld [vmem:[%s3137] ss:$2 sm:$0xff]
      %s3139 = scalar_lea.vmem [#allocation3], 496
      %v3140 = vld [vmem:[%s3139] ss:$2 sm:$0xff]
      %s3141 = scalar_lea.vmem [#allocation3], 1
      %v3142 = vld [vmem:[%s3141] ss:$2 sm:$0xff]
      %s3143 = scalar_lea.vmem [#allocation3], 17
      %v3144 = vld [vmem:[%s3143] ss:$2 sm:$0xff]
      %s3145 = scalar_lea.vmem [#allocation3], 33
      %v3146 = vld [vmem:[%s3145] ss:$2 sm:$0xff]
      %s3147 = scalar_lea.vmem [#allocation3], 49
      %v3148 = vld [vmem:[%s3147] ss:$2 sm:$0xff]
      %s3149 = scalar_lea.vmem [#allocation3], 65
      %v3150 = vld [vmem:[%s3149] ss:$2 sm:$0xff]
      %s3151 = scalar_lea.vmem [#allocation3], 81
      %v3152 = vld [vmem:[%s3151] ss:$2 sm:$0xff]
      %s3153 = scalar_lea.vmem [#allocation3], 97
      %v3154 = vld [vmem:[%s3153] ss:$2 sm:$0xff]
      %s3155 = scalar_lea.vmem [#allocation3], 113
      %v3156 = vld [vmem:[%s3155] ss:$2 sm:$0xff]
      %s3157 = scalar_lea.vmem [#allocation3], 129
      %v3158 = vld [vmem:[%s3157] ss:$2 sm:$0xff]
      %s3159 = scalar_lea.vmem [#allocation3], 145
      %v3160 = vld [vmem:[%s3159] ss:$2 sm:$0xff]
      %s3161 = scalar_lea.vmem [#allocation3], 161
      %v3162 = vld [vmem:[%s3161] ss:$2 sm:$0xff]
      %s3163 = scalar_lea.vmem [#allocation3], 177
      %v3164 = vld [vmem:[%s3163] ss:$2 sm:$0xff]
      %s3165 = scalar_lea.vmem [#allocation3], 193
      %v3166 = vld [vmem:[%s3165] ss:$2 sm:$0xff]
      %s3167 = scalar_lea.vmem [#allocation3], 209
      %v3168 = vld [vmem:[%s3167] ss:$2 sm:$0xff]
      %s3169 = scalar_lea.vmem [#allocation3], 225
      %v3170 = vld [vmem:[%s3169] ss:$2 sm:$0xff]
      %s3171 = scalar_lea.vmem [#allocation3], 241
      %v3172 = vld [vmem:[%s3171] ss:$2 sm:$0xff]
      %s3173 = scalar_lea.vmem [#allocation3], 257
      %v3174 = vld [vmem:[%s3173] ss:$2 sm:$0xff]
      %s3175 = scalar_lea.vmem [#allocation3], 273
      %v3176 = vld [vmem:[%s3175] ss:$2 sm:$0xff]
      %s3177 = scalar_lea.vmem [#allocation3], 289
      %v3178 = vld [vmem:[%s3177] ss:$2 sm:$0xff]
      %s3179 = scalar_lea.vmem [#allocation3], 305
      %v3180 = vld [vmem:[%s3179] ss:$2 sm:$0xff]
      %s3181 = scalar_lea.vmem [#allocation3], 321
      %v3182 = vld [vmem:[%s3181] ss:$2 sm:$0xff]
      %s3183 = scalar_lea.vmem [#allocation3], 337
      %v3184 = vld [vmem:[%s3183] ss:$2 sm:$0xff]
      %s3185 = scalar_lea.vmem [#allocation3], 353
      %v3186 = vld [vmem:[%s3185] ss:$2 sm:$0xff]
      %s3187 = scalar_lea.vmem [#allocation3], 369
      %v3188 = vld [vmem:[%s3187] ss:$2 sm:$0xff]
      %s3189 = scalar_lea.vmem [#allocation3], 385
      %v3190 = vld [vmem:[%s3189] ss:$2 sm:$0xff]
      %s3191 = scalar_lea.vmem [#allocation3], 401
      %v3192 = vld [vmem:[%s3191] ss:$2 sm:$0xff]
      %s3193 = scalar_lea.vmem [#allocation3], 417
      %v3194 = vld [vmem:[%s3193] ss:$2 sm:$0xff]
      %s3195 = scalar_lea.vmem [#allocation3], 433
      %v3196 = vld [vmem:[%s3195] ss:$2 sm:$0xff]
      %s3197 = scalar_lea.vmem [#allocation3], 449
      %v3198 = vld [vmem:[%s3197] ss:$2 sm:$0xff]
      %s3199 = scalar_lea.vmem [#allocation3], 465
      %v3200 = vld [vmem:[%s3199] ss:$2 sm:$0xff]
      %s3201 = scalar_lea.vmem [#allocation3], 481
      %v3202 = vld [vmem:[%s3201] ss:$2 sm:$0xff]
      %s3203 = scalar_lea.vmem [#allocation3], 497
      %v3204 = vld [vmem:[%s3203] ss:$2 sm:$0xff]
      %v3205 = vmax.f32 %v3078, %v3142
      %v3206 = vmax.f32 %v3080, %v3144
      %v3207 = vmax.f32 %v3082, %v3146
      %v3208 = vmax.f32 %v3084, %v3148
      %v3209 = vmax.f32 %v3086, %v3150
      %v3210 = vmax.f32 %v3088, %v3152
      %v3211 = vmax.f32 %v3090, %v3154
      %v3212 = vmax.f32 %v3092, %v3156
      %v3213 = vmax.f32 %v3094, %v3158
      %v3214 = vmax.f32 %v3096, %v3160
      %v3215 = vmax.f32 %v3098, %v3162
      %v3216 = vmax.f32 %v3100, %v3164
      %v3217 = vmax.f32 %v3102, %v3166
      %v3218 = vmax.f32 %v3104, %v3168
      %v3219 = vmax.f32 %v3106, %v3170
      %v3220 = vmax.f32 %v3108, %v3172
      %v3221 = vmax.f32 %v3110, %v3174
      %v3222 = vmax.f32 %v3112, %v3176
      %v3223 = vmax.f32 %v3114, %v3178
      %v3224 = vmax.f32 %v3116, %v3180
      %v3225 = vmax.f32 %v3118, %v3182
      %v3226 = vmax.f32 %v3120, %v3184
      %v3227 = vmax.f32 %v3122, %v3186
      %v3228 = vmax.f32 %v3124, %v3188
      %v3229 = vmax.f32 %v3126, %v3190
      %v3230 = vmax.f32 %v3128, %v3192
      %v3231 = vmax.f32 %v3130, %v3194
      %v3232 = vmax.f32 %v3132, %v3196
      %v3233 = vmax.f32 %v3134, %v3198
      %v3234 = vmax.f32 %v3136, %v3200
      %v3235 = vmax.f32 %v3138, %v3202
      %v3236 = vmax.f32 %v3140, %v3204
      %v3237 = vld [vmem:[%s5] sm:$0xff]
      %v3238 = vld [vmem:[%s5 + $0x8] sm:$0xff]
      %v3239 = vld [vmem:[%s5 + $0x10] sm:$0xff]
      %v3240 = vld [vmem:[%s5 + $0x18] sm:$0xff]
      %v3241 = vld [vmem:[%s5 + $0x20] sm:$0xff]
      %v3242 = vld [vmem:[%s5 + $0x28] sm:$0xff]
      %v3243 = vld [vmem:[%s6] sm:$0x1]
      %v3276 = vrot.slane %v3205, 7
      %v3277 = vrot.slane %v3206, 7
      %v3278 = vsel %vm1515, %v3276, %v3277
      %v3279 = vrot.slane %v3207, 7
      %v3280 = vsel %vm1515, %v3277, %v3279
      %v3281 = vrot.slane %v3208, 7
      %v3282 = vsel %vm1515, %v3279, %v3281
      %v3283 = vrot.slane %v3209, 7
      %v3284 = vrot.slane %v3210, 7
      %v3285 = vsel %vm1515, %v3283, %v3284
      %v3286 = vrot.slane %v3211, 7
      %v3287 = vsel %vm1515, %v3284, %v3286
      %v3288 = vrot.slane %v3212, 7
      %v3289 = vsel %vm1515, %v3286, %v3288
      %v3290 = vrot.slane %v3213, 7
      %v3291 = vrot.slane %v3214, 7
      %v3292 = vsel %vm1515, %v3290, %v3291
      %v3293 = vrot.slane %v3215, 7
      %v3294 = vsel %vm1515, %v3291, %v3293
      %v3295 = vrot.slane %v3216, 7
      %v3296 = vsel %vm1515, %v3293, %v3295
      %v3297 = vrot.slane %v3217, 7
      %v3298 = vrot.slane %v3218, 7
      %v3299 = vsel %vm1515, %v3297, %v3298
      %v3300 = vrot.slane %v3219, 7
      %v3301 = vsel %vm1515, %v3298, %v3300
      %v3302 = vrot.slane %v3220, 7
      %v3303 = vsel %vm1515, %v3300, %v3302
      %v3304 = vrot.slane %v3221, 7
      %v3305 = vrot.slane %v3222, 7
      %v3306 = vsel %vm1515, %v3304, %v3305
      %v3307 = vrot.slane %v3223, 7
      %v3308 = vsel %vm1515, %v3305, %v3307
      %v3309 = vrot.slane %v3224, 7
      %v3310 = vsel %vm1515, %v3307, %v3309
      %v3311 = vrot.slane %v3225, 7
      %v3312 = vrot.slane %v3226, 7
      %v3313 = vsel %vm1515, %v3311, %v3312
      %v3314 = vrot.slane %v3227, 7
      %v3315 = vsel %vm1515, %v3312, %v3314
      %v3316 = vrot.slane %v3228, 7
      %v3317 = vsel %vm1515, %v3314, %v3316
      %v3318 = vrot.slane %v3229, 7
      %v3319 = vrot.slane %v3230, 7
      %v3320 = vsel %vm1515, %v3318, %v3319
      %v3321 = vrot.slane %v3231, 7
      %v3322 = vsel %vm1515, %v3319, %v3321
      %v3323 = vrot.slane %v3232, 7
      %v3324 = vsel %vm1515, %v3321, %v3323
      %v3325 = vrot.slane %v3233, 7
      %v3326 = vrot.slane %v3234, 7
      %v3327 = vsel %vm1515, %v3325, %v3326
      %v3328 = vrot.slane %v3235, 7
      %v3329 = vsel %vm1515, %v3326, %v3328
      %v3330 = vrot.slane %v3236, 7
      %v3331 = vsel %vm1515, %v3328, %v3330
      %v3364 = vsel %vm1515, 0.0, %v3276
      %v3365 = vsel %vm1515, 0.0, %v3283
      %v3366 = vsel %vm1515, 0.0, %v3290
      %v3367 = vsel %vm1515, 0.0, %v3297
      %v3368 = vsel %vm1515, 0.0, %v3304
      %v3369 = vsel %vm1515, 0.0, %v3311
      %v3370 = vsel %vm1515, 0.0, %v3318
      %v3371 = vsel %vm1515, 0.0, %v3325
      %v3372 = vrot.slane %v3205, 1
      %v3373 = vrot.slane %v3206, 1
      %v3374 = vsel %vm1708, %v3372, %v3373
      %v3375 = vrot.slane %v3207, 1
      %v3376 = vsel %vm1708, %v3373, %v3375
      %v3377 = vrot.slane %v3208, 1
      %v3378 = vsel %vm1708, %v3375, %v3377
      %v3379 = vrot.slane %v3209, 1
      %v3380 = vrot.slane %v3210, 1
      %v3381 = vsel %vm1708, %v3379, %v3380
      %v3382 = vrot.slane %v3211, 1
      %v3383 = vsel %vm1708, %v3380, %v3382
      %v3384 = vrot.slane %v3212, 1
      %v3385 = vsel %vm1708, %v3382, %v3384
      %v3386 = vrot.slane %v3213, 1
      %v3387 = vrot.slane %v3214, 1
      %v3388 = vsel %vm1708, %v3386, %v3387
      %v3389 = vrot.slane %v3215, 1
      %v3390 = vsel %vm1708, %v3387, %v3389
      %v3391 = vrot.slane %v3216, 1
      %v3392 = vsel %vm1708, %v3389, %v3391
      %v3393 = vrot.slane %v3217, 1
      %v3394 = vrot.slane %v3218, 1
      %v3395 = vsel %vm1708, %v3393, %v3394
      %v3396 = vrot.slane %v3219, 1
      %v3397 = vsel %vm1708, %v3394, %v3396
      %v3398 = vrot.slane %v3220, 1
      %v3399 = vsel %vm1708, %v3396, %v3398
      %v3400 = vrot.slane %v3221, 1
      %v3401 = vrot.slane %v3222, 1
      %v3402 = vsel %vm1708, %v3400, %v3401
      %v3403 = vrot.slane %v3223, 1
      %v3404 = vsel %vm1708, %v3401, %v3403
      %v3405 = vrot.slane %v3224, 1
      %v3406 = vsel %vm1708, %v3403, %v3405
      %v3407 = vrot.slane %v3225, 1
      %v3408 = vrot.slane %v3226, 1
      %v3409 = vsel %vm1708, %v3407, %v3408
      %v3410 = vrot.slane %v3227, 1
      %v3411 = vsel %vm1708, %v3408, %v3410
      %v3412 = vrot.slane %v3228, 1
      %v3413 = vsel %vm1708, %v3410, %v3412
      %v3414 = vrot.slane %v3229, 1
      %v3415 = vrot.slane %v3230, 1
      %v3416 = vsel %vm1708, %v3414, %v3415
      %v3417 = vrot.slane %v3231, 1
      %v3418 = vsel %vm1708, %v3415, %v3417
      %v3419 = vrot.slane %v3232, 1
      %v3420 = vsel %vm1708, %v3417, %v3419
      %v3421 = vrot.slane %v3233, 1
      %v3422 = vrot.slane %v3234, 1
      %v3423 = vsel %vm1708, %v3421, %v3422
      %v3424 = vrot.slane %v3235, 1
      %v3425 = vsel %vm1708, %v3422, %v3424
      %v3426 = vrot.slane %v3236, 1
      %v3427 = vsel %vm1708, %v3424, %v3426
      %v3436 = vsel %vm1708, %v3377, 0.0
      %v3437 = vsel %vm1708, %v3384, 0.0
      %v3438 = vsel %vm1708, %v3391, 0.0
      %v3439 = vsel %vm1708, %v3398, 0.0
      %v3440 = vsel %vm1708, %v3405, 0.0
      %v3441 = vsel %vm1708, %v3412, 0.0
      %v3442 = vsel %vm1708, %v3419, 0.0
      %v3443 = vsel %vm1708, %v3426, 0.0
      %3444 = vrot.lane.b32.xlu0 %v3205, 16
      %v3445 = vpop.permute.xlu0 %3444
      %3446 = vrot.lane.b32.xlu0 %v3206, 16
      %v3447 = vpop.permute.xlu0 %3446
      %3448 = vrot.lane.b32.xlu0 %v3207, 16
      %v3449 = vpop.permute.xlu0 %3448
      %3450 = vrot.lane.b32.xlu0 %v3208, 16
      %v3451 = vpop.permute.xlu0 %3450
      %3452 = vrot.lane.b32.xlu0 %v3209, 16
      %v3453 = vpop.permute.xlu0 %3452
      %3454 = vrot.lane.b32.xlu0 %v3210, 16
      %v3455 = vpop.permute.xlu0 %3454
      %3456 = vrot.lane.b32.xlu0 %v3211, 16
      %v3457 = vpop.permute.xlu0 %3456
      %3458 = vrot.lane.b32.xlu0 %v3212, 16
      %v3459 = vpop.permute.xlu0 %3458
      %3460 = vrot.lane.b32.xlu0 %v3213, 16
      %v3461 = vpop.permute.xlu0 %3460
      %3462 = vrot.lane.b32.xlu0 %v3214, 16
      %v3463 = vpop.permute.xlu0 %3462
      %3464 = vrot.lane.b32.xlu0 %v3215, 16
      %v3465 = vpop.permute.xlu0 %3464
      %3466 = vrot.lane.b32.xlu0 %v3216, 16
      %v3467 = vpop.permute.xlu0 %3466
      %3468 = vrot.lane.b32.xlu0 %v3217, 16
      %v3469 = vpop.permute.xlu0 %3468
      %3470 = vrot.lane.b32.xlu0 %v3218, 16
      %v3471 = vpop.permute.xlu0 %3470
      %3472 = vrot.lane.b32.xlu0 %v3219, 16
      %v3473 = vpop.permute.xlu0 %3472
      %3474 = vrot.lane.b32.xlu0 %v3220, 16
      %v3475 = vpop.permute.xlu0 %3474
      %3476 = vrot.lane.b32.xlu0 %v3221, 16
      %v3477 = vpop.permute.xlu0 %3476
      %3478 = vrot.lane.b32.xlu0 %v3222, 16
      %v3479 = vpop.permute.xlu0 %3478
      %3480 = vrot.lane.b32.xlu0 %v3223, 16
      %v3481 = vpop.permute.xlu0 %3480
      %3482 = vrot.lane.b32.xlu0 %v3224, 16
      %v3483 = vpop.permute.xlu0 %3482
      %3484 = vrot.lane.b32.xlu0 %v3225, 16
      %v3485 = vpop.permute.xlu0 %3484
      %3486 = vrot.lane.b32.xlu0 %v3226, 16
      %v3487 = vpop.permute.xlu0 %3486
      %3488 = vrot.lane.b32.xlu0 %v3227, 16
      %v3489 = vpop.permute.xlu0 %3488
      %3490 = vrot.lane.b32.xlu0 %v3228, 16
      %v3491 = vpop.permute.xlu0 %3490
      %3492 = vrot.lane.b32.xlu0 %v3229, 16
      %v3493 = vpop.permute.xlu0 %3492
      %3494 = vrot.lane.b32.xlu0 %v3230, 16
      %v3495 = vpop.permute.xlu0 %3494
      %3496 = vrot.lane.b32.xlu0 %v3231, 16
      %v3497 = vpop.permute.xlu0 %3496
      %3498 = vrot.lane.b32.xlu0 %v3232, 16
      %v3499 = vpop.permute.xlu0 %3498
      %3500 = vrot.lane.b32.xlu0 %v3233, 16
      %v3501 = vpop.permute.xlu0 %3500
      %3502 = vrot.lane.b32.xlu0 %v3234, 16
      %v3503 = vpop.permute.xlu0 %3502
      %3504 = vrot.lane.b32.xlu0 %v3235, 16
      %v3505 = vpop.permute.xlu0 %3504
      %3506 = vrot.lane.b32.xlu0 %v3236, 16
      %v3507 = vpop.permute.xlu0 %3506
      %3548 = vrot.lane.b32.xlu0 %v3374, 32
      %v3549 = vpop.permute.xlu0 %3548
      %3550 = vrot.lane.b32.xlu0 %v3376, 32
      %v3551 = vpop.permute.xlu0 %3550
      %3552 = vrot.lane.b32.xlu0 %v3378, 32
      %v3553 = vpop.permute.xlu0 %3552
      %3554 = vrot.lane.b32.xlu0 %v3436, 32
      %v3555 = vpop.permute.xlu0 %3554
      %3556 = vrot.lane.b32.xlu0 %v3381, 32
      %v3557 = vpop.permute.xlu0 %3556
      %3558 = vrot.lane.b32.xlu0 %v3383, 32
      %v3559 = vpop.permute.xlu0 %3558
      %3560 = vrot.lane.b32.xlu0 %v3385, 32
      %v3561 = vpop.permute.xlu0 %3560
      %3562 = vrot.lane.b32.xlu0 %v3437, 32
      %v3563 = vpop.permute.xlu0 %3562
      %3564 = vrot.lane.b32.xlu0 %v3388, 32
      %v3565 = vpop.permute.xlu0 %3564
      %3566 = vrot.lane.b32.xlu0 %v3390, 32
      %v3567 = vpop.permute.xlu0 %3566
      %3568 = vrot.lane.b32.xlu0 %v3392, 32
      %v3569 = vpop.permute.xlu0 %3568
      %3570 = vrot.lane.b32.xlu0 %v3438, 32
      %v3571 = vpop.permute.xlu0 %3570
      %3572 = vrot.lane.b32.xlu0 %v3395, 32
      %v3573 = vpop.permute.xlu0 %3572
      %3574 = vrot.lane.b32.xlu0 %v3397, 32
      %v3575 = vpop.permute.xlu0 %3574
      %3576 = vrot.lane.b32.xlu0 %v3399, 32
      %v3577 = vpop.permute.xlu0 %3576
      %3578 = vrot.lane.b32.xlu0 %v3439, 32
      %v3579 = vpop.permute.xlu0 %3578
      %3580 = vrot.lane.b32.xlu0 %v3402, 32
      %v3581 = vpop.permute.xlu0 %3580
      %3582 = vrot.lane.b32.xlu0 %v3404, 32
      %v3583 = vpop.permute.xlu0 %3582
      %3584 = vrot.lane.b32.xlu0 %v3406, 32
      %v3585 = vpop.permute.xlu0 %3584
      %3586 = vrot.lane.b32.xlu0 %v3440, 32
      %v3587 = vpop.permute.xlu0 %3586
      %3588 = vrot.lane.b32.xlu0 %v3409, 32
      %v3589 = vpop.permute.xlu0 %3588
      %3590 = vrot.lane.b32.xlu0 %v3411, 32
      %v3591 = vpop.permute.xlu0 %3590
      %3592 = vrot.lane.b32.xlu0 %v3413, 32
      %v3593 = vpop.permute.xlu0 %3592
      %3594 = vrot.lane.b32.xlu0 %v3441, 32
      %v3595 = vpop.permute.xlu0 %3594
      %3596 = vrot.lane.b32.xlu0 %v3416, 32
      %v3597 = vpop.permute.xlu0 %3596
      %3598 = vrot.lane.b32.xlu0 %v3418, 32
      %v3599 = vpop.permute.xlu0 %3598
      %3600 = vrot.lane.b32.xlu0 %v3420, 32
      %v3601 = vpop.permute.xlu0 %3600
      %3602 = vrot.lane.b32.xlu0 %v3442, 32
      %v3603 = vpop.permute.xlu0 %3602
      %3604 = vrot.lane.b32.xlu0 %v3423, 32
      %v3605 = vpop.permute.xlu0 %3604
      %3606 = vrot.lane.b32.xlu0 %v3425, 32
      %v3607 = vpop.permute.xlu0 %3606
      %3608 = vrot.lane.b32.xlu0 %v3427, 32
      %v3609 = vpop.permute.xlu0 %3608
      %3610 = vrot.lane.b32.xlu0 %v3443, 32
      %v3611 = vpop.permute.xlu0 %3610
      %v3644 = vsel %vm2301, %v3364, %v3445
      %v3645 = vsel %vm2301, %v3278, %v3447
      %v3646 = vsel %vm2301, %v3280, %v3449
      %v3647 = vsel %vm2301, %v3282, %v3451
      %v3648 = vsel %vm2301, %v3365, %v3453
      %v3649 = vsel %vm2301, %v3285, %v3455
      %v3650 = vsel %vm2301, %v3287, %v3457
      %v3651 = vsel %vm2301, %v3289, %v3459
      %v3652 = vsel %vm2301, %v3366, %v3461
      %v3653 = vsel %vm2301, %v3292, %v3463
      %v3654 = vsel %vm2301, %v3294, %v3465
      %v3655 = vsel %vm2301, %v3296, %v3467
      %v3656 = vsel %vm2301, %v3367, %v3469
      %v3657 = vsel %vm2301, %v3299, %v3471
      %v3658 = vsel %vm2301, %v3301, %v3473
      %v3659 = vsel %vm2301, %v3303, %v3475
      %v3660 = vsel %vm2301, %v3368, %v3477
      %v3661 = vsel %vm2301, %v3306, %v3479
      %v3662 = vsel %vm2301, %v3308, %v3481
      %v3663 = vsel %vm2301, %v3310, %v3483
      %v3664 = vsel %vm2301, %v3369, %v3485
      %v3665 = vsel %vm2301, %v3313, %v3487
      %v3666 = vsel %vm2301, %v3315, %v3489
      %v3667 = vsel %vm2301, %v3317, %v3491
      %v3668 = vsel %vm2301, %v3370, %v3493
      %v3669 = vsel %vm2301, %v3320, %v3495
      %v3670 = vsel %vm2301, %v3322, %v3497
      %v3671 = vsel %vm2301, %v3324, %v3499
      %v3672 = vsel %vm2301, %v3371, %v3501
      %v3673 = vsel %vm2301, %v3327, %v3503
      %v3674 = vsel %vm2301, %v3329, %v3505
      %v3675 = vsel %vm2301, %v3331, %v3507
      %vm3676 = vcmask 261120
      %v3677 = vsel %vm3676, %v3644, %v3549
      %v3678 = vsel %vm3676, %v3645, %v3551
      %v3679 = vsel %vm3676, %v3646, %v3553
      %v3680 = vsel %vm3676, %v3647, %v3555
      %v3681 = vsel %vm3676, %v3648, %v3557
      %v3682 = vsel %vm3676, %v3649, %v3559
      %v3683 = vsel %vm3676, %v3650, %v3561
      %v3684 = vsel %vm3676, %v3651, %v3563
      %v3685 = vsel %vm3676, %v3652, %v3565
      %v3686 = vsel %vm3676, %v3653, %v3567
      %v3687 = vsel %vm3676, %v3654, %v3569
      %v3688 = vsel %vm3676, %v3655, %v3571
      %v3689 = vsel %vm3676, %v3656, %v3573
      %v3690 = vsel %vm3676, %v3657, %v3575
      %v3691 = vsel %vm3676, %v3658, %v3577
      %v3692 = vsel %vm3676, %v3659, %v3579
      %v3693 = vsel %vm3676, %v3660, %v3581
      %v3694 = vsel %vm3676, %v3661, %v3583
      %v3695 = vsel %vm3676, %v3662, %v3585
      %v3696 = vsel %vm3676, %v3663, %v3587
      %v3697 = vsel %vm3676, %v3664, %v3589
      %v3698 = vsel %vm3676, %v3665, %v3591
      %v3699 = vsel %vm3676, %v3666, %v3593
      %v3700 = vsel %vm3676, %v3667, %v3595
      %v3701 = vsel %vm3676, %v3668, %v3597
      %v3702 = vsel %vm3676, %v3669, %v3599
      %v3703 = vsel %vm3676, %v3670, %v3601
      %v3704 = vsel %vm3676, %v3671, %v3603
      %v3705 = vsel %vm3676, %v3672, %v3605
      %v3706 = vsel %vm3676, %v3673, %v3607
      %v3707 = vsel %vm3676, %v3674, %v3609
      %v3708 = vsel %vm3676, %v3675, %v3611
      %v3710 = vlaneseq
      %v3711 = vshrl.u32 %v3710, 7
      %v3712 = vsub.s32 0, %v3711
      %v3713 = vrot.slane %v3243, %v3712
      %vm3715 = vcmask 392192
      %v3717 = vsel %vm3715, %v3677, 0
      %v3720 = vsel %vm3715, %v3678, 0
      %v3723 = vsel %vm3715, %v3679, 0
      %v3726 = vsel %vm3715, %v3680, 0
      %v3729 = vsel %vm3715, %v3681, 0
      %v3732 = vsel %vm3715, %v3682, 0
      %v3735 = vsel %vm3715, %v3683, 0
      %v3738 = vsel %vm3715, %v3684, 0
      %v3741 = vsel %vm3715, %v3685, 0
      %v3744 = vsel %vm3715, %v3686, 0
      %v3747 = vsel %vm3715, %v3687, 0
      %v3750 = vsel %vm3715, %v3688, 0
      %v3753 = vsel %vm3715, %v3689, 0
      %v3756 = vsel %vm3715, %v3690, 0
      %v3759 = vsel %vm3715, %v3691, 0
      %v3762 = vsel %vm3715, %v3692, 0
      %v3765 = vsel %vm3715, %v3693, 0
      %v3768 = vsel %vm3715, %v3694, 0
      %v3771 = vsel %vm3715, %v3695, 0
      %v3774 = vsel %vm3715, %v3696, 0
      %v3777 = vsel %vm3715, %v3697, 0
      %v3780 = vsel %vm3715, %v3698, 0
      %v3783 = vsel %vm3715, %v3699, 0
      %v3786 = vsel %vm3715, %v3700, 0
      %v3789 = vsel %vm3715, %v3701, 0
      %v3792 = vsel %vm3715, %v3702, 0
      %v3795 = vsel %vm3715, %v3703, 0
      %v3798 = vsel %vm3715, %v3704, 0
      %v3801 = vsel %vm3715, %v3705, 0
      %v3804 = vsel %vm3715, %v3706, 0
      %v3807 = vsel %vm3715, %v3707, 0
      %v3810 = vsel %vm3715, %v3708, 0
      %3812 = vmatprep.subr.mxu0 0.0
      %3813 = vmatpush1.msra.mxu0 %v3237
      %3814 = vmatprep.subr.mxu0 0.0
      %3815 = vmatpush1.msra.mxu0 %v3238
      %3816 = vmatprep.subr.mxu0 0.0
      %3817 = vmatpush1.msra.mxu0 %v3239
      %3818 = vmatprep.subr.mxu0 0.0
      %3819 = vmatpush1.msra.mxu0 %v3240
      %3820 = vmatprep.subr.mxu0 0.0
      %3821 = vmatpush1.msra.mxu0 %v3241
      %3822 = vmatprep.subr.mxu0 0.0
      %3823 = vmatpush1.msra.mxu0 %v3242
      %3824 = vmatprep.subr.mxu0 0.0
      %3825 = vmatpush1.msra.mxu0 0.0
      %3826 = vmatprep.subr.mxu0 0.0
      %3827 = vmatpush1.msra.mxu0 0.0
      %3828 = vmatprep.subr.mxu0 0.0
      %3829 = vmatpush1.msra.mxu0 0.0
      %3830 = vmatprep.subr.mxu0 0.0
      %3831 = vmatpush1.msra.mxu0 0.0
      %3832 = vmatprep.subr.mxu0 0.0
      %3833 = vmatpush1.msra.mxu0 0.0
      %3834 = vmatprep.subr.mxu0 0.0
      %3835 = vmatpush1.msra.mxu0 0.0
      %3836 = vmatprep.subr.mxu0 0.0
      %3837 = vmatpush1.msra.mxu0 0.0
      %3838 = vmatprep.subr.mxu0 0.0
      %3839 = vmatpush1.msra.mxu0 0.0
      %3840 = vmatprep.subr.mxu0 0.0
      %3841 = vmatpush1.msra.mxu0 0.0
      %3842 = vmatprep.subr.mxu0 0.0
      %3843 = vmatpush1.msra.mxu0 0.0
      %3844 = vmatprep.subr.mxu0 0.0
      %3845 = vmatpush1.msra.mxu0 0.0
      %3846 = vmatprep.subr.mxu0 0.0
      %3847 = vmatpush1.msra.mxu0 0.0
      %3848 = vmatprep.subr.mxu0 0.0
      %3849 = vmatpush1.msra.mxu0 0.0
      %3850 = vmatprep.subr.mxu0 0.0
      %3851 = vmatpush1.msra.mxu0 0.0
      %3852 = vmatprep.subr.mxu0 0.0
      %3853 = vmatpush1.msra.mxu0 0.0
      %3854 = vmatprep.subr.mxu0 0.0
      %3855 = vmatpush1.msra.mxu0 0.0
      %3856 = vmatprep.subr.mxu0 0.0
      %3857 = vmatpush1.msra.mxu0 0.0
      %3858 = vmatprep.subr.mxu0 0.0
      %3859 = vmatpush1.msra.mxu0 0.0
      %3860 = vmatprep.subr.mxu0 0.0
      %3861 = vmatpush1.msra.mxu0 0.0
      %3862 = vmatprep.subr.mxu0 0.0
      %3863 = vmatpush1.msra.mxu0 0.0
      %3864 = vmatprep.subr.mxu0 0.0
      %3865 = vmatpush1.msra.mxu0 0.0
      %3866 = vmatprep.subr.mxu0 0.0
      %3867 = vmatpush1.msra.mxu0 0.0
      %3868 = vmatprep.subr.mxu0 0.0
      %3869 = vmatpush1.msra.mxu0 0.0
      %3870 = vmatprep.subr.mxu0 0.0
      %3871 = vmatpush1.msra.mxu0 0.0
      %3872 = vmatprep.subr.mxu0 0.0
      %3873 = vmatpush1.msra.mxu0 0.0
      %3874 = vmatprep.subr.mxu0 0.0
      %3875 = vmatpush1.msra.mxu0 0.0
      %3876 = vmatprep.mubr.f32.mxu0 0.0
      %3877 = vmatmul.mubr.f32.gmra.mrb[0].mxu0 %v3717
      %v3878 = vpop.f32.mrb[0].mxu0
      %v3879 = vadd.f32 %v3713, %v3878
      %v3880 = vpop.f32.mrb[0].mxu0
      %3881 = vmatprep.mubr.f32.mxu0 0.0
      %3882 = vmatmul.mubr.f32.gmra.mrb[0].mxu0 %v3720
      %v3883 = vpop.f32.mrb[0].mxu0
      %v3884 = vadd.f32 %v3713, %v3883
      %v3885 = vpop.f32.mrb[0].mxu0
      %3886 = vmatprep.mubr.f32.mxu0 0.0
      %3887 = vmatmul.mubr.f32.gmra.mrb[0].mxu0 %v3723
      %v3888 = vpop.f32.mrb[0].mxu0
      %v3889 = vadd.f32 %v3713, %v3888
      %v3890 = vpop.f32.mrb[0].mxu0
      %3891 = vmatprep.mubr.f32.mxu0 0.0
      %3892 = vmatmul.mubr.f32.gmra.mrb[0].mxu0 %v3726
      %v3893 = vpop.f32.mrb[0].mxu0
      %v3894 = vadd.f32 %v3713, %v3893
      %v3895 = vpop.f32.mrb[0].mxu0
      %3896 = vmatprep.mubr.f32.mxu0 0.0
      %3897 = vmatmul.mubr.f32.gmra.mrb[0].mxu0 %v3729
      %v3898 = vpop.f32.mrb[0].mxu0
      %v3899 = vadd.f32 %v3713, %v3898
      %v3900 = vpop.f32.mrb[0].mxu0
      %3901 = vmatprep.mubr.f32.mxu0 0.0
      %3902 = vmatmul.mubr.f32.gmra.mrb[0].mxu0 %v3732
      %v3903 = vpop.f32.mrb[0].mxu0
      %v3904 = vadd.f32 %v3713, %v3903
      %v3905 = vpop.f32.mrb[0].mxu0
      %3906 = vmatprep.mubr.f32.mxu0 0.0
      %3907 = vmatmul.mubr.f32.gmra.mrb[0].mxu0 %v3735
      %v3908 = vpop.f32.mrb[0].mxu0
      %v3909 = vadd.f32 %v3713, %v3908
      %v3910 = vpop.f32.mrb[0].mxu0
      %3911 = vmatprep.mubr.f32.mxu0 0.0
      %3912 = vmatmul.mubr.f32.gmra.mrb[0].mxu0 %v3738
      %v3913 = vpop.f32.mrb[0].mxu0
      %v3914 = vadd.f32 %v3713, %v3913
      %v3915 = vpop.f32.mrb[0].mxu0
      %3916 = vmatprep.mubr.f32.mxu0 0.0
      %3917 = vmatmul.mubr.f32.gmra.mrb[0].mxu0 %v3741
      %v3918 = vpop.f32.mrb[0].mxu0
      %v3919 = vadd.f32 %v3713, %v3918
      %v3920 = vpop.f32.mrb[0].mxu0
      %3921 = vmatprep.mubr.f32.mxu0 0.0
      %3922 = vmatmul.mubr.f32.gmra.mrb[0].mxu0 %v3744
      %v3923 = vpop.f32.mrb[0].mxu0
      %v3924 = vadd.f32 %v3713, %v3923
      %v3925 = vpop.f32.mrb[0].mxu0
      %3926 = vmatprep.mubr.f32.mxu0 0.0
      %3927 = vmatmul.mubr.f32.gmra.mrb[0].mxu0 %v3747
      %v3928 = vpop.f32.mrb[0].mxu0
      %v3929 = vadd.f32 %v3713, %v3928
      %v3930 = vpop.f32.mrb[0].mxu0
      %3931 = vmatprep.mubr.f32.mxu0 0.0
      %3932 = vmatmul.mubr.f32.gmra.mrb[0].mxu0 %v3750
      %v3933 = vpop.f32.mrb[0].mxu0
      %v3934 = vadd.f32 %v3713, %v3933
      %v3935 = vpop.f32.mrb[0].mxu0
      %3936 = vmatprep.mubr.f32.mxu0 0.0
      %3937 = vmatmul.mubr.f32.gmra.mrb[0].mxu0 %v3753
      %v3938 = vpop.f32.mrb[0].mxu0
      %v3939 = vadd.f32 %v3713, %v3938
      %v3940 = vpop.f32.mrb[0].mxu0
      %3941 = vmatprep.mubr.f32.mxu0 0.0
      %3942 = vmatmul.mubr.f32.gmra.mrb[0].mxu0 %v3756
      %v3943 = vpop.f32.mrb[0].mxu0
      %v3944 = vadd.f32 %v3713, %v3943
      %v3945 = vpop.f32.mrb[0].mxu0
      %3946 = vmatprep.mubr.f32.mxu0 0.0
      %3947 = vmatmul.mubr.f32.gmra.mrb[0].mxu0 %v3759
      %v3948 = vpop.f32.mrb[0].mxu0
      %v3949 = vadd.f32 %v3713, %v3948
      %v3950 = vpop.f32.mrb[0].mxu0
      %3951 = vmatprep.mubr.f32.mxu0 0.0
      %3952 = vmatmul.mubr.f32.gmra.mrb[0].mxu0 %v3762
      %v3953 = vpop.f32.mrb[0].mxu0
      %v3954 = vadd.f32 %v3713, %v3953
      %v3955 = vpop.f32.mrb[0].mxu0
      %3956 = vmatprep.mubr.f32.mxu0 0.0
      %3957 = vmatmul.mubr.f32.gmra.mrb[0].mxu0 %v3765
      %v3958 = vpop.f32.mrb[0].mxu0
      %v3959 = vadd.f32 %v3713, %v3958
      %v3960 = vpop.f32.mrb[0].mxu0
      %3961 = vmatprep.mubr.f32.mxu0 0.0
      %3962 = vmatmul.mubr.f32.gmra.mrb[0].mxu0 %v3768
      %v3963 = vpop.f32.mrb[0].mxu0
      %v3964 = vadd.f32 %v3713, %v3963
      %v3965 = vpop.f32.mrb[0].mxu0
      %3966 = vmatprep.mubr.f32.mxu0 0.0
      %3967 = vmatmul.mubr.f32.gmra.mrb[0].mxu0 %v3771
      %v3968 = vpop.f32.mrb[0].mxu0
      %v3969 = vadd.f32 %v3713, %v3968
      %v3970 = vpop.f32.mrb[0].mxu0
      %3971 = vmatprep.mubr.f32.mxu0 0.0
      %3972 = vmatmul.mubr.f32.gmra.mrb[0].mxu0 %v3774
      %v3973 = vpop.f32.mrb[0].mxu0
      %v3974 = vadd.f32 %v3713, %v3973
      %v3975 = vpop.f32.mrb[0].mxu0
      %3976 = vmatprep.mubr.f32.mxu0 0.0
      %3977 = vmatmul.mubr.f32.gmra.mrb[0].mxu0 %v3777
      %v3978 = vpop.f32.mrb[0].mxu0
      %v3979 = vadd.f32 %v3713, %v3978
      %v3980 = vpop.f32.mrb[0].mxu0
      %3981 = vmatprep.mubr.f32.mxu0 0.0
      %3982 = vmatmul.mubr.f32.gmra.mrb[0].mxu0 %v3780
      %v3983 = vpop.f32.mrb[0].mxu0
      %v3984 = vadd.f32 %v3713, %v3983
      %v3985 = vpop.f32.mrb[0].mxu0
      %3986 = vmatprep.mubr.f32.mxu0 0.0
      %3987 = vmatmul.mubr.f32.gmra.mrb[0].mxu0 %v3783
      %v3988 = vpop.f32.mrb[0].mxu0
      %v3989 = vadd.f32 %v3713, %v3988
      %v3990 = vpop.f32.mrb[0].mxu0
      %3991 = vmatprep.mubr.f32.mxu0 0.0
      %3992 = vmatmul.mubr.f32.gmra.mrb[0].mxu0 %v3786
      %v3993 = vpop.f32.mrb[0].mxu0
      %v3994 = vadd.f32 %v3713, %v3993
      %v3995 = vpop.f32.mrb[0].mxu0
      %3996 = vmatprep.mubr.f32.mxu0 0.0
      %3997 = vmatmul.mubr.f32.gmra.mrb[0].mxu0 %v3789
      %v3998 = vpop.f32.mrb[0].mxu0
      %v3999 = vadd.f32 %v3713, %v3998
      %v4000 = vpop.f32.mrb[0].mxu0
      %4001 = vmatprep.mubr.f32.mxu0 0.0
      %4002 = vmatmul.mubr.f32.gmra.mrb[0].mxu0 %v3792
      %v4003 = vpop.f32.mrb[0].mxu0
      %v4004 = vadd.f32 %v3713, %v4003
      %v4005 = vpop.f32.mrb[0].mxu0
      %4006 = vmatprep.mubr.f32.mxu0 0.0
      %4007 = vmatmul.mubr.f32.gmra.mrb[0].mxu0 %v3795
      %v4008 = vpop.f32.mrb[0].mxu0
      %v4009 = vadd.f32 %v3713, %v4008
      %v4010 = vpop.f32.mrb[0].mxu0
      %4011 = vmatprep.mubr.f32.mxu0 0.0
      %4012 = vmatmul.mubr.f32.gmra.mrb[0].mxu0 %v3798
      %v4013 = vpop.f32.mrb[0].mxu0
      %v4014 = vadd.f32 %v3713, %v4013
      %v4015 = vpop.f32.mrb[0].mxu0
      %4016 = vmatprep.mubr.f32.mxu0 0.0
      %4017 = vmatmul.mubr.f32.gmra.mrb[0].mxu0 %v3801
      %v4018 = vpop.f32.mrb[0].mxu0
      %v4019 = vadd.f32 %v3713, %v4018
      %v4020 = vpop.f32.mrb[0].mxu0
      %4021 = vmatprep.mubr.f32.mxu0 0.0
      %4022 = vmatmul.mubr.f32.gmra.mrb[0].mxu0 %v3804
      %v4023 = vpop.f32.mrb[0].mxu0
      %v4024 = vadd.f32 %v3713, %v4023
      %v4025 = vpop.f32.mrb[0].mxu0
      %4026 = vmatprep.mubr.f32.mxu0 0.0
      %4027 = vmatmul.mubr.f32.gmra.mrb[0].mxu0 %v3807
      %v4028 = vpop.f32.mrb[0].mxu0
      %v4029 = vadd.f32 %v3713, %v4028
      %v4030 = vpop.f32.mrb[0].mxu0
      %4031 = vmatprep.mubr.f32.mxu0 0.0
      %4032 = vmatmul.mubr.f32.gmra.mrb[0].mxu0 %v3810
      %v4033 = vpop.f32.mrb[0].mxu0
      %v4034 = vadd.f32 %v3713, %v4033
      %v4035 = vpop.f32.mrb[0].mxu0
      %4036 = vdwg.mxu0
      %v4037 = vmax.f32 %v3879, 0.0
      %v4038 = vmax.f32 %v3884, 0.0
      %v4039 = vmax.f32 %v3889, 0.0
      %v4040 = vmax.f32 %v3894, 0.0
      %v4041 = vmax.f32 %v3899, 0.0
      %v4042 = vmax.f32 %v3904, 0.0
      %v4043 = vmax.f32 %v3909, 0.0
      %v4044 = vmax.f32 %v3914, 0.0
      %v4045 = vmax.f32 %v3919, 0.0
      %v4046 = vmax.f32 %v3924, 0.0
      %v4047 = vmax.f32 %v3929, 0.0
      %v4048 = vmax.f32 %v3934, 0.0
      %v4049 = vmax.f32 %v3939, 0.0
      %v4050 = vmax.f32 %v3944, 0.0
      %v4051 = vmax.f32 %v3949, 0.0
      %v4052 = vmax.f32 %v3954, 0.0
      %v4053 = vmax.f32 %v3959, 0.0
      %v4054 = vmax.f32 %v3964, 0.0
      %v4055 = vmax.f32 %v3969, 0.0
      %v4056 = vmax.f32 %v3974, 0.0
      %v4057 = vmax.f32 %v3979, 0.0
      %v4058 = vmax.f32 %v3984, 0.0
      %v4059 = vmax.f32 %v3989, 0.0
      %v4060 = vmax.f32 %v3994, 0.0
      %v4061 = vmax.f32 %v3999, 0.0
      %v4062 = vmax.f32 %v4004, 0.0
      %v4063 = vmax.f32 %v4009, 0.0
      %v4064 = vmax.f32 %v4014, 0.0
      %v4065 = vmax.f32 %v4019, 0.0
      %v4066 = vmax.f32 %v4024, 0.0
      %v4067 = vmax.f32 %v4029, 0.0
      %v4068 = vmax.f32 %v4034, 0.0
      %4069 = vst.msk [vmem:[#allocation4] sm:$0xff] %vm3676, %v4037
      %4070 = vst.msk [vmem:[#allocation4 + $0x8] sm:$0xff] %vm3676, %v4038
      %4071 = vst.msk [vmem:[#allocation4 + $0x10] sm:$0xff] %vm3676, %v4039
      %4072 = vst.msk [vmem:[#allocation4 + $0x18] sm:$0xff] %vm3676, %v4040
      %4073 = vst.msk [vmem:[#allocation4 + $0x20] sm:$0xff] %vm3676, %v4041
      %4074 = vst.msk [vmem:[#allocation4 + $0x28] sm:$0xff] %vm3676, %v4042
      %4075 = vst.msk [vmem:[#allocation4 + $0x30] sm:$0xff] %vm3676, %v4043
      %4076 = vst.msk [vmem:[#allocation4 + $0x38] sm:$0xff] %vm3676, %v4044
      %4077 = vst.msk [vmem:[#allocation4 + $0x40] sm:$0xff] %vm3676, %v4045
      %4078 = vst.msk [vmem:[#allocation4 + $0x48] sm:$0xff] %vm3676, %v4046
      %4079 = vst.msk [vmem:[#allocation4 + $0x50] sm:$0xff] %vm3676, %v4047
      %4080 = vst.msk [vmem:[#allocation4 + $0x58] sm:$0xff] %vm3676, %v4048
      %4081 = vst.msk [vmem:[#allocation4 + $0x60] sm:$0xff] %vm3676, %v4049
      %4082 = vst.msk [vmem:[#allocation4 + $0x68] sm:$0xff] %vm3676, %v4050
      %4083 = vst.msk [vmem:[#allocation4 + $0x70] sm:$0xff] %vm3676, %v4051
      %4084 = vst.msk [vmem:[#allocation4 + $0x78] sm:$0xff] %vm3676, %v4052
      %4085 = vst.msk [vmem:[#allocation4 + $0x80] sm:$0xff] %vm3676, %v4053
      %4086 = vst.msk [vmem:[#allocation4 + $0x88] sm:$0xff] %vm3676, %v4054
      %4087 = vst.msk [vmem:[#allocation4 + $0x90] sm:$0xff] %vm3676, %v4055
      %4088 = vst.msk [vmem:[#allocation4 + $0x98] sm:$0xff] %vm3676, %v4056
      %4089 = vst.msk [vmem:[#allocation4 + $0xa0] sm:$0xff] %vm3676, %v4057
      %4090 = vst.msk [vmem:[#allocation4 + $0xa8] sm:$0xff] %vm3676, %v4058
      %4091 = vst.msk [vmem:[#allocation4 + $0xb0] sm:$0xff] %vm3676, %v4059
      %4092 = vst.msk [vmem:[#allocation4 + $0xb8] sm:$0xff] %vm3676, %v4060
      %4093 = vst.msk [vmem:[#allocation4 + $0xc0] sm:$0xff] %vm3676, %v4061
      %4094 = vst.msk [vmem:[#allocation4 + $0xc8] sm:$0xff] %vm3676, %v4062
      %4095 = vst.msk [vmem:[#allocation4 + $0xd0] sm:$0xff] %vm3676, %v4063
      %4096 = vst.msk [vmem:[#allocation4 + $0xd8] sm:$0xff] %vm3676, %v4064
      %4097 = vst.msk [vmem:[#allocation4 + $0xe0] sm:$0xff] %vm3676, %v4065
      %4098 = vst.msk [vmem:[#allocation4 + $0xe8] sm:$0xff] %vm3676, %v4066
      %4099 = vst.msk [vmem:[#allocation4 + $0xf0] sm:$0xff] %vm3676, %v4067
      %4100 = vst.msk [vmem:[#allocation4 + $0xf8] sm:$0xff] %vm3676, %v4068
      %v4101 = vld [vmem:[#allocation4] ss:$2 sm:$0xff]
      %s4102 = scalar_lea.vmem [#allocation4], 16
      %v4103 = vld [vmem:[%s4102] ss:$2 sm:$0xff]
      %s4104 = scalar_lea.vmem [#allocation4], 32
      %v4105 = vld [vmem:[%s4104] ss:$2 sm:$0xff]
      %s4106 = scalar_lea.vmem [#allocation4], 48
      %v4107 = vld [vmem:[%s4106] ss:$2 sm:$0xff]
      %s4108 = scalar_lea.vmem [#allocation4], 64
      %v4109 = vld [vmem:[%s4108] ss:$2 sm:$0xff]
      %s4110 = scalar_lea.vmem [#allocation4], 80
      %v4111 = vld [vmem:[%s4110] ss:$2 sm:$0xff]
      %s4112 = scalar_lea.vmem [#allocation4], 96
      %v4113 = vld [vmem:[%s4112] ss:$2 sm:$0xff]
      %s4114 = scalar_lea.vmem [#allocation4], 112
      %v4115 = vld [vmem:[%s4114] ss:$2 sm:$0xff]
      %s4116 = scalar_lea.vmem [#allocation4], 128
      %v4117 = vld [vmem:[%s4116] ss:$2 sm:$0xff]
      %s4118 = scalar_lea.vmem [#allocation4], 144
      %v4119 = vld [vmem:[%s4118] ss:$2 sm:$0xff]
      %s4120 = scalar_lea.vmem [#allocation4], 160
      %v4121 = vld [vmem:[%s4120] ss:$2 sm:$0xff]
      %s4122 = scalar_lea.vmem [#allocation4], 176
      %v4123 = vld [vmem:[%s4122] ss:$2 sm:$0xff]
      %s4124 = scalar_lea.vmem [#allocation4], 192
      %v4125 = vld [vmem:[%s4124] ss:$2 sm:$0xff]
      %s4126 = scalar_lea.vmem [#allocation4], 208
      %v4127 = vld [vmem:[%s4126] ss:$2 sm:$0xff]
      %s4128 = scalar_lea.vmem [#allocation4], 224
      %v4129 = vld [vmem:[%s4128] ss:$2 sm:$0xff]
      %s4130 = scalar_lea.vmem [#allocation4], 240
      %v4131 = vld [vmem:[%s4130] ss:$2 sm:$0xff]
      %s4132 = scalar_lea.vmem [#allocation4], 1
      %v4133 = vld [vmem:[%s4132] ss:$2 sm:$0xff]
      %s4134 = scalar_lea.vmem [#allocation4], 17
      %v4135 = vld [vmem:[%s4134] ss:$2 sm:$0xff]
      %s4136 = scalar_lea.vmem [#allocation4], 33
      %v4137 = vld [vmem:[%s4136] ss:$2 sm:$0xff]
      %s4138 = scalar_lea.vmem [#allocation4], 49
      %v4139 = vld [vmem:[%s4138] ss:$2 sm:$0xff]
      %s4140 = scalar_lea.vmem [#allocation4], 65
      %v4141 = vld [vmem:[%s4140] ss:$2 sm:$0xff]
      %s4142 = scalar_lea.vmem [#allocation4], 81
      %v4143 = vld [vmem:[%s4142] ss:$2 sm:$0xff]
      %s4144 = scalar_lea.vmem [#allocation4], 97
      %v4145 = vld [vmem:[%s4144] ss:$2 sm:$0xff]
      %s4146 = scalar_lea.vmem [#allocation4], 113
      %v4147 = vld [vmem:[%s4146] ss:$2 sm:$0xff]
      %s4148 = scalar_lea.vmem [#allocation4], 129
      %v4149 = vld [vmem:[%s4148] ss:$2 sm:$0xff]
      %s4150 = scalar_lea.vmem [#allocation4], 145
      %v4151 = vld [vmem:[%s4150] ss:$2 sm:$0xff]
      %s4152 = scalar_lea.vmem [#allocation4], 161
      %v4153 = vld [vmem:[%s4152] ss:$2 sm:$0xff]
      %s4154 = scalar_lea.vmem [#allocation4], 177
      %v4155 = vld [vmem:[%s4154] ss:$2 sm:$0xff]
      %s4156 = scalar_lea.vmem [#allocation4], 193
      %v4157 = vld [vmem:[%s4156] ss:$2 sm:$0xff]
      %s4158 = scalar_lea.vmem [#allocation4], 209
      %v4159 = vld [vmem:[%s4158] ss:$2 sm:$0xff]
      %s4160 = scalar_lea.vmem [#allocation4], 225
      %v4161 = vld [vmem:[%s4160] ss:$2 sm:$0xff]
      %s4162 = scalar_lea.vmem [#allocation4], 241
      %v4163 = vld [vmem:[%s4162] ss:$2 sm:$0xff]
      %v4164 = vmax.f32 %v4101, %v4133
      %v4165 = vmax.f32 %v4103, %v4135
      %v4166 = vmax.f32 %v4105, %v4137
      %v4167 = vmax.f32 %v4107, %v4139
      %v4168 = vmax.f32 %v4109, %v4141
      %v4169 = vmax.f32 %v4111, %v4143
      %v4170 = vmax.f32 %v4113, %v4145
      %v4171 = vmax.f32 %v4115, %v4147
      %v4172 = vmax.f32 %v4117, %v4149
      %v4173 = vmax.f32 %v4119, %v4151
      %v4174 = vmax.f32 %v4121, %v4153
      %v4175 = vmax.f32 %v4123, %v4155
      %v4176 = vmax.f32 %v4125, %v4157
      %v4177 = vmax.f32 %v4127, %v4159
      %v4178 = vmax.f32 %v4129, %v4161
      %v4179 = vmax.f32 %v4131, %v4163
      %v4180 = vld [vmem:[%s7] sm:$0xff]
      %v4181 = vld [vmem:[%s7 + $0x8] sm:$0xff]
      %v4182 = vld [vmem:[%s7 + $0x10] sm:$0xff]
      %v4183 = vld [vmem:[%s7 + $0x18] sm:$0xff]
      %v4184 = vld [vmem:[%s7 + $0x20] sm:$0xff]
      %v4185 = vld [vmem:[%s7 + $0x28] sm:$0xff]
      %v4186 = vld [vmem:[%s7 + $0x30] sm:$0xff]
      %v4187 = vld [vmem:[%s7 + $0x38] sm:$0xff]
      %v4188 = vld [vmem:[%s7 + $0x40] sm:$0xff]
      %v4189 = vld [vmem:[%s7 + $0x48] sm:$0xff]
      %v4190 = vld [vmem:[%s7 + $0x50] sm:$0xff]
      %v4191 = vld [vmem:[%s7 + $0x58] sm:$0xff]
      %v4192 = vld [vmem:[%s8] sm:$0x1]
      %v4209 = vrot.slane %v4164, 7
      %v4210 = vrot.slane %v4165, 7
      %v4211 = vsel %vm1515, %v4209, %v4210
      %v4212 = vrot.slane %v4166, 7
      %v4213 = vrot.slane %v4167, 7
      %v4214 = vsel %vm1515, %v4212, %v4213
      %v4215 = vrot.slane %v4168, 7
      %v4216 = vrot.slane %v4169, 7
      %v4217 = vsel %vm1515, %v4215, %v4216
      %v4218 = vrot.slane %v4170, 7
      %v4219 = vrot.slane %v4171, 7
      %v4220 = vsel %vm1515, %v4218, %v4219
      %v4221 = vrot.slane %v4172, 7
      %v4222 = vrot.slane %v4173, 7
      %v4223 = vsel %vm1515, %v4221, %v4222
      %v4224 = vrot.slane %v4174, 7
      %v4225 = vrot.slane %v4175, 7
      %v4226 = vsel %vm1515, %v4224, %v4225
      %v4227 = vrot.slane %v4176, 7
      %v4228 = vrot.slane %v4177, 7
      %v4229 = vsel %vm1515, %v4227, %v4228
      %v4230 = vrot.slane %v4178, 7
      %v4231 = vrot.slane %v4179, 7
      %v4232 = vsel %vm1515, %v4230, %v4231
      %v4249 = vsel %vm1515, 0.0, %v4209
      %v4250 = vsel %vm1515, 0.0, %v4212
      %v4251 = vsel %vm1515, 0.0, %v4215
      %v4252 = vsel %vm1515, 0.0, %v4218
      %v4253 = vsel %vm1515, 0.0, %v4221
      %v4254 = vsel %vm1515, 0.0, %v4224
      %v4255 = vsel %vm1515, 0.0, %v4227
      %v4256 = vsel %vm1515, 0.0, %v4230
      %v4257 = vrot.slane %v4164, 1
      %v4258 = vrot.slane %v4165, 1
      %v4259 = vsel %vm1708, %v4257, %v4258
      %v4260 = vrot.slane %v4166, 1
      %v4261 = vrot.slane %v4167, 1
      %v4262 = vsel %vm1708, %v4260, %v4261
      %v4263 = vrot.slane %v4168, 1
      %v4264 = vrot.slane %v4169, 1
      %v4265 = vsel %vm1708, %v4263, %v4264
      %v4266 = vrot.slane %v4170, 1
      %v4267 = vrot.slane %v4171, 1
      %v4268 = vsel %vm1708, %v4266, %v4267
      %v4269 = vrot.slane %v4172, 1
      %v4270 = vrot.slane %v4173, 1
      %v4271 = vsel %vm1708, %v4269, %v4270
      %v4272 = vrot.slane %v4174, 1
      %v4273 = vrot.slane %v4175, 1
      %v4274 = vsel %vm1708, %v4272, %v4273
      %v4275 = vrot.slane %v4176, 1
      %v4276 = vrot.slane %v4177, 1
      %v4277 = vsel %vm1708, %v4275, %v4276
      %v4278 = vrot.slane %v4178, 1
      %v4279 = vrot.slane %v4179, 1
      %v4280 = vsel %vm1708, %v4278, %v4279
      %v4289 = vsel %vm1708, %v4258, 0.0
      %v4290 = vsel %vm1708, %v4261, 0.0
      %v4291 = vsel %vm1708, %v4264, 0.0
      %v4292 = vsel %vm1708, %v4267, 0.0
      %v4293 = vsel %vm1708, %v4270, 0.0
      %v4294 = vsel %vm1708, %v4273, 0.0
      %v4295 = vsel %vm1708, %v4276, 0.0
      %v4296 = vsel %vm1708, %v4279, 0.0
      %4297 = vrot.lane.b32.xlu0 %v4164, 32
      %v4298 = vpop.permute.xlu0 %4297
      %4299 = vrot.lane.b32.xlu0 %v4165, 32
      %v4300 = vpop.permute.xlu0 %4299
      %4301 = vrot.lane.b32.xlu0 %v4166, 32
      %v4302 = vpop.permute.xlu0 %4301
      %4303 = vrot.lane.b32.xlu0 %v4167, 32
      %v4304 = vpop.permute.xlu0 %4303
      %4305 = vrot.lane.b32.xlu0 %v4168, 32
      %v4306 = vpop.permute.xlu0 %4305
      %4307 = vrot.lane.b32.xlu0 %v4169, 32
      %v4308 = vpop.permute.xlu0 %4307
      %4309 = vrot.lane.b32.xlu0 %v4170, 32
      %v4310 = vpop.permute.xlu0 %4309
      %4311 = vrot.lane.b32.xlu0 %v4171, 32
      %v4312 = vpop.permute.xlu0 %4311
      %4313 = vrot.lane.b32.xlu0 %v4172, 32
      %v4314 = vpop.permute.xlu0 %4313
      %4315 = vrot.lane.b32.xlu0 %v4173, 32
      %v4316 = vpop.permute.xlu0 %4315
      %4317 = vrot.lane.b32.xlu0 %v4174, 32
      %v4318 = vpop.permute.xlu0 %4317
      %4319 = vrot.lane.b32.xlu0 %v4175, 32
      %v4320 = vpop.permute.xlu0 %4319
      %4321 = vrot.lane.b32.xlu0 %v4176, 32
      %v4322 = vpop.permute.xlu0 %4321
      %4323 = vrot.lane.b32.xlu0 %v4177, 32
      %v4324 = vpop.permute.xlu0 %4323
      %4325 = vrot.lane.b32.xlu0 %v4178, 32
      %v4326 = vpop.permute.xlu0 %4325
      %4327 = vrot.lane.b32.xlu0 %v4179, 32
      %v4328 = vpop.permute.xlu0 %4327
      %4353 = vrot.lane.b32.xlu0 %v4259, 64
      %v4354 = vpop.permute.xlu0 %4353
      %4355 = vrot.lane.b32.xlu0 %v4289, 64
      %v4356 = vpop.permute.xlu0 %4355
      %4357 = vrot.lane.b32.xlu0 %v4262, 64
      %v4358 = vpop.permute.xlu0 %4357
      %4359 = vrot.lane.b32.xlu0 %v4290, 64
      %v4360 = vpop.permute.xlu0 %4359
      %4361 = vrot.lane.b32.xlu0 %v4265, 64
      %v4362 = vpop.permute.xlu0 %4361
      %4363 = vrot.lane.b32.xlu0 %v4291, 64
      %v4364 = vpop.permute.xlu0 %4363
      %4365 = vrot.lane.b32.xlu0 %v4268, 64
      %v4366 = vpop.permute.xlu0 %4365
      %4367 = vrot.lane.b32.xlu0 %v4292, 64
      %v4368 = vpop.permute.xlu0 %4367
      %4369 = vrot.lane.b32.xlu0 %v4271, 64
      %v4370 = vpop.permute.xlu0 %4369
      %4371 = vrot.lane.b32.xlu0 %v4293, 64
      %v4372 = vpop.permute.xlu0 %4371
      %4373 = vrot.lane.b32.xlu0 %v4274, 64
      %v4374 = vpop.permute.xlu0 %4373
      %4375 = vrot.lane.b32.xlu0 %v4294, 64
      %v4376 = vpop.permute.xlu0 %4375
      %4377 = vrot.lane.b32.xlu0 %v4277, 64
      %v4378 = vpop.permute.xlu0 %4377
      %4379 = vrot.lane.b32.xlu0 %v4295, 64
      %v4380 = vpop.permute.xlu0 %4379
      %4381 = vrot.lane.b32.xlu0 %v4280, 64
      %v4382 = vpop.permute.xlu0 %4381
      %4383 = vrot.lane.b32.xlu0 %v4296, 64
      %v4384 = vpop.permute.xlu0 %4383
      %v4401 = vsel %vm3676, %v4249, %v4298
      %v4402 = vsel %vm3676, %v4211, %v4300
      %v4403 = vsel %vm3676, %v4250, %v4302
      %v4404 = vsel %vm3676, %v4214, %v4304
      %v4405 = vsel %vm3676, %v4251, %v4306
      %v4406 = vsel %vm3676, %v4217, %v4308
      %v4407 = vsel %vm3676, %v4252, %v4310
      %v4408 = vsel %vm3676, %v4220, %v4312
      %v4409 = vsel %vm3676, %v4253, %v4314
      %v4410 = vsel %vm3676, %v4223, %v4316
      %v4411 = vsel %vm3676, %v4254, %v4318
      %v4412 = vsel %vm3676, %v4226, %v4320
      %v4413 = vsel %vm3676, %v4255, %v4322
      %v4414 = vsel %vm3676, %v4229, %v4324
      %v4415 = vsel %vm3676, %v4256, %v4326
      %v4416 = vsel %vm3676, %v4232, %v4328
      %vm4417 = vcmask 523264
      %v4418 = vsel %vm4417, %v4401, %v4354
      %v4419 = vsel %vm4417, %v4402, %v4356
      %v4420 = vsel %vm4417, %v4403, %v4358
      %v4421 = vsel %vm4417, %v4404, %v4360
      %v4422 = vsel %vm4417, %v4405, %v4362
      %v4423 = vsel %vm4417, %v4406, %v4364
      %v4424 = vsel %vm4417, %v4407, %v4366
      %v4425 = vsel %vm4417, %v4408, %v4368
      %v4426 = vsel %vm4417, %v4409, %v4370
      %v4427 = vsel %vm4417, %v4410, %v4372
      %v4428 = vsel %vm4417, %v4411, %v4374
      %v4429 = vsel %vm4417, %v4412, %v4376
      %v4430 = vsel %vm4417, %v4413, %v4378
      %v4431 = vsel %vm4417, %v4414, %v4380
      %v4432 = vsel %vm4417, %v4415, %v4382
      %v4433 = vsel %vm4417, %v4416, %v4384
      %v4435 = vlaneseq
      %v4436 = vshrl.u32 %v4435, 7
      %v4437 = vsub.s32 0, %v4436
      %v4438 = vrot.slane %v4192, %v4437
      %vm4440 = vcmask 785408
      %v4442 = vsel %vm4440, %v4418, 0
      %v4445 = vsel %vm4440, %v4419, 0
      %v4448 = vsel %vm4440, %v4420, 0
      %v4451 = vsel %vm4440, %v4421, 0
      %v4454 = vsel %vm4440, %v4422, 0
      %v4457 = vsel %vm4440, %v4423, 0
      %v4460 = vsel %vm4440, %v4424, 0
      %v4463 = vsel %vm4440, %v4425, 0
      %v4466 = vsel %vm4440, %v4426, 0
      %v4469 = vsel %vm4440, %v4427, 0
      %v4472 = vsel %vm4440, %v4428, 0
      %v4475 = vsel %vm4440, %v4429, 0
      %v4478 = vsel %vm4440, %v4430, 0
      %v4481 = vsel %vm4440, %v4431, 0
      %v4484 = vsel %vm4440, %v4432, 0
      %v4487 = vsel %vm4440, %v4433, 0
      %4489 = vmatprep.subr.mxu0 0.0
      %4490 = vmatpush1.msra.mxu0 %v4180
      %4491 = vmatprep.subr.mxu0 0.0
      %4492 = vmatpush1.msra.mxu0 %v4181
      %4493 = vmatprep.subr.mxu0 0.0
      %4494 = vmatpush1.msra.mxu0 %v4182
      %4495 = vmatprep.subr.mxu0 0.0
      %4496 = vmatpush1.msra.mxu0 %v4183
      %4497 = vmatprep.subr.mxu0 0.0
      %4498 = vmatpush1.msra.mxu0 %v4184
      %4499 = vmatprep.subr.mxu0 0.0
      %4500 = vmatpush1.msra.mxu0 %v4185
      %4501 = vmatprep.subr.mxu0 0.0
      %4502 = vmatpush1.msra.mxu0 %v4186
      %4503 = vmatprep.subr.mxu0 0.0
      %4504 = vmatpush1.msra.mxu0 %v4187
      %4505 = vmatprep.subr.mxu0 0.0
      %4506 = vmatpush1.msra.mxu0 %v4188
      %4507 = vmatprep.subr.mxu0 0.0
      %4508 = vmatpush1.msra.mxu0 %v4189
      %4509 = vmatprep.subr.mxu0 0.0
      %4510 = vmatpush1.msra.mxu0 %v4190
      %4511 = vmatprep.subr.mxu0 0.0
      %4512 = vmatpush1.msra.mxu0 %v4191
      %4513 = vmatprep.subr.mxu0 0.0
      %4514 = vmatpush1.msra.mxu0 0.0
      %4515 = vmatprep.subr.mxu0 0.0
      %4516 = vmatpush1.msra.mxu0 0.0
      %4517 = vmatprep.subr.mxu0 0.0
      %4518 = vmatpush1.msra.mxu0 0.0
      %4519 = vmatprep.subr.mxu0 0.0
      %4520 = vmatpush1.msra.mxu0 0.0
      %4521 = vmatprep.subr.mxu0 0.0
      %4522 = vmatpush1.msra.mxu0 0.0
      %4523 = vmatprep.subr.mxu0 0.0
      %4524 = vmatpush1.msra.mxu0 0.0
      %4525 = vmatprep.subr.mxu0 0.0
      %4526 = vmatpush1.msra.mxu0 0.0
      %4527 = vmatprep.subr.mxu0 0.0
      %4528 = vmatpush1.msra.mxu0 0.0
      %4529 = vmatprep.subr.mxu0 0.0
      %4530 = vmatpush1.msra.mxu0 0.0
      %4531 = vmatprep.subr.mxu0 0.0
      %4532 = vmatpush1.msra.mxu0 0.0
      %4533 = vmatprep.subr.mxu0 0.0
      %4534 = vmatpush1.msra.mxu0 0.0
      %4535 = vmatprep.subr.mxu0 0.0
      %4536 = vmatpush1.msra.mxu0 0.0
      %4537 = vmatprep.subr.mxu0 0.0
      %4538 = vmatpush1.msra.mxu0 0.0
      %4539 = vmatprep.subr.mxu0 0.0
      %4540 = vmatpush1.msra.mxu0 0.0
      %4541 = vmatprep.subr.mxu0 0.0
      %4542 = vmatpush1.msra.mxu0 0.0
      %4543 = vmatprep.subr.mxu0 0.0
      %4544 = vmatpush1.msra.mxu0 0.0
      %4545 = vmatprep.subr.mxu0 0.0
      %4546 = vmatpush1.msra.mxu0 0.0
      %4547 = vmatprep.subr.mxu0 0.0
      %4548 = vmatpush1.msra.mxu0 0.0
      %4549 = vmatprep.subr.mxu0 0.0
      %4550 = vmatpush1.msra.mxu0 0.0
      %4551 = vmatprep.subr.mxu0 0.0
      %4552 = vmatpush1.msra.mxu0 0.0
      %4553 = vmatprep.mubr.f32.mxu0 0.0
      %4554 = vmatmul.mubr.f32.gmra.mrb[0].mxu0 %v4442
      %v4555 = vpop.f32.mrb[0].mxu0
      %v4556 = vadd.f32 %v4438, %v4555
      %v4557 = vpop.f32.mrb[0].mxu0
      %4558 = vmatprep.mubr.f32.mxu0 0.0
      %4559 = vmatmul.mubr.f32.gmra.mrb[0].mxu0 %v4445
      %v4560 = vpop.f32.mrb[0].mxu0
      %v4561 = vadd.f32 %v4438, %v4560
      %v4562 = vpop.f32.mrb[0].mxu0
      %4563 = vmatprep.mubr.f32.mxu0 0.0
      %4564 = vmatmul.mubr.f32.gmra.mrb[0].mxu0 %v4448
      %v4565 = vpop.f32.mrb[0].mxu0
      %v4566 = vadd.f32 %v4438, %v4565
      %v4567 = vpop.f32.mrb[0].mxu0
      %4568 = vmatprep.mubr.f32.mxu0 0.0
      %4569 = vmatmul.mubr.f32.gmra.mrb[0].mxu0 %v4451
      %v4570 = vpop.f32.mrb[0].mxu0
      %v4571 = vadd.f32 %v4438, %v4570
      %v4572 = vpop.f32.mrb[0].mxu0
      %4573 = vmatprep.mubr.f32.mxu0 0.0
      %4574 = vmatmul.mubr.f32.gmra.mrb[0].mxu0 %v4454
      %v4575 = vpop.f32.mrb[0].mxu0
      %v4576 = vadd.f32 %v4438, %v4575
      %v4577 = vpop.f32.mrb[0].mxu0
      %4578 = vmatprep.mubr.f32.mxu0 0.0
      %4579 = vmatmul.mubr.f32.gmra.mrb[0].mxu0 %v4457
      %v4580 = vpop.f32.mrb[0].mxu0
      %v4581 = vadd.f32 %v4438, %v4580
      %v4582 = vpop.f32.mrb[0].mxu0
      %4583 = vmatprep.mubr.f32.mxu0 0.0
      %4584 = vmatmul.mubr.f32.gmra.mrb[0].mxu0 %v4460
      %v4585 = vpop.f32.mrb[0].mxu0
      %v4586 = vadd.f32 %v4438, %v4585
      %v4587 = vpop.f32.mrb[0].mxu0
      %4588 = vmatprep.mubr.f32.mxu0 0.0
      %4589 = vmatmul.mubr.f32.gmra.mrb[0].mxu0 %v4463
      %v4590 = vpop.f32.mrb[0].mxu0
      %v4591 = vadd.f32 %v4438, %v4590
      %v4592 = vpop.f32.mrb[0].mxu0
      %4593 = vmatprep.mubr.f32.mxu0 0.0
      %4594 = vmatmul.mubr.f32.gmra.mrb[0].mxu0 %v4466
      %v4595 = vpop.f32.mrb[0].mxu0
      %v4596 = vadd.f32 %v4438, %v4595
      %v4597 = vpop.f32.mrb[0].mxu0
      %4598 = vmatprep.mubr.f32.mxu0 0.0
      %4599 = vmatmul.mubr.f32.gmra.mrb[0].mxu0 %v4469
      %v4600 = vpop.f32.mrb[0].mxu0
      %v4601 = vadd.f32 %v4438, %v4600
      %v4602 = vpop.f32.mrb[0].mxu0
      %4603 = vmatprep.mubr.f32.mxu0 0.0
      %4604 = vmatmul.mubr.f32.gmra.mrb[0].mxu0 %v4472
      %v4605 = vpop.f32.mrb[0].mxu0
      %v4606 = vadd.f32 %v4438, %v4605
      %v4607 = vpop.f32.mrb[0].mxu0
      %4608 = vmatprep.mubr.f32.mxu0 0.0
      %4609 = vmatmul.mubr.f32.gmra.mrb[0].mxu0 %v4475
      %v4610 = vpop.f32.mrb[0].mxu0
      %v4611 = vadd.f32 %v4438, %v4610
      %v4612 = vpop.f32.mrb[0].mxu0
      %4613 = vmatprep.mubr.f32.mxu0 0.0
      %4614 = vmatmul.mubr.f32.gmra.mrb[0].mxu0 %v4478
      %v4615 = vpop.f32.mrb[0].mxu0
      %v4616 = vadd.f32 %v4438, %v4615
      %v4617 = vpop.f32.mrb[0].mxu0
      %4618 = vmatprep.mubr.f32.mxu0 0.0
      %4619 = vmatmul.mubr.f32.gmra.mrb[0].mxu0 %v4481
      %v4620 = vpop.f32.mrb[0].mxu0
      %v4621 = vadd.f32 %v4438, %v4620
      %v4622 = vpop.f32.mrb[0].mxu0
      %4623 = vmatprep.mubr.f32.mxu0 0.0
      %4624 = vmatmul.mubr.f32.gmra.mrb[0].mxu0 %v4484
      %v4625 = vpop.f32.mrb[0].mxu0
      %v4626 = vadd.f32 %v4438, %v4625
      %v4627 = vpop.f32.mrb[0].mxu0
      %4628 = vmatprep.mubr.f32.mxu0 0.0
      %4629 = vmatmul.mubr.f32.gmra.mrb[0].mxu0 %v4487
      %v4630 = vpop.f32.mrb[0].mxu0
      %v4631 = vadd.f32 %v4438, %v4630
      %v4632 = vpop.f32.mrb[0].mxu0
      %4633 = vdwg.mxu0
      %v4634 = vmax.f32 %v4556, 0.0
      %v4635 = vmax.f32 %v4561, 0.0
      %v4636 = vmax.f32 %v4566, 0.0
      %v4637 = vmax.f32 %v4571, 0.0
      %v4638 = vmax.f32 %v4576, 0.0
      %v4639 = vmax.f32 %v4581, 0.0
      %v4640 = vmax.f32 %v4586, 0.0
      %v4641 = vmax.f32 %v4591, 0.0
      %v4642 = vmax.f32 %v4596, 0.0
      %v4643 = vmax.f32 %v4601, 0.0
      %v4644 = vmax.f32 %v4606, 0.0
      %v4645 = vmax.f32 %v4611, 0.0
      %v4646 = vmax.f32 %v4616, 0.0
      %v4647 = vmax.f32 %v4621, 0.0
      %v4648 = vmax.f32 %v4626, 0.0
      %v4649 = vmax.f32 %v4631, 0.0
      %4650 = vst.msk [vmem:[#allocation5] sm:$0xff] %vm3676, %v4634
      %4651 = vst.msk [vmem:[#allocation5 + $0x8] sm:$0xff] %vm3676, %v4635
      %4652 = vst.msk [vmem:[#allocation5 + $0x10] sm:$0xff] %vm3676, %v4636
      %4653 = vst.msk [vmem:[#allocation5 + $0x18] sm:$0xff] %vm3676, %v4637
      %4654 = vst.msk [vmem:[#allocation5 + $0x20] sm:$0xff] %vm3676, %v4638
      %4655 = vst.msk [vmem:[#allocation5 + $0x28] sm:$0xff] %vm3676, %v4639
      %4656 = vst.msk [vmem:[#allocation5 + $0x30] sm:$0xff] %vm3676, %v4640
      %4657 = vst.msk [vmem:[#allocation5 + $0x38] sm:$0xff] %vm3676, %v4641
      %4658 = vst.msk [vmem:[#allocation5 + $0x40] sm:$0xff] %vm3676, %v4642
      %4659 = vst.msk [vmem:[#allocation5 + $0x48] sm:$0xff] %vm3676, %v4643
      %4660 = vst.msk [vmem:[#allocation5 + $0x50] sm:$0xff] %vm3676, %v4644
      %4661 = vst.msk [vmem:[#allocation5 + $0x58] sm:$0xff] %vm3676, %v4645
      %4662 = vst.msk [vmem:[#allocation5 + $0x60] sm:$0xff] %vm3676, %v4646
      %4663 = vst.msk [vmem:[#allocation5 + $0x68] sm:$0xff] %vm3676, %v4647
      %4664 = vst.msk [vmem:[#allocation5 + $0x70] sm:$0xff] %vm3676, %v4648
      %4665 = vst.msk [vmem:[#allocation5 + $0x78] sm:$0xff] %vm3676, %v4649
      %v4666 = vld [vmem:[#allocation5] ss:$2 sm:$0xff]
      %s4667 = scalar_lea.vmem [#allocation5], 16
      %v4668 = vld [vmem:[%s4667] ss:$2 sm:$0xff]
      %s4669 = scalar_lea.vmem [#allocation5], 32
      %v4670 = vld [vmem:[%s4669] ss:$2 sm:$0xff]
      %s4671 = scalar_lea.vmem [#allocation5], 48
      %v4672 = vld [vmem:[%s4671] ss:$2 sm:$0xff]
      %s4673 = scalar_lea.vmem [#allocation5], 64
      %v4674 = vld [vmem:[%s4673] ss:$2 sm:$0xff]
      %s4675 = scalar_lea.vmem [#allocation5], 80
      %v4676 = vld [vmem:[%s4675] ss:$2 sm:$0xff]
      %s4677 = scalar_lea.vmem [#allocation5], 96
      %v4678 = vld [vmem:[%s4677] ss:$2 sm:$0xff]
      %s4679 = scalar_lea.vmem [#allocation5], 112
      %v4680 = vld [vmem:[%s4679] ss:$2 sm:$0xff]
      %s4681 = scalar_lea.vmem [#allocation5], 1
      %v4682 = vld [vmem:[%s4681] ss:$2 sm:$0xff]
      %s4683 = scalar_lea.vmem [#allocation5], 17
      %v4684 = vld [vmem:[%s4683] ss:$2 sm:$0xff]
      %s4685 = scalar_lea.vmem [#allocation5], 33
      %v4686 = vld [vmem:[%s4685] ss:$2 sm:$0xff]
      %s4687 = scalar_lea.vmem [#allocation5], 49
      %v4688 = vld [vmem:[%s4687] ss:$2 sm:$0xff]
      %s4689 = scalar_lea.vmem [#allocation5], 65
      %v4690 = vld [vmem:[%s4689] ss:$2 sm:$0xff]
      %s4691 = scalar_lea.vmem [#allocation5], 81
      %v4692 = vld [vmem:[%s4691] ss:$2 sm:$0xff]
      %s4693 = scalar_lea.vmem [#allocation5], 97
      %v4694 = vld [vmem:[%s4693] ss:$2 sm:$0xff]
      %s4695 = scalar_lea.vmem [#allocation5], 113
      %v4696 = vld [vmem:[%s4695] ss:$2 sm:$0xff]
      %v4697 = vmax.f32 %v4666, %v4682
      %v4698 = vmax.f32 %v4668, %v4684
      %v4699 = vmax.f32 %v4670, %v4686
      %v4700 = vmax.f32 %v4672, %v4688
      %v4701 = vmax.f32 %v4674, %v4690
      %v4702 = vmax.f32 %v4676, %v4692
      %v4703 = vmax.f32 %v4678, %v4694
      %v4704 = vmax.f32 %v4680, %v4696
      %v4705 = vld [vmem:[%s9] sm:$0xff]
      %v4706 = vld [vmem:[%s9 + $0x8] sm:$0xff]
      %v4707 = vld [vmem:[%s9 + $0x10] sm:$0xff]
      %v4708 = vld [vmem:[%s9 + $0x18] sm:$0xff]
      %v4709 = vld [vmem:[%s9 + $0x20] sm:$0xff]
      %v4710 = vld [vmem:[%s9 + $0x28] sm:$0xff]
      %v4711 = vld [vmem:[%s9 + $0x30] sm:$0xff]
      %v4712 = vld [vmem:[%s9 + $0x38] sm:$0xff]
      %v4713 = vld [vmem:[%s9 + $0x40] sm:$0xff]
      %v4714 = vld [vmem:[%s9 + $0x48] sm:$0xff]
      %v4715 = vld [vmem:[%s9 + $0x50] sm:$0xff]
      %v4716 = vld [vmem:[%s9 + $0x58] sm:$0xff]
      %v4717 = vld [vmem:[%s10] sm:$0x1]
      %v4726 = vrot.slane %v4697, 7
      %v4727 = vrot.slane %v4698, 7
      %v4728 = vrot.slane %v4699, 7
      %v4729 = vrot.slane %v4700, 7
      %v4730 = vrot.slane %v4701, 7
      %v4731 = vrot.slane %v4702, 7
      %v4732 = vrot.slane %v4703, 7
      %v4733 = vrot.slane %v4704, 7
      %v4742 = vsel %vm1515, 0.0, %v4726
      %v4743 = vsel %vm1515, 0.0, %v4727
      %v4744 = vsel %vm1515, 0.0, %v4728
      %v4745 = vsel %vm1515, 0.0, %v4729
      %v4746 = vsel %vm1515, 0.0, %v4730
      %v4747 = vsel %vm1515, 0.0, %v4731
      %v4748 = vsel %vm1515, 0.0, %v4732
      %v4749 = vsel %vm1515, 0.0, %v4733
      %v4750 = vrot.slane %v4697, 1
      %v4751 = vrot.slane %v4698, 1
      %v4752 = vrot.slane %v4699, 1
      %v4753 = vrot.slane %v4700, 1
      %v4754 = vrot.slane %v4701, 1
      %v4755 = vrot.slane %v4702, 1
      %v4756 = vrot.slane %v4703, 1
      %v4757 = vrot.slane %v4704, 1
      %v4766 = vsel %vm1708, %v4750, 0.0
      %v4767 = vsel %vm1708, %v4751, 0.0
      %v4768 = vsel %vm1708, %v4752, 0.0
      %v4769 = vsel %vm1708, %v4753, 0.0
      %v4770 = vsel %vm1708, %v4754, 0.0
      %v4771 = vsel %vm1708, %v4755, 0.0
      %v4772 = vsel %vm1708, %v4756, 0.0
      %v4773 = vsel %vm1708, %v4757, 0.0
      %4774 = vrot.lane.b32.xlu0 %v4697, 32
      %v4775 = vpop.permute.xlu0 %4774
      %4776 = vrot.lane.b32.xlu0 %v4698, 32
      %v4777 = vpop.permute.xlu0 %4776
      %4778 = vrot.lane.b32.xlu0 %v4699, 32
      %v4779 = vpop.permute.xlu0 %4778
      %4780 = vrot.lane.b32.xlu0 %v4700, 32
      %v4781 = vpop.permute.xlu0 %4780
      %4782 = vrot.lane.b32.xlu0 %v4701, 32
      %v4783 = vpop.permute.xlu0 %4782
      %4784 = vrot.lane.b32.xlu0 %v4702, 32
      %v4785 = vpop.permute.xlu0 %4784
      %4786 = vrot.lane.b32.xlu0 %v4703, 32
      %v4787 = vpop.permute.xlu0 %4786
      %4788 = vrot.lane.b32.xlu0 %v4704, 32
      %v4789 = vpop.permute.xlu0 %4788
      %4806 = vrot.lane.b32.xlu0 %v4766, 64
      %v4807 = vpop.permute.xlu0 %4806
      %4808 = vrot.lane.b32.xlu0 %v4767, 64
      %v4809 = vpop.permute.xlu0 %4808
      %4810 = vrot.lane.b32.xlu0 %v4768, 64
      %v4811 = vpop.permute.xlu0 %4810
      %4812 = vrot.lane.b32.xlu0 %v4769, 64
      %v4813 = vpop.permute.xlu0 %4812
      %4814 = vrot.lane.b32.xlu0 %v4770, 64
      %v4815 = vpop.permute.xlu0 %4814
      %4816 = vrot.lane.b32.xlu0 %v4771, 64
      %v4817 = vpop.permute.xlu0 %4816
      %4818 = vrot.lane.b32.xlu0 %v4772, 64
      %v4819 = vpop.permute.xlu0 %4818
      %4820 = vrot.lane.b32.xlu0 %v4773, 64
      %v4821 = vpop.permute.xlu0 %4820
      %v4830 = vsel %vm3676, %v4742, %v4775
      %v4831 = vsel %vm3676, %v4743, %v4777
      %v4832 = vsel %vm3676, %v4744, %v4779
      %v4833 = vsel %vm3676, %v4745, %v4781
      %v4834 = vsel %vm3676, %v4746, %v4783
      %v4835 = vsel %vm3676, %v4747, %v4785
      %v4836 = vsel %vm3676, %v4748, %v4787
      %v4837 = vsel %vm3676, %v4749, %v4789
      %v4838 = vsel %vm4417, %v4830, %v4807
      %v4839 = vsel %vm4417, %v4831, %v4809
      %v4840 = vsel %vm4417, %v4832, %v4811
      %v4841 = vsel %vm4417, %v4833, %v4813
      %v4842 = vsel %vm4417, %v4834, %v4815
      %v4843 = vsel %vm4417, %v4835, %v4817
      %v4844 = vsel %vm4417, %v4836, %v4819
      %v4845 = vsel %vm4417, %v4837, %v4821
      %v4847 = vlaneseq
      %v4848 = vshrl.u32 %v4847, 7
      %v4849 = vsub.s32 0, %v4848
      %v4850 = vrot.slane %v4717, %v4849
      %v4853 = vsel %vm4440, %v4838, 0
      %v4856 = vsel %vm4440, %v4839, 0
      %v4859 = vsel %vm4440, %v4840, 0
      %v4862 = vsel %vm4440, %v4841, 0
      %v4865 = vsel %vm4440, %v4842, 0
      %v4868 = vsel %vm4440, %v4843, 0
      %v4871 = vsel %vm4440, %v4844, 0
      %v4874 = vsel %vm4440, %v4845, 0
      %4876 = vmatprep.subr.mxu0 0.0
      %4877 = vmatpush1.msra.mxu0 %v4705
      %4878 = vmatprep.subr.mxu0 0.0
      %4879 = vmatpush1.msra.mxu0 %v4706
      %4880 = vmatprep.subr.mxu0 0.0
      %4881 = vmatpush1.msra.mxu0 %v4707
      %4882 = vmatprep.subr.mxu0 0.0
      %4883 = vmatpush1.msra.mxu0 %v4708
      %4884 = vmatprep.subr.mxu0 0.0
      %4885 = vmatpush1.msra.mxu0 %v4709
      %4886 = vmatprep.subr.mxu0 0.0
      %4887 = vmatpush1.msra.mxu0 %v4710
      %4888 = vmatprep.subr.mxu0 0.0
      %4889 = vmatpush1.msra.mxu0 %v4711
      %4890 = vmatprep.subr.mxu0 0.0
      %4891 = vmatpush1.msra.mxu0 %v4712
      %4892 = vmatprep.subr.mxu0 0.0
      %4893 = vmatpush1.msra.mxu0 %v4713
      %4894 = vmatprep.subr.mxu0 0.0
      %4895 = vmatpush1.msra.mxu0 %v4714
      %4896 = vmatprep.subr.mxu0 0.0
      %4897 = vmatpush1.msra.mxu0 %v4715
      %4898 = vmatprep.subr.mxu0 0.0
      %4899 = vmatpush1.msra.mxu0 %v4716
      %4900 = vmatprep.subr.mxu0 0.0
      %4901 = vmatpush1.msra.mxu0 0.0
      %4902 = vmatprep.subr.mxu0 0.0
      %4903 = vmatpush1.msra.mxu0 0.0
      %4904 = vmatprep.subr.mxu0 0.0
      %4905 = vmatpush1.msra.mxu0 0.0
      %4906 = vmatprep.subr.mxu0 0.0
      %4907 = vmatpush1.msra.mxu0 0.0
      %4908 = vmatprep.subr.mxu0 0.0
      %4909 = vmatpush1.msra.mxu0 0.0
      %4910 = vmatprep.subr.mxu0 0.0
      %4911 = vmatpush1.msra.mxu0 0.0
      %4912 = vmatprep.subr.mxu0 0.0
      %4913 = vmatpush1.msra.mxu0 0.0
      %4914 = vmatprep.subr.mxu0 0.0
      %4915 = vmatpush1.msra.mxu0 0.0
      %4916 = vmatprep.subr.mxu0 0.0
      %4917 = vmatpush1.msra.mxu0 0.0
      %4918 = vmatprep.subr.mxu0 0.0
      %4919 = vmatpush1.msra.mxu0 0.0
      %4920 = vmatprep.subr.mxu0 0.0
      %4921 = vmatpush1.msra.mxu0 0.0
      %4922 = vmatprep.subr.mxu0 0.0
      %4923 = vmatpush1.msra.mxu0 0.0
      %4924 = vmatprep.subr.mxu0 0.0
      %4925 = vmatpush1.msra.mxu0 0.0
      %4926 = vmatprep.subr.mxu0 0.0
      %4927 = vmatpush1.msra.mxu0 0.0
      %4928 = vmatprep.subr.mxu0 0.0
      %4929 = vmatpush1.msra.mxu0 0.0
      %4930 = vmatprep.subr.mxu0 0.0
      %4931 = vmatpush1.msra.mxu0 0.0
      %4932 = vmatprep.subr.mxu0 0.0
      %4933 = vmatpush1.msra.mxu0 0.0
      %4934 = vmatprep.subr.mxu0 0.0
      %4935 = vmatpush1.msra.mxu0 0.0
      %4936 = vmatprep.subr.mxu0 0.0
      %4937 = vmatpush1.msra.mxu0 0.0
      %4938 = vmatprep.subr.mxu0 0.0
      %4939 = vmatpush1.msra.mxu0 0.0
      %4940 = vmatprep.mubr.f32.mxu0 0.0
      %4941 = vmatmul.mubr.f32.gmra.mrb[0].mxu0 %v4853
      %v4942 = vpop.f32.mrb[0].mxu0
      %v4943 = vadd.f32 %v4850, %v4942
      %v4944 = vpop.f32.mrb[0].mxu0
      %4945 = vmatprep.mubr.f32.mxu0 0.0
      %4946 = vmatmul.mubr.f32.gmra.mrb[0].mxu0 %v4856
      %v4947 = vpop.f32.mrb[0].mxu0
      %v4948 = vadd.f32 %v4850, %v4947
      %v4949 = vpop.f32.mrb[0].mxu0
      %4950 = vmatprep.mubr.f32.mxu0 0.0
      %4951 = vmatmul.mubr.f32.gmra.mrb[0].mxu0 %v4859
      %v4952 = vpop.f32.mrb[0].mxu0
      %v4953 = vadd.f32 %v4850, %v4952
      %v4954 = vpop.f32.mrb[0].mxu0
      %4955 = vmatprep.mubr.f32.mxu0 0.0
      %4956 = vmatmul.mubr.f32.gmra.mrb[0].mxu0 %v4862
      %v4957 = vpop.f32.mrb[0].mxu0
      %v4958 = vadd.f32 %v4850, %v4957
      %v4959 = vpop.f32.mrb[0].mxu0
      %4960 = vmatprep.mubr.f32.mxu0 0.0
      %4961 = vmatmul.mubr.f32.gmra.mrb[0].mxu0 %v4865
      %v4962 = vpop.f32.mrb[0].mxu0
      %v4963 = vadd.f32 %v4850, %v4962
      %v4964 = vpop.f32.mrb[0].mxu0
      %4965 = vmatprep.mubr.f32.mxu0 0.0
      %4966 = vmatmul.mubr.f32.gmra.mrb[0].mxu0 %v4868
      %v4967 = vpop.f32.mrb[0].mxu0
      %v4968 = vadd.f32 %v4850, %v4967
      %v4969 = vpop.f32.mrb[0].mxu0
      %4970 = vmatprep.mubr.f32.mxu0 0.0
      %4971 = vmatmul.mubr.f32.gmra.mrb[0].mxu0 %v4871
      %v4972 = vpop.f32.mrb[0].mxu0
      %v4973 = vadd.f32 %v4850, %v4972
      %v4974 = vpop.f32.mrb[0].mxu0
      %4975 = vmatprep.mubr.f32.mxu0 0.0
      %4976 = vmatmul.mubr.f32.gmra.mrb[0].mxu0 %v4874
      %v4977 = vpop.f32.mrb[0].mxu0
      %v4978 = vadd.f32 %v4850, %v4977
      %v4979 = vpop.f32.mrb[0].mxu0
      %4980 = vdwg.mxu0
      %v4981 = vmax.f32 %v4943, 0.0
      %v4982 = vmax.f32 %v4948, 0.0
      %v4983 = vmax.f32 %v4953, 0.0
      %v4984 = vmax.f32 %v4958, 0.0
      %v4985 = vmax.f32 %v4963, 0.0
      %v4986 = vmax.f32 %v4968, 0.0
      %v4987 = vmax.f32 %v4973, 0.0
      %v4988 = vmax.f32 %v4978, 0.0
      %4989 = vst.msk [vmem:[#allocation6] sm:$0xff] %vm4417, %v4981
      %4990 = vst.msk [vmem:[#allocation6 + $0x8] sm:$0xff] %vm4417, %v4982
      %4991 = vst.msk [vmem:[#allocation6 + $0x10] sm:$0xff] %vm4417, %v4983
      %4992 = vst.msk [vmem:[#allocation6 + $0x18] sm:$0xff] %vm4417, %v4984
      %4993 = vst.msk [vmem:[#allocation6 + $0x20] sm:$0xff] %vm4417, %v4985
      %4994 = vst.msk [vmem:[#allocation6 + $0x28] sm:$0xff] %vm4417, %v4986
      %4995 = vst.msk [vmem:[#allocation6 + $0x30] sm:$0xff] %vm4417, %v4987
      %4996 = vst.msk [vmem:[#allocation6 + $0x38] sm:$0xff] %vm4417, %v4988
      %v4997 = vld [vmem:[#allocation6] ss:$2 sm:$0xff]
      %s4998 = scalar_lea.vmem [#allocation6], 16
      %v4999 = vld [vmem:[%s4998] ss:$2 sm:$0xff]
      %s5000 = scalar_lea.vmem [#allocation6], 32
      %v5001 = vld [vmem:[%s5000] ss:$2 sm:$0xff]
      %s5002 = scalar_lea.vmem [#allocation6], 48
      %v5003 = vld [vmem:[%s5002] ss:$2 sm:$0xff]
      %s5004 = scalar_lea.vmem [#allocation6], 1
      %v5005 = vld [vmem:[%s5004] ss:$2 sm:$0xff]
      %s5006 = scalar_lea.vmem [#allocation6], 17
      %v5007 = vld [vmem:[%s5006] ss:$2 sm:$0xff]
      %s5008 = scalar_lea.vmem [#allocation6], 33
      %v5009 = vld [vmem:[%s5008] ss:$2 sm:$0xff]
      %s5010 = scalar_lea.vmem [#allocation6], 49
      %v5011 = vld [vmem:[%s5010] ss:$2 sm:$0xff]
      %v5012 = vmax.f32 %v4997, %v5005
      %v5013 = vmax.f32 %v4999, %v5007
      %v5014 = vmax.f32 %v5001, %v5009
      %v5015 = vmax.f32 %v5003, %v5011
      %v5020 = vcombine.high %v5012, %v5012
      %v5021 = vcombine.high %v5013, %v5013
      %v5022 = vcombine.high %v5014, %v5014
      %v5023 = vcombine.high %v5015, %v5015
      %vm5028 = vcmask 519168
      %v5029 = vsel %vm5028, %v5012, 0.0
      %v5030 = vrot.slane %v5029, 4
      %v5031 = vadd.f32 %v5029, %v5030
      %v5032 = vrot.slane %v5031, 2
      %v5033 = vadd.f32 %v5031, %v5032
      %v5034 = vrot.slane %v5033, 1
      %v5035 = vadd.f32 %v5033, %v5034
      %v5036 = vsel %vm5028, %v5020, 0.0
      %v5037 = vrot.slane %v5036, 4
      %v5038 = vadd.f32 %v5036, %v5037
      %v5039 = vrot.slane %v5038, 2
      %v5040 = vadd.f32 %v5038, %v5039
      %v5041 = vrot.slane %v5040, 1
      %v5042 = vadd.f32 %v5040, %v5041
      %v5043 = vsel %vm5028, %v5013, 0.0
      %v5044 = vrot.slane %v5043, 4
      %v5045 = vadd.f32 %v5043, %v5044
      %v5046 = vrot.slane %v5045, 2
      %v5047 = vadd.f32 %v5045, %v5046
      %v5048 = vrot.slane %v5047, 1
      %v5049 = vadd.f32 %v5047, %v5048
      %v5050 = vsel %vm5028, %v5021, 0.0
      %v5051 = vrot.slane %v5050, 4
      %v5052 = vadd.f32 %v5050, %v5051
      %v5053 = vrot.slane %v5052, 2
      %v5054 = vadd.f32 %v5052, %v5053
      %v5055 = vrot.slane %v5054, 1
      %v5056 = vadd.f32 %v5054, %v5055
      %v5057 = vsel %vm5028, %v5014, 0.0
      %v5058 = vrot.slane %v5057, 4
      %v5059 = vadd.f32 %v5057, %v5058
      %v5060 = vrot.slane %v5059, 2
      %v5061 = vadd.f32 %v5059, %v5060
      %v5062 = vrot.slane %v5061, 1
      %v5063 = vadd.f32 %v5061, %v5062
      %v5064 = vsel %vm5028, %v5022, 0.0
      %v5065 = vrot.slane %v5064, 4
      %v5066 = vadd.f32 %v5064, %v5065
      %v5067 = vrot.slane %v5066, 2
      %v5068 = vadd.f32 %v5066, %v5067
      %v5069 = vrot.slane %v5068, 1
      %v5070 = vadd.f32 %v5068, %v5069
      %v5071 = vsel %vm5028, %v5015, 0.0
      %v5072 = vrot.slane %v5071, 4
      %v5073 = vadd.f32 %v5071, %v5072
      %v5074 = vrot.slane %v5073, 2
      %v5075 = vadd.f32 %v5073, %v5074
      %v5076 = vrot.slane %v5075, 1
      %v5077 = vadd.f32 %v5075, %v5076
      %v5078 = vsel %vm5028, %v5023, 0.0
      %v5079 = vrot.slane %v5078, 4
      %v5080 = vadd.f32 %v5078, %v5079
      %v5081 = vrot.slane %v5080, 2
      %v5082 = vadd.f32 %v5080, %v5081
      %v5083 = vrot.slane %v5082, 1
      %v5084 = vadd.f32 %v5082, %v5083
      %v5085 = vrcp.pop 4.0
      %v5086 = vmul.f32 %v5035, %v5085
      %v5087 = vmul.f32 %v5042, %v5085
      %v5088 = vmul.f32 %v5049, %v5085
      %v5089 = vmul.f32 %v5056, %v5085
      %v5090 = vmul.f32 %v5063, %v5085
      %v5091 = vmul.f32 %v5070, %v5085
      %v5092 = vmul.f32 %v5077, %v5085
      %v5093 = vmul.f32 %v5084, %v5085
      %vm5102 = vcmask 1041409
      %v5103 = vsel %vm5102, %v5087, %v5086
      %vm5104 = vcmask 1042434
      %v5105 = vsel %vm5104, %v5088, %v5103
      %vm5106 = vcmask 1043459
      %v5107 = vsel %vm5106, %v5089, %v5105
      %vm5108 = vcmask 1044484
      %v5109 = vsel %vm5108, %v5090, %v5107
      %vm5110 = vcmask 1045509
      %v5111 = vsel %vm5110, %v5091, %v5109
      %vm5112 = vcmask 1046534
      %v5113 = vsel %vm5112, %v5092, %v5111
      %vm5114 = vcmask 1047559
      %v5115 = vsel %vm5114, %v5093, %v5113
      %5117 = vst.msk [vmem:[%s381] sm:$0xff] %vm4417, %v5115
      %p5118 = scmp.lt.s32.totalorder %s22, 2
      %s5119 = scalar_select %p5118, %s22, 2
      %s5120 = smul.addr %s5119, 8
      %s5121 = scalar_lea.vmem %s11, %s5120
      // Predicated region
      $region65: #{channel_conv_forward.1} parent=63 // pred_check
        %p5122 = pneg %p276
      $region66: #{channel_conv_forward.1} parent=63 // pred_check_branch
        %5124 = sbr.rel (%p5122) target = $region68
      $region67: #{channel_conv_forward.1} parent=63 // pred_region
        _
      $region68: #{channel_conv_forward.1} parent=63 // pred_fallthru
        _
    $region64: #{channel_conv_forward.1} parent=5 // pred_fallthru
      _
    %p5125 = scmp.le.s32.totalorder 2, %s17
    // Predicated region
    $region69: #{channel_conv_forward.1} parent=5 // pred_check
      %p5126 = pneg %p5125
    $region70: #{channel_conv_forward.1} parent=5 // pred_check_branch
      %5128 = sbr.rel (%p5126) target = $region72
    $region71: #{channel_conv_forward.1} parent=5 // pred_region
      %s5129 = ssub.s32 %s17, 2
      // Predicated region
      $region73: #{channel_conv_forward.1} parent=71 // pred_check
        %p5130 = pneg %p282
      $region74: #{channel_conv_forward.1} parent=71 // pred_check_branch
        %5132 = sbr.rel (%p5130) target = $region76
      $region75: #{channel_conv_forward.1} parent=71 // pred_region
        %p5133 = scmp.lt.s32.totalorder %s23, 2
        %s5134 = scalar_select %p5133, %s23, 2
        %s5135 = smul.addr %s5134, 8
        %s5136 = scalar_lea.vmem %s11, %s5135
      $region76: #{channel_conv_forward.1} parent=71 // pred_fallthru
        _
    $region72: #{channel_conv_forward.1} parent=5 // pred_fallthru
      _
  $region6: #{channel_conv_forward.1} parent=0 // loop_footer
    %s21 = sadd.s32 1, %s17
  $region7: #{channel_conv_forward.1} parent=0 // loop_footer_branch
    %16 = sbr.rel target = $region3
  $region8: #{channel_conv_forward.1} parent=0 // loop_exit
    _

</llo_original>
